<compile_context>
chip_gen: v7x
topology: tpu7x:2x2x1
jax: 0.10.0
libtpu: 0.0.40
codegen_flags: <defaults>
</compile_context>

<pallas_src>
import functools

import jax
import jax.numpy as jnp
from jax import lax
from jax.experimental import pallas as pl
from jax.experimental.pallas import tpu as pltpu

EPS = 1e-5


def _rep_pad_hw(t):
    """ReplicationPad2d(1) on an NHWC tensor (pads H and W by 1 with edge rows/cols)."""
    t = jnp.concatenate([t[:, :1], t, t[:, -1:]], axis=1)
    t = jnp.concatenate([t[:, :, :1], t, t[:, :, -1:]], axis=2)
    return t


def _im2col_cm(xp, patches_ref, n, h, w, c, conv_dtype):
    """Fill patches_ref (9*C, N*H*W) with channel-major 3x3 taps of padded xp.

    Row block t*C:(t+1)*C holds tap t = ky*3 + kx, i.e.
        patches[t*C + ci, l(n,hh,ww)] = xp[n, hh+ky, ww+kx, ci].
    Returns the centre tap (== the unpadded input, f32) for the residual branch.
    """
    l = n * h * w
    center = None
    for t in range(9):
        ky, kx = t // 3, t % 3
        tap = xp[:, ky:ky + h, kx:kx + w, :].reshape(l, c)    # (L, C), NHWC order
        tap_cm = jnp.transpose(tap)                           # (C, L), lane-dense
        if t == 4:                                            # ky == kx == 1
            center = tap_cm
        patches_ref[t * c:(t + 1) * c, :] = tap_cm.astype(conv_dtype)
    return center


def _bn_relu(acc, g, be, inv_l, relu):
    """Train-mode BatchNorm folded to one FMA (+ optional ReLU). acc: (C, L) f32."""
    s = jnp.sum(acc, axis=1, keepdims=True)
    ss = jnp.sum(acc * acc, axis=1, keepdims=True)
    mean = s * inv_l
    var = ss * inv_l - mean * mean              # biased variance (BN normalization)
    scale = g * lax.rsqrt(var + EPS)            # rsqrt -> EUP slot (free-ish)
    shift = be - mean * scale
    out = acc * scale + shift
    return jnp.maximum(out, 0.0) if relu else out


def _res_block_kernel(x_ref, w1_ref, w2_ref, g1_ref, be1_ref, g2_ref, be2_ref,
                      o_ref, patches_ref, *, conv_dtype):
    # x_ref       : (N, H, W, C)   original input (single activation input)
    # w1/w2_ref   : (C, 9*C)       conv weights, [co, (ky*3+kx)*C + ci]
    # g*/be*_ref  : (C, 1)         batch-norm gamma / beta (channel-major)
    # o_ref       : (C, N*H*W)     lane-dense output
    # patches_ref : (9*C, N*H*W)   VMEM scratch, reused by both convs
    n, h, w, c = x_ref.shape
    l = n * h * w
    inv_l = 1.0 / float(l)

    # ---- pad1 (replication, in-kernel) + im2col + conv1 (one MXU matmul).
    # conv1 bias is omitted: train-mode BN subtracts the batch mean, so the
    # per-channel bias cancels exactly.
    xp = _rep_pad_hw(x_ref[...])
    x_cm = _im2col_cm(xp, patches_ref, n, h, w, c, conv_dtype)        # (C, L) f32
    acc1 = jnp.dot(w1_ref[...], patches_ref[...],
                   preferred_element_type=jnp.float32)                # (C, L) f32

    # ---- batchnorm1 (batch stats, folded FMA) + ReLU ------------------------
    y = _bn_relu(acc1, g1_ref[...], be1_ref[...], inv_l, relu=True)

    # ---- pad2 + im2col + conv2 (no bias) ------------------------------------
    yp = _rep_pad_hw(jnp.transpose(y).reshape(n, h, w, c))
    _im2col_cm(yp, patches_ref, n, h, w, c, conv_dtype)
    acc2 = jnp.dot(w2_ref[...], patches_ref[...],
                   preferred_element_type=jnp.float32)                # (C, L) f32

    # ---- batchnorm2 + residual + ReLU, lane-dense store ---------------------
    z = _bn_relu(acc2, g2_ref[...], be2_ref[...], inv_l, relu=False)
    o_ref[...] = jnp.maximum(z + x_cm, 0.0).astype(o_ref.dtype)


def res_block(x_nchw, params, *, conv_dtype=jnp.float32):
    """Pallas forward of resBlock(inchannel=C, outchannel=C) with no down/upsample.

    conv_dtype=jnp.bfloat16 halves the MXU-operand / patch-scratch footprint
    (accumulation and all elementwise math stay f32); the default f32 matches
    PyTorch f32 semantics tightly and is what the self-test validates.
    """
    n, c, h, w = x_nchw.shape
    l = n * h * w
    x_nhwc = jnp.transpose(x_nchw, (0, 2, 3, 1)).astype(jnp.float32)

    # PyTorch conv weight (Cout, Cin, kH, kW) -> (Cout, kH*kW*Cin), matching the
    # (ky*3 + kx)*Cin + ci row order of the in-kernel im2col buffer.
    w1 = jnp.transpose(params["w1"], (0, 2, 3, 1)).reshape(c, 9 * c).astype(conv_dtype)
    w2 = jnp.transpose(params["w2"], (0, 2, 3, 1)).reshape(c, 9 * c).astype(conv_dtype)
    # params["b1"] is intentionally not passed: train-mode BN cancels conv1's bias.
    g1 = params["g1"].reshape(c, 1).astype(jnp.float32)
    be1 = params["be1"].reshape(c, 1).astype(jnp.float32)
    g2 = params["g2"].reshape(c, 1).astype(jnp.float32)
    be2 = params["be2"].reshape(c, 1).astype(jnp.float32)

    def spec(shape):
        nd = len(shape)
        return pl.BlockSpec(shape, lambda i, _nd=nd: (0,) * _nd)

    out_cm = pl.pallas_call(
        functools.partial(_res_block_kernel, conv_dtype=conv_dtype),
        out_shape=jax.ShapeDtypeStruct((c, l), jnp.float32),
        grid=(1,),
        in_specs=[spec(x_nhwc.shape), spec(w1.shape), spec(w2.shape),
                  spec(g1.shape), spec(be1.shape), spec(g2.shape), spec(be2.shape)],
        out_specs=spec((c, l)),
        scratch_shapes=[pltpu.VMEM((9 * c, l), conv_dtype)],
        compiler_params=pltpu.CompilerParams(
            dimension_semantics=("arbitrary",),
            vmem_limit_bytes=32 * 1024 * 1024),
    )(x_nhwc, w1, w2, g1, be1, g2, be2)

    # (C, N*H*W) -> (N, C, H, W)
    return jnp.transpose(out_cm.reshape(c, n, h, w), (1, 0, 2, 3))


# ---------------------------- pure-JAX reference ----------------------------
def _reference(x_nchw, params):
    x = jnp.transpose(x_nchw, (0, 2, 3, 1)).astype(jnp.float32)  # NHWC
    dn = ("NHWC", "HWIO", "NHWC")
    w1 = jnp.transpose(params["w1"], (2, 3, 1, 0))  # HWIO
    w2 = jnp.transpose(params["w2"], (2, 3, 1, 0))

    def bn(t, g, b):
        m = jnp.mean(t, axis=(0, 1, 2), keepdims=True)
        v = jnp.mean((t - m) ** 2, axis=(0, 1, 2), keepdims=True)
        return (t - m) * lax.rsqrt(v + EPS) * g.reshape(1, 1, 1, -1) + b.reshape(1, 1, 1, -1)

    y = jnp.pad(x, ((0, 0), (1, 1), (1, 1), (0, 0)), mode="edge")
    y = lax.conv_general_dilated(y, w1, (1, 1), "VALID", dimension_numbers=dn)
    y = y + params["b1"].reshape(1, 1, 1, -1)
    y = jnp.maximum(bn(y, params["g1"], params["be1"]), 0.0)
    y = jnp.pad(y, ((0, 0), (1, 1), (1, 1), (0, 0)), mode="edge")
    y = lax.conv_general_dilated(y, w2, (1, 1), "VALID", dimension_numbers=dn)
    y = bn(y, params["g2"], params["be2"])
    out = jnp.maximum(y + x, 0.0)
    return jnp.transpose(out, (0, 3, 1, 2))


if __name__ == "__main__":
    key = jax.random.PRNGKey(0)
    # channels=8 keeps the im2col row blocks sublane-aligned (multiples of 8).
    N, C, H, W = 2, 8, 16, 16
    keys = jax.random.split(key, 8)

    x = jax.random.normal(keys[0], (N, C, H, W), jnp.float32)

    fan_in = C * 3 * 3
    bound = 1.0 / jnp.sqrt(float(fan_in))
    params = {
        "w1": jax.random.uniform(keys[1], (C, C, 3, 3), jnp.float32, -bound, bound),
        "b1": jax.random.uniform(keys[2], (C,), jnp.float32, -bound, bound),
        "w2": jax.random.uniform(keys[3], (C, C, 3, 3), jnp.float32, -bound, bound),
        "g1": jax.random.uniform(keys[4], (C,), jnp.float32, 0.5, 1.5),
        "be1": 0.1 * jax.random.normal(keys[5], (C,), jnp.float32),
        "g2": jax.random.uniform(keys[6], (C,), jnp.float32, 0.5, 1.5),
        "be2": 0.1 * jax.random.normal(keys[7], (C,), jnp.float32),
    }

    out = jax.block_until_ready(res_block(x, params))
    ref = jax.block_until_ready(_reference(x, params))

    assert out.shape == (N, C, H, W)
    assert jnp.allclose(out, ref, atol=2e-4, rtol=2e-4), "mismatch vs reference"
    print("KERNEL_OK")
</pallas_src>

<mosaic_0001>
module attributes {stable_mosaic.version = 11 : i64} {
  func.func @_res_block_kernel(%arg0: i32, %arg1: memref<2x16x16x8xf32, #tpu.memory_space<vmem>>, %arg2: memref<8x72xf32, #tpu.memory_space<vmem>>, %arg3: memref<8x72xf32, #tpu.memory_space<vmem>>, %arg4: memref<8x1xf32, #tpu.memory_space<vmem>>, %arg5: memref<8x1xf32, #tpu.memory_space<vmem>>, %arg6: memref<8x1xf32, #tpu.memory_space<vmem>>, %arg7: memref<8x1xf32, #tpu.memory_space<vmem>>, %arg8: memref<8x512xf32, #tpu.memory_space<vmem>>, %arg9: memref<72x512xf32, #tpu.memory_space<vmem>>) attributes {dimension_semantics = [#tpu.dimension_semantics<arbitrary>], iteration_bounds = array<i64: 1>, scalar_prefetch = 0 : i64, scratch_operands = 1 : i64, tpu.core_type = #tpu.core_type<tc>, window_params = [{pipeline_mode = #tpu.pipeline_mode<synchronous>, transform_indices = @transform_0, window_bounds = array<i64: 2, 16, 16, 8>}, {pipeline_mode = #tpu.pipeline_mode<synchronous>, transform_indices = @transform_1, window_bounds = array<i64: 8, 72>}, {pipeline_mode = #tpu.pipeline_mode<synchronous>, transform_indices = @transform_2, window_bounds = array<i64: 8, 72>}, {pipeline_mode = #tpu.pipeline_mode<synchronous>, transform_indices = @transform_3, window_bounds = array<i64: 8, 1>}, {pipeline_mode = #tpu.pipeline_mode<synchronous>, transform_indices = @transform_4, window_bounds = array<i64: 8, 1>}, {pipeline_mode = #tpu.pipeline_mode<synchronous>, transform_indices = @transform_5, window_bounds = array<i64: 8, 1>}, {pipeline_mode = #tpu.pipeline_mode<synchronous>, transform_indices = @transform_6, window_bounds = array<i64: 8, 1>}, {pipeline_mode = #tpu.pipeline_mode<synchronous>, transform_indices = @transform_7, window_bounds = array<i64: 8, 512>}]} {
    %c0 = arith.constant 0 : index
    %c0_0 = arith.constant 0 : index
    %c0_1 = arith.constant 0 : index
    %c0_2 = arith.constant 0 : index
    %0 = vector.load %arg1[%c0, %c0_0, %c0_1, %c0_2] : memref<2x16x16x8xf32, #tpu.memory_space<vmem>>, vector<2x16x16x8xf32>
    %1 = vector.extract_strided_slice %0 {offsets = [0, 0, 0, 0], sizes = [2, 1, 16, 8], strides = [1, 1, 1, 1]} : vector<2x16x16x8xf32> to vector<2x1x16x8xf32>
    %2 = vector.extract_strided_slice %0 {offsets = [0, 15, 0, 0], sizes = [2, 1, 16, 8], strides = [1, 1, 1, 1]} : vector<2x16x16x8xf32> to vector<2x1x16x8xf32>
    %3 = tpu.concatenate %1, %0, %2 in 1 : vector<2x1x16x8xf32>, vector<2x16x16x8xf32>, vector<2x1x16x8xf32> -> vector<2x18x16x8xf32>
    %4 = vector.extract_strided_slice %3 {offsets = [0, 0, 0, 0], sizes = [2, 18, 1, 8], strides = [1, 1, 1, 1]} : vector<2x18x16x8xf32> to vector<2x18x1x8xf32>
    %5 = vector.extract_strided_slice %3 {offsets = [0, 0, 15, 0], sizes = [2, 18, 1, 8], strides = [1, 1, 1, 1]} : vector<2x18x16x8xf32> to vector<2x18x1x8xf32>
    %6 = tpu.concatenate %4, %3, %5 in 2 : vector<2x18x1x8xf32>, vector<2x18x16x8xf32>, vector<2x18x1x8xf32> -> vector<2x18x18x8xf32>
    %7 = vector.extract_strided_slice %6 {offsets = [0, 0, 0, 0], sizes = [2, 16, 16, 8], strides = [1, 1, 1, 1]} : vector<2x18x18x8xf32> to vector<2x16x16x8xf32>
    %8 = vector.shape_cast %7 : vector<2x16x16x8xf32> to vector<512x8xf32>
    %9 = tpu.transpose %8, [1, 0] : vector<512x8xf32> -> vector<8x512xf32>
    %c0_3 = arith.constant 0 : index
    %c0_4 = arith.constant 0 : index
    %10 = vector.load %arg9[%c0_3, %c0_4] : memref<72x512xf32, #tpu.memory_space<vmem>>, vector<8x512xf32>
    tpu.vector_store %arg9[%c0_3, %c0_4], %9 {strides = array<i32>} : memref<72x512xf32, #tpu.memory_space<vmem>>, vector<8x512xf32>,
    %11 = vector.extract_strided_slice %6 {offsets = [0, 0, 1, 0], sizes = [2, 16, 16, 8], strides = [1, 1, 1, 1]} : vector<2x18x18x8xf32> to vector<2x16x16x8xf32>
    %12 = vector.shape_cast %11 : vector<2x16x16x8xf32> to vector<512x8xf32>
    %13 = tpu.transpose %12, [1, 0] : vector<512x8xf32> -> vector<8x512xf32>
    %c8 = arith.constant 8 : index
    %c0_5 = arith.constant 0 : index
    %14 = vector.load %arg9[%c8, %c0_5] : memref<72x512xf32, #tpu.memory_space<vmem>>, vector<8x512xf32>
    tpu.vector_store %arg9[%c8, %c0_5], %13 {strides = array<i32>} : memref<72x512xf32, #tpu.memory_space<vmem>>, vector<8x512xf32>,
    %15 = vector.extract_strided_slice %6 {offsets = [0, 0, 2, 0], sizes = [2, 16, 16, 8], strides = [1, 1, 1, 1]} : vector<2x18x18x8xf32> to vector<2x16x16x8xf32>
    %16 = vector.shape_cast %15 : vector<2x16x16x8xf32> to vector<512x8xf32>
    %17 = tpu.transpose %16, [1, 0] : vector<512x8xf32> -> vector<8x512xf32>
    %c16 = arith.constant 16 : index
    %c0_6 = arith.constant 0 : index
    %18 = vector.load %arg9[%c16, %c0_6] : memref<72x512xf32, #tpu.memory_space<vmem>>, vector<8x512xf32>
    tpu.vector_store %arg9[%c16, %c0_6], %17 {strides = array<i32>} : memref<72x512xf32, #tpu.memory_space<vmem>>, vector<8x512xf32>,
    %19 = vector.extract_strided_slice %6 {offsets = [0, 1, 0, 0], sizes = [2, 16, 16, 8], strides = [1, 1, 1, 1]} : vector<2x18x18x8xf32> to vector<2x16x16x8xf32>
    %20 = vector.shape_cast %19 : vector<2x16x16x8xf32> to vector<512x8xf32>
    %21 = tpu.transpose %20, [1, 0] : vector<512x8xf32> -> vector<8x512xf32>
    %c24 = arith.constant 24 : index
    %c0_7 = arith.constant 0 : index
    %22 = vector.load %arg9[%c24, %c0_7] : memref<72x512xf32, #tpu.memory_space<vmem>>, vector<8x512xf32>
    tpu.vector_store %arg9[%c24, %c0_7], %21 {strides = array<i32>} : memref<72x512xf32, #tpu.memory_space<vmem>>, vector<8x512xf32>,
    %23 = vector.extract_strided_slice %6 {offsets = [0, 1, 1, 0], sizes = [2, 16, 16, 8], strides = [1, 1, 1, 1]} : vector<2x18x18x8xf32> to vector<2x16x16x8xf32>
    %24 = vector.shape_cast %23 : vector<2x16x16x8xf32> to vector<512x8xf32>
    %25 = tpu.transpose %24, [1, 0] : vector<512x8xf32> -> vector<8x512xf32>
    %c32 = arith.constant 32 : index
    %c0_8 = arith.constant 0 : index
    %26 = vector.load %arg9[%c32, %c0_8] : memref<72x512xf32, #tpu.memory_space<vmem>>, vector<8x512xf32>
    tpu.vector_store %arg9[%c32, %c0_8], %25 {strides = array<i32>} : memref<72x512xf32, #tpu.memory_space<vmem>>, vector<8x512xf32>,
    %27 = vector.extract_strided_slice %6 {offsets = [0, 1, 2, 0], sizes = [2, 16, 16, 8], strides = [1, 1, 1, 1]} : vector<2x18x18x8xf32> to vector<2x16x16x8xf32>
    %28 = vector.shape_cast %27 : vector<2x16x16x8xf32> to vector<512x8xf32>
    %29 = tpu.transpose %28, [1, 0] : vector<512x8xf32> -> vector<8x512xf32>
    %c40 = arith.constant 40 : index
    %c0_9 = arith.constant 0 : index
    %30 = vector.load %arg9[%c40, %c0_9] : memref<72x512xf32, #tpu.memory_space<vmem>>, vector<8x512xf32>
    tpu.vector_store %arg9[%c40, %c0_9], %29 {strides = array<i32>} : memref<72x512xf32, #tpu.memory_space<vmem>>, vector<8x512xf32>,
    %31 = vector.extract_strided_slice %6 {offsets = [0, 2, 0, 0], sizes = [2, 16, 16, 8], strides = [1, 1, 1, 1]} : vector<2x18x18x8xf32> to vector<2x16x16x8xf32>
    %32 = vector.shape_cast %31 : vector<2x16x16x8xf32> to vector<512x8xf32>
    %33 = tpu.transpose %32, [1, 0] : vector<512x8xf32> -> vector<8x512xf32>
    %c48 = arith.constant 48 : index
    %c0_10 = arith.constant 0 : index
    %34 = vector.load %arg9[%c48, %c0_10] : memref<72x512xf32, #tpu.memory_space<vmem>>, vector<8x512xf32>
    tpu.vector_store %arg9[%c48, %c0_10], %33 {strides = array<i32>} : memref<72x512xf32, #tpu.memory_space<vmem>>, vector<8x512xf32>,
    %35 = vector.extract_strided_slice %6 {offsets = [0, 2, 1, 0], sizes = [2, 16, 16, 8], strides = [1, 1, 1, 1]} : vector<2x18x18x8xf32> to vector<2x16x16x8xf32>
    %36 = vector.shape_cast %35 : vector<2x16x16x8xf32> to vector<512x8xf32>
    %37 = tpu.transpose %36, [1, 0] : vector<512x8xf32> -> vector<8x512xf32>
    %c56 = arith.constant 56 : index
    %c0_11 = arith.constant 0 : index
    %38 = vector.load %arg9[%c56, %c0_11] : memref<72x512xf32, #tpu.memory_space<vmem>>, vector<8x512xf32>
    tpu.vector_store %arg9[%c56, %c0_11], %37 {strides = array<i32>} : memref<72x512xf32, #tpu.memory_space<vmem>>, vector<8x512xf32>,
    %39 = vector.extract_strided_slice %6 {offsets = [0, 2, 2, 0], sizes = [2, 16, 16, 8], strides = [1, 1, 1, 1]} : vector<2x18x18x8xf32> to vector<2x16x16x8xf32>
    %40 = vector.shape_cast %39 : vector<2x16x16x8xf32> to vector<512x8xf32>
    %41 = tpu.transpose %40, [1, 0] : vector<512x8xf32> -> vector<8x512xf32>
    %c64 = arith.constant 64 : index
    %c0_12 = arith.constant 0 : index
    %42 = vector.load %arg9[%c64, %c0_12] : memref<72x512xf32, #tpu.memory_space<vmem>>, vector<8x512xf32>
    tpu.vector_store %arg9[%c64, %c0_12], %41 {strides = array<i32>} : memref<72x512xf32, #tpu.memory_space<vmem>>, vector<8x512xf32>,
    %c0_13 = arith.constant 0 : index
    %c0_14 = arith.constant 0 : index
    %43 = vector.load %arg2[%c0_13, %c0_14] : memref<8x72xf32, #tpu.memory_space<vmem>>, vector<8x72xf32>
    %c0_15 = arith.constant 0 : index
    %c0_16 = arith.constant 0 : index
    %44 = vector.load %arg9[%c0_15, %c0_16] : memref<72x512xf32, #tpu.memory_space<vmem>>, vector<72x512xf32>
    %cst = arith.constant dense<0.000000e+00> : vector<8x512xf32>
    %45 = tpu.matmul %43, %44, %cst {dimension_numbers = #tpu.dot_dimension_numbers<[1], [0], [0], [1], [0, 0, 1, 1], [], []>} : vector<8x72xf32>, vector<72x512xf32>, vector<8x512xf32> -> vector<8x512xf32>
    %c0_17 = arith.constant 0 : index
    %c0_18 = arith.constant 0 : index
    %46 = vector.load %arg4[%c0_17, %c0_18] : memref<8x1xf32, #tpu.memory_space<vmem>>, vector<8x1xf32>
    %c0_19 = arith.constant 0 : index
    %c0_20 = arith.constant 0 : index
    %47 = vector.load %arg5[%c0_19, %c0_20] : memref<8x1xf32, #tpu.memory_space<vmem>>, vector<8x1xf32>
    %cst_21 = arith.constant dense<0.000000e+00> : vector<8xf32>
    %48 = vector.multi_reduction <add>, %45, %cst_21 [1] : vector<8x512xf32> to vector<8xf32>
    %49 = vector.shape_cast %48 : vector<8xf32> to vector<8x1xf32>
    %50 = arith.mulf %45, %45 : vector<8x512xf32>
    %cst_22 = arith.constant dense<0.000000e+00> : vector<8xf32>
    %51 = vector.multi_reduction <add>, %50, %cst_22 [1] : vector<8x512xf32> to vector<8xf32>
    %52 = vector.shape_cast %51 : vector<8xf32> to vector<8x1xf32>
    %cst_23 = arith.constant 0.001953125 : f32
    %53 = vector.broadcast %cst_23 : f32 to vector<8x1xf32>
    %54 = arith.mulf %49, %53 : vector<8x1xf32>
    %cst_24 = arith.constant 0.001953125 : f32
    %55 = vector.broadcast %cst_24 : f32 to vector<8x1xf32>
    %56 = arith.mulf %52, %55 : vector<8x1xf32>
    %57 = arith.mulf %54, %54 : vector<8x1xf32>
    %58 = arith.subf %56, %57 : vector<8x1xf32>
    %cst_25 = arith.constant 9.99999974E-6 : f32
    %59 = vector.broadcast %cst_25 : f32 to vector<8x1xf32>
    %60 = arith.addf %58, %59 : vector<8x1xf32>
    %61 = math.rsqrt %60 : vector<8x1xf32>
    %62 = arith.mulf %46, %61 : vector<8x1xf32>
    %63 = arith.mulf %54, %62 : vector<8x1xf32>
    %64 = arith.subf %47, %63 : vector<8x1xf32>
    %65 = vector.broadcast %62 : vector<8x1xf32> to vector<8x512xf32>
    %66 = arith.mulf %45, %65 : vector<8x512xf32>
    %67 = vector.broadcast %64 : vector<8x1xf32> to vector<8x512xf32>
    %68 = arith.addf %66, %67 : vector<8x512xf32>
    %cst_26 = arith.constant 0.000000e+00 : f32
    %69 = vector.broadcast %cst_26 : f32 to vector<8x512xf32>
    %70 = arith.maximumf %68, %69 : vector<8x512xf32>
    %71 = tpu.transpose %70, [1, 0] : vector<8x512xf32> -> vector<512x8xf32>
    %72 = vector.shape_cast %71 : vector<512x8xf32> to vector<2x16x16x8xf32>
    %73 = vector.extract_strided_slice %72 {offsets = [0, 0, 0, 0], sizes = [2, 1, 16, 8], strides = [1, 1, 1, 1]} : vector<2x16x16x8xf32> to vector<2x1x16x8xf32>
    %74 = vector.extract_strided_slice %72 {offsets = [0, 15, 0, 0], sizes = [2, 1, 16, 8], strides = [1, 1, 1, 1]} : vector<2x16x16x8xf32> to vector<2x1x16x8xf32>
    %75 = tpu.concatenate %73, %72, %74 in 1 : vector<2x1x16x8xf32>, vector<2x16x16x8xf32>, vector<2x1x16x8xf32> -> vector<2x18x16x8xf32>
    %76 = vector.extract_strided_slice %75 {offsets = [0, 0, 0, 0], sizes = [2, 18, 1, 8], strides = [1, 1, 1, 1]} : vector<2x18x16x8xf32> to vector<2x18x1x8xf32>
    %77 = vector.extract_strided_slice %75 {offsets = [0, 0, 15, 0], sizes = [2, 18, 1, 8], strides = [1, 1, 1, 1]} : vector<2x18x16x8xf32> to vector<2x18x1x8xf32>
    %78 = tpu.concatenate %76, %75, %77 in 2 : vector<2x18x1x8xf32>, vector<2x18x16x8xf32>, vector<2x18x1x8xf32> -> vector<2x18x18x8xf32>
    %79 = vector.extract_strided_slice %78 {offsets = [0, 0, 0, 0], sizes = [2, 16, 16, 8], strides = [1, 1, 1, 1]} : vector<2x18x18x8xf32> to vector<2x16x16x8xf32>
    %80 = vector.shape_cast %79 : vector<2x16x16x8xf32> to vector<512x8xf32>
    %81 = tpu.transpose %80, [1, 0] : vector<512x8xf32> -> vector<8x512xf32>
    %c0_27 = arith.constant 0 : index
    %c0_28 = arith.constant 0 : index
    %82 = vector.load %arg9[%c0_27, %c0_28] : memref<72x512xf32, #tpu.memory_space<vmem>>, vector<8x512xf32>
    tpu.vector_store %arg9[%c0_27, %c0_28], %81 {strides = array<i32>} : memref<72x512xf32, #tpu.memory_space<vmem>>, vector<8x512xf32>,
    %83 = vector.extract_strided_slice %78 {offsets = [0, 0, 1, 0], sizes = [2, 16, 16, 8], strides = [1, 1, 1, 1]} : vector<2x18x18x8xf32> to vector<2x16x16x8xf32>
    %84 = vector.shape_cast %83 : vector<2x16x16x8xf32> to vector<512x8xf32>
    %85 = tpu.transpose %84, [1, 0] : vector<512x8xf32> -> vector<8x512xf32>
    %c8_29 = arith.constant 8 : index
    %c0_30 = arith.constant 0 : index
    %86 = vector.load %arg9[%c8_29, %c0_30] : memref<72x512xf32, #tpu.memory_space<vmem>>, vector<8x512xf32>
    tpu.vector_store %arg9[%c8_29, %c0_30], %85 {strides = array<i32>} : memref<72x512xf32, #tpu.memory_space<vmem>>, vector<8x512xf32>,
    %87 = vector.extract_strided_slice %78 {offsets = [0, 0, 2, 0], sizes = [2, 16, 16, 8], strides = [1, 1, 1, 1]} : vector<2x18x18x8xf32> to vector<2x16x16x8xf32>
    %88 = vector.shape_cast %87 : vector<2x16x16x8xf32> to vector<512x8xf32>
    %89 = tpu.transpose %88, [1, 0] : vector<512x8xf32> -> vector<8x512xf32>
    %c16_31 = arith.constant 16 : index
    %c0_32 = arith.constant 0 : index
    %90 = vector.load %arg9[%c16_31, %c0_32] : memref<72x512xf32, #tpu.memory_space<vmem>>, vector<8x512xf32>
    tpu.vector_store %arg9[%c16_31, %c0_32], %89 {strides = array<i32>} : memref<72x512xf32, #tpu.memory_space<vmem>>, vector<8x512xf32>,
    %91 = vector.extract_strided_slice %78 {offsets = [0, 1, 0, 0], sizes = [2, 16, 16, 8], strides = [1, 1, 1, 1]} : vector<2x18x18x8xf32> to vector<2x16x16x8xf32>
    %92 = vector.shape_cast %91 : vector<2x16x16x8xf32> to vector<512x8xf32>
    %93 = tpu.transpose %92, [1, 0] : vector<512x8xf32> -> vector<8x512xf32>
    %c24_33 = arith.constant 24 : index
    %c0_34 = arith.constant 0 : index
    %94 = vector.load %arg9[%c24_33, %c0_34] : memref<72x512xf32, #tpu.memory_space<vmem>>, vector<8x512xf32>
    tpu.vector_store %arg9[%c24_33, %c0_34], %93 {strides = array<i32>} : memref<72x512xf32, #tpu.memory_space<vmem>>, vector<8x512xf32>,
    %95 = vector.extract_strided_slice %78 {offsets = [0, 1, 1, 0], sizes = [2, 16, 16, 8], strides = [1, 1, 1, 1]} : vector<2x18x18x8xf32> to vector<2x16x16x8xf32>
    %96 = vector.shape_cast %95 : vector<2x16x16x8xf32> to vector<512x8xf32>
    %97 = tpu.transpose %96, [1, 0] : vector<512x8xf32> -> vector<8x512xf32>
    %c32_35 = arith.constant 32 : index
    %c0_36 = arith.constant 0 : index
    %98 = vector.load %arg9[%c32_35, %c0_36] : memref<72x512xf32, #tpu.memory_space<vmem>>, vector<8x512xf32>
    tpu.vector_store %arg9[%c32_35, %c0_36], %97 {strides = array<i32>} : memref<72x512xf32, #tpu.memory_space<vmem>>, vector<8x512xf32>,
    %99 = vector.extract_strided_slice %78 {offsets = [0, 1, 2, 0], sizes = [2, 16, 16, 8], strides = [1, 1, 1, 1]} : vector<2x18x18x8xf32> to vector<2x16x16x8xf32>
    %100 = vector.shape_cast %99 : vector<2x16x16x8xf32> to vector<512x8xf32>
    %101 = tpu.transpose %100, [1, 0] : vector<512x8xf32> -> vector<8x512xf32>
    %c40_37 = arith.constant 40 : index
    %c0_38 = arith.constant 0 : index
    %102 = vector.load %arg9[%c40_37, %c0_38] : memref<72x512xf32, #tpu.memory_space<vmem>>, vector<8x512xf32>
    tpu.vector_store %arg9[%c40_37, %c0_38], %101 {strides = array<i32>} : memref<72x512xf32, #tpu.memory_space<vmem>>, vector<8x512xf32>,
    %103 = vector.extract_strided_slice %78 {offsets = [0, 2, 0, 0], sizes = [2, 16, 16, 8], strides = [1, 1, 1, 1]} : vector<2x18x18x8xf32> to vector<2x16x16x8xf32>
    %104 = vector.shape_cast %103 : vector<2x16x16x8xf32> to vector<512x8xf32>
    %105 = tpu.transpose %104, [1, 0] : vector<512x8xf32> -> vector<8x512xf32>
    %c48_39 = arith.constant 48 : index
    %c0_40 = arith.constant 0 : index
    %106 = vector.load %arg9[%c48_39, %c0_40] : memref<72x512xf32, #tpu.memory_space<vmem>>, vector<8x512xf32>
    tpu.vector_store %arg9[%c48_39, %c0_40], %105 {strides = array<i32>} : memref<72x512xf32, #tpu.memory_space<vmem>>, vector<8x512xf32>,
    %107 = vector.extract_strided_slice %78 {offsets = [0, 2, 1, 0], sizes = [2, 16, 16, 8], strides = [1, 1, 1, 1]} : vector<2x18x18x8xf32> to vector<2x16x16x8xf32>
    %108 = vector.shape_cast %107 : vector<2x16x16x8xf32> to vector<512x8xf32>
    %109 = tpu.transpose %108, [1, 0] : vector<512x8xf32> -> vector<8x512xf32>
    %c56_41 = arith.constant 56 : index
    %c0_42 = arith.constant 0 : index
    %110 = vector.load %arg9[%c56_41, %c0_42] : memref<72x512xf32, #tpu.memory_space<vmem>>, vector<8x512xf32>
    tpu.vector_store %arg9[%c56_41, %c0_42], %109 {strides = array<i32>} : memref<72x512xf32, #tpu.memory_space<vmem>>, vector<8x512xf32>,
    %111 = vector.extract_strided_slice %78 {offsets = [0, 2, 2, 0], sizes = [2, 16, 16, 8], strides = [1, 1, 1, 1]} : vector<2x18x18x8xf32> to vector<2x16x16x8xf32>
    %112 = vector.shape_cast %111 : vector<2x16x16x8xf32> to vector<512x8xf32>
    %113 = tpu.transpose %112, [1, 0] : vector<512x8xf32> -> vector<8x512xf32>
    %c64_43 = arith.constant 64 : index
    %c0_44 = arith.constant 0 : index
    %114 = vector.load %arg9[%c64_43, %c0_44] : memref<72x512xf32, #tpu.memory_space<vmem>>, vector<8x512xf32>
    tpu.vector_store %arg9[%c64_43, %c0_44], %113 {strides = array<i32>} : memref<72x512xf32, #tpu.memory_space<vmem>>, vector<8x512xf32>,
    %c0_45 = arith.constant 0 : index
    %c0_46 = arith.constant 0 : index
    %115 = vector.load %arg3[%c0_45, %c0_46] : memref<8x72xf32, #tpu.memory_space<vmem>>, vector<8x72xf32>
    %c0_47 = arith.constant 0 : index
    %c0_48 = arith.constant 0 : index
    %116 = vector.load %arg9[%c0_47, %c0_48] : memref<72x512xf32, #tpu.memory_space<vmem>>, vector<72x512xf32>
    %cst_49 = arith.constant dense<0.000000e+00> : vector<8x512xf32>
    %117 = tpu.matmul %115, %116, %cst_49 {dimension_numbers = #tpu.dot_dimension_numbers<[1], [0], [0], [1], [0, 0, 1, 1], [], []>} : vector<8x72xf32>, vector<72x512xf32>, vector<8x512xf32> -> vector<8x512xf32>
    %c0_50 = arith.constant 0 : index
    %c0_51 = arith.constant 0 : index
    %118 = vector.load %arg6[%c0_50, %c0_51] : memref<8x1xf32, #tpu.memory_space<vmem>>, vector<8x1xf32>
    %c0_52 = arith.constant 0 : index
    %c0_53 = arith.constant 0 : index
    %119 = vector.load %arg7[%c0_52, %c0_53] : memref<8x1xf32, #tpu.memory_space<vmem>>, vector<8x1xf32>
    %cst_54 = arith.constant dense<0.000000e+00> : vector<8xf32>
    %120 = vector.multi_reduction <add>, %117, %cst_54 [1] : vector<8x512xf32> to vector<8xf32>
    %121 = vector.shape_cast %120 : vector<8xf32> to vector<8x1xf32>
    %122 = arith.mulf %117, %117 : vector<8x512xf32>
    %cst_55 = arith.constant dense<0.000000e+00> : vector<8xf32>
    %123 = vector.multi_reduction <add>, %122, %cst_55 [1] : vector<8x512xf32> to vector<8xf32>
    %124 = vector.shape_cast %123 : vector<8xf32> to vector<8x1xf32>
    %cst_56 = arith.constant 0.001953125 : f32
    %125 = vector.broadcast %cst_56 : f32 to vector<8x1xf32>
    %126 = arith.mulf %121, %125 : vector<8x1xf32>
    %cst_57 = arith.constant 0.001953125 : f32
    %127 = vector.broadcast %cst_57 : f32 to vector<8x1xf32>
    %128 = arith.mulf %124, %127 : vector<8x1xf32>
    %129 = arith.mulf %126, %126 : vector<8x1xf32>
    %130 = arith.subf %128, %129 : vector<8x1xf32>
    %cst_58 = arith.constant 9.99999974E-6 : f32
    %131 = vector.broadcast %cst_58 : f32 to vector<8x1xf32>
    %132 = arith.addf %130, %131 : vector<8x1xf32>
    %133 = math.rsqrt %132 : vector<8x1xf32>
    %134 = arith.mulf %118, %133 : vector<8x1xf32>
    %135 = arith.mulf %126, %134 : vector<8x1xf32>
    %136 = arith.subf %119, %135 : vector<8x1xf32>
    %137 = vector.broadcast %134 : vector<8x1xf32> to vector<8x512xf32>
    %138 = arith.mulf %117, %137 : vector<8x512xf32>
    %139 = vector.broadcast %136 : vector<8x1xf32> to vector<8x512xf32>
    %140 = arith.addf %138, %139 : vector<8x512xf32>
    %141 = arith.addf %140, %25 : vector<8x512xf32>
    %cst_59 = arith.constant 0.000000e+00 : f32
    %142 = vector.broadcast %cst_59 : f32 to vector<8x512xf32>
    %143 = arith.maximumf %141, %142 : vector<8x512xf32>
    %c0_60 = arith.constant 0 : index
    %c0_61 = arith.constant 0 : index
    %144 = vector.load %arg8[%c0_60, %c0_61] : memref<8x512xf32, #tpu.memory_space<vmem>>, vector<8x512xf32>
    tpu.vector_store %arg8[%c0_60, %c0_61], %143 {strides = array<i32>} : memref<8x512xf32, #tpu.memory_space<vmem>>, vector<8x512xf32>,
    return
  }
  func.func @transform_0(%arg0: i32) -> (i32, i32, i32, i32) {
    %c0_i32 = arith.constant 0 : i32
    %c0_i32_0 = arith.constant 0 : i32
    %c0_i32_1 = arith.constant 0 : i32
    %c0_i32_2 = arith.constant 0 : i32
    %c0_i32_3 = arith.constant 0 : i32
    return %c0_i32, %c0_i32_0, %c0_i32_1, %c0_i32_2 : i32, i32, i32, i32
  }
  func.func @transform_1(%arg0: i32) -> (i32, i32) {
    %c0_i32 = arith.constant 0 : i32
    %c0_i32_0 = arith.constant 0 : i32
    %c0_i32_1 = arith.constant 0 : i32
    return %c0_i32, %c0_i32_0 : i32, i32
  }
  func.func @transform_2(%arg0: i32) -> (i32, i32) {
    %c0_i32 = arith.constant 0 : i32
    %c0_i32_0 = arith.constant 0 : i32
    %c0_i32_1 = arith.constant 0 : i32
    return %c0_i32, %c0_i32_0 : i32, i32
  }
  func.func @transform_3(%arg0: i32) -> (i32, i32) {
    %c0_i32 = arith.constant 0 : i32
    %c0_i32_0 = arith.constant 0 : i32
    %c0_i32_1 = arith.constant 0 : i32
    return %c0_i32, %c0_i32_0 : i32, i32
  }
  func.func @transform_4(%arg0: i32) -> (i32, i32) {
    %c0_i32 = arith.constant 0 : i32
    %c0_i32_0 = arith.constant 0 : i32
    %c0_i32_1 = arith.constant 0 : i32
    return %c0_i32, %c0_i32_0 : i32, i32
  }
  func.func @transform_5(%arg0: i32) -> (i32, i32) {
    %c0_i32 = arith.constant 0 : i32
    %c0_i32_0 = arith.constant 0 : i32
    %c0_i32_1 = arith.constant 0 : i32
    return %c0_i32, %c0_i32_0 : i32, i32
  }
  func.func @transform_6(%arg0: i32) -> (i32, i32) {
    %c0_i32 = arith.constant 0 : i32
    %c0_i32_0 = arith.constant 0 : i32
    %c0_i32_1 = arith.constant 0 : i32
    return %c0_i32, %c0_i32_0 : i32, i32
  }
  func.func @transform_7(%arg0: i32) -> (i32, i32) {
    %c0_i32 = arith.constant 0 : i32
    %c0_i32_0 = arith.constant 0 : i32
    %c0_i32_1 = arith.constant 0 : i32
    return %c0_i32, %c0_i32_0 : i32, i32
  }
}

</mosaic_0001>

<llo_original>
// kernel: tpu_custom_call.1
$region0: #{tpu_custom_call.1}
  #allocation0 [shape = 'u32[]', space=smem, size = 0x4, offset = 0x4, fixed_abs, tag = 'smem constant byte address 0x4 - core index']
  #allocation1 [shape = 'u32[144,128]{1,0:T(1,128)}', space=vmem, size = 0x12000, scoped, tag = 'internal scratch']
  #allocation2 [shape = 'f32[72,512]{1,0:T(8,128)}', space=vmem, size = 0x24000, scoped, tag = 'scratch operand']
  %s0 = inlined_call_operand.vmem [shape: f32[2,16,16,8], index: 0, kind: input, shape index: {}]
  %s1 = inlined_call_operand.vmem [shape: f32[8,72], index: 1, kind: input, shape index: {}]
  %s2 = inlined_call_operand.vmem [shape: f32[8,72], index: 2, kind: input, shape index: {}]
  %s3 = inlined_call_operand.vmem [shape: f32[8,1], index: 3, kind: input, shape index: {}]
  %s4 = inlined_call_operand.vmem [shape: f32[8,1], index: 4, kind: input, shape index: {}]
  %s5 = inlined_call_operand.vmem [shape: f32[8,1], index: 5, kind: input, shape index: {}]
  %s6 = inlined_call_operand.vmem [shape: f32[8,1], index: 6, kind: input, shape index: {}]
  %s7 = inlined_call_operand.hbm [shape: f32[8,512], index: 7, kind: output, shape index: {}]
  %s8 = sld [smem:[#allocation0]]
  $region38: #{tpu_custom_call.1} parent=0
    _
  %s10 = ssub.s32 1, %s8
  %s11 = scalar_select 0, %s10, %s8
  $region1: #{tpu_custom_call.1} parent=0
    #allocation3 [shape = 'u8[16384]{0}', space=vmem, size = 0x4000, scoped, tag = 'output window, operand 0, single buffered']
    #allocation4 [shape = 's32[1]{0}', space=sflag, size = 0x4, scoped, tag = 'scoped memory for tpu_custom_call.1']
    %12 = vsyncpa [#allocation4], 0
    // Predicated region
    $region2: #{tpu_custom_call.1} parent=1 // pred_check
      _
    $region3: #{tpu_custom_call.1} parent=1 // pred_check_branch
      %14 = sbr.rel (0) target = $region5
    $region4: #{tpu_custom_call.1} parent=1 // pred_region
      _
    $region5: #{tpu_custom_call.1} parent=1 // pred_fallthru
      _
    // Predicated region
    $region6: #{tpu_custom_call.1} parent=1 // pred_check
      _
    $region7: #{tpu_custom_call.1} parent=1 // pred_check_branch
      %16 = sbr.rel (0) target = $region9
    $region8: #{tpu_custom_call.1} parent=1 // pred_region
      _
    $region9: #{tpu_custom_call.1} parent=1 // pred_fallthru
      _
    // Predicated region
    $region10: #{tpu_custom_call.1} parent=1 // pred_check
      _
    $region11: #{tpu_custom_call.1} parent=1 // pred_check_branch
      %18 = sbr.rel (0) target = $region13
    $region12: #{tpu_custom_call.1} parent=1 // pred_region
      _
    $region13: #{tpu_custom_call.1} parent=1 // pred_fallthru
      _
    // Predicated region
    $region14: #{tpu_custom_call.1} parent=1 // pred_check
      _
    $region15: #{tpu_custom_call.1} parent=1 // pred_check_branch
      %20 = sbr.rel (0) target = $region17
    $region16: #{tpu_custom_call.1} parent=1 // pred_region
      _
    $region17: #{tpu_custom_call.1} parent=1 // pred_fallthru
      _
    // Predicated region
    $region18: #{tpu_custom_call.1} parent=1 // pred_check
      _
    $region19: #{tpu_custom_call.1} parent=1 // pred_check_branch
      %22 = sbr.rel (0) target = $region21
    $region20: #{tpu_custom_call.1} parent=1 // pred_region
      _
    $region21: #{tpu_custom_call.1} parent=1 // pred_fallthru
      _
    // Predicated region
    $region22: #{tpu_custom_call.1} parent=1 // pred_check
      _
    $region23: #{tpu_custom_call.1} parent=1 // pred_check_branch
      %24 = sbr.rel (0) target = $region25
    $region24: #{tpu_custom_call.1} parent=1 // pred_region
      _
    $region25: #{tpu_custom_call.1} parent=1 // pred_fallthru
      _
    // Predicated region
    $region26: #{tpu_custom_call.1} parent=1 // pred_check
      _
    $region27: #{tpu_custom_call.1} parent=1 // pred_check_branch
      %26 = sbr.rel (0) target = $region29
    $region28: #{tpu_custom_call.1} parent=1 // pred_region
      _
    $region29: #{tpu_custom_call.1} parent=1 // pred_fallthru
      _
    %v27 = vld [vmem:[%s0] sm:$0xff]
    %v28 = vld [vmem:[%s0 + $0x8] sm:$0xff]
    %v29 = vld [vmem:[%s0 + $0x10] sm:$0xff]
    %v30 = vld [vmem:[%s0 + $0x18] sm:$0xff]
    %v31 = vld [vmem:[%s0 + $0x20] sm:$0xff]
    %v32 = vld [vmem:[%s0 + $0x28] sm:$0xff]
    %v33 = vld [vmem:[%s0 + $0x30] sm:$0xff]
    %v34 = vld [vmem:[%s0 + $0x38] sm:$0xff]
    %v35 = vld [vmem:[%s0 + $0x40] sm:$0xff]
    %v36 = vld [vmem:[%s0 + $0x48] sm:$0xff]
    %v37 = vld [vmem:[%s0 + $0x50] sm:$0xff]
    %v38 = vld [vmem:[%s0 + $0x58] sm:$0xff]
    %v39 = vld [vmem:[%s0 + $0x60] sm:$0xff]
    %v40 = vld [vmem:[%s0 + $0x68] sm:$0xff]
    %v41 = vld [vmem:[%s0 + $0x70] sm:$0xff]
    %v42 = vld [vmem:[%s0 + $0x78] sm:$0xff]
    %v43 = vld [vmem:[%s0 + $0x80] sm:$0xff]
    %v44 = vld [vmem:[%s0 + $0x88] sm:$0xff]
    %v45 = vld [vmem:[%s0 + $0x90] sm:$0xff]
    %v46 = vld [vmem:[%s0 + $0x98] sm:$0xff]
    %v47 = vld [vmem:[%s0 + $0xa0] sm:$0xff]
    %v48 = vld [vmem:[%s0 + $0xa8] sm:$0xff]
    %v49 = vld [vmem:[%s0 + $0xb0] sm:$0xff]
    %v50 = vld [vmem:[%s0 + $0xb8] sm:$0xff]
    %v51 = vld [vmem:[%s0 + $0xc0] sm:$0xff]
    %v52 = vld [vmem:[%s0 + $0xc8] sm:$0xff]
    %v53 = vld [vmem:[%s0 + $0xd0] sm:$0xff]
    %v54 = vld [vmem:[%s0 + $0xd8] sm:$0xff]
    %v55 = vld [vmem:[%s0 + $0xe0] sm:$0xff]
    %v56 = vld [vmem:[%s0 + $0xe8] sm:$0xff]
    %v57 = vld [vmem:[%s0 + $0xf0] sm:$0xff]
    %v58 = vld [vmem:[%s0 + $0xf8] sm:$0xff]
    %v59 = vld [vmem:[%s0 + $0x100] sm:$0xff]
    %v60 = vld [vmem:[%s0 + $0x108] sm:$0xff]
    %v61 = vld [vmem:[%s0 + $0x110] sm:$0xff]
    %v62 = vld [vmem:[%s0 + $0x118] sm:$0xff]
    %v63 = vld [vmem:[%s0 + $0x120] sm:$0xff]
    %v64 = vld [vmem:[%s0 + $0x128] sm:$0xff]
    %v65 = vld [vmem:[%s0 + $0x130] sm:$0xff]
    %v66 = vld [vmem:[%s0 + $0x138] sm:$0xff]
    %v67 = vld [vmem:[%s0 + $0x140] sm:$0xff]
    %v68 = vld [vmem:[%s0 + $0x148] sm:$0xff]
    %v69 = vld [vmem:[%s0 + $0x150] sm:$0xff]
    %v70 = vld [vmem:[%s0 + $0x158] sm:$0xff]
    %v71 = vld [vmem:[%s0 + $0x160] sm:$0xff]
    %v72 = vld [vmem:[%s0 + $0x168] sm:$0xff]
    %v73 = vld [vmem:[%s0 + $0x170] sm:$0xff]
    %v74 = vld [vmem:[%s0 + $0x178] sm:$0xff]
    %v75 = vld [vmem:[%s0 + $0x180] sm:$0xff]
    %v76 = vld [vmem:[%s0 + $0x188] sm:$0xff]
    %v77 = vld [vmem:[%s0 + $0x190] sm:$0xff]
    %v78 = vld [vmem:[%s0 + $0x198] sm:$0xff]
    %v79 = vld [vmem:[%s0 + $0x1a0] sm:$0xff]
    %v80 = vld [vmem:[%s0 + $0x1a8] sm:$0xff]
    %v81 = vld [vmem:[%s0 + $0x1b0] sm:$0xff]
    %v82 = vld [vmem:[%s0 + $0x1b8] sm:$0xff]
    %v83 = vld [vmem:[%s0 + $0x1c0] sm:$0xff]
    %v84 = vld [vmem:[%s0 + $0x1c8] sm:$0xff]
    %v85 = vld [vmem:[%s0 + $0x1d0] sm:$0xff]
    %v86 = vld [vmem:[%s0 + $0x1d8] sm:$0xff]
    %v87 = vld [vmem:[%s0 + $0x1e0] sm:$0xff]
    %v88 = vld [vmem:[%s0 + $0x1e8] sm:$0xff]
    %v89 = vld [vmem:[%s0 + $0x1f0] sm:$0xff]
    %v90 = vld [vmem:[%s0 + $0x1f8] sm:$0xff]
    %vm155 = vcmask 1040384
    %v156 = vrot.slane %v27, 7
    %v157 = vrot.slane %v28, 7
    %v158 = vsel %vm155, %v156, %v157
    %v159 = vrot.slane %v29, 7
    %v160 = vrot.slane %v30, 7
    %v161 = vsel %vm155, %v159, %v160
    %v162 = vrot.slane %v31, 7
    %v163 = vrot.slane %v32, 7
    %v164 = vsel %vm155, %v162, %v163
    %v165 = vrot.slane %v33, 7
    %v166 = vrot.slane %v34, 7
    %v167 = vsel %vm155, %v165, %v166
    %v168 = vrot.slane %v35, 7
    %v169 = vrot.slane %v36, 7
    %v170 = vsel %vm155, %v168, %v169
    %v171 = vrot.slane %v37, 7
    %v172 = vrot.slane %v38, 7
    %v173 = vsel %vm155, %v171, %v172
    %v174 = vrot.slane %v39, 7
    %v175 = vrot.slane %v40, 7
    %v176 = vsel %vm155, %v174, %v175
    %v177 = vrot.slane %v41, 7
    %v178 = vrot.slane %v42, 7
    %v179 = vsel %vm155, %v177, %v178
    %v180 = vrot.slane %v43, 7
    %v181 = vrot.slane %v44, 7
    %v182 = vsel %vm155, %v180, %v181
    %v183 = vrot.slane %v45, 7
    %v184 = vrot.slane %v46, 7
    %v185 = vsel %vm155, %v183, %v184
    %v186 = vrot.slane %v47, 7
    %v187 = vrot.slane %v48, 7
    %v188 = vsel %vm155, %v186, %v187
    %v189 = vrot.slane %v49, 7
    %v190 = vrot.slane %v50, 7
    %v191 = vsel %vm155, %v189, %v190
    %v192 = vrot.slane %v51, 7
    %v193 = vrot.slane %v52, 7
    %v194 = vsel %vm155, %v192, %v193
    %v195 = vrot.slane %v53, 7
    %v196 = vrot.slane %v54, 7
    %v197 = vsel %vm155, %v195, %v196
    %v198 = vrot.slane %v55, 7
    %v199 = vrot.slane %v56, 7
    %v200 = vsel %vm155, %v198, %v199
    %v201 = vrot.slane %v57, 7
    %v202 = vrot.slane %v58, 7
    %v203 = vsel %vm155, %v201, %v202
    %v204 = vrot.slane %v59, 7
    %v205 = vrot.slane %v60, 7
    %v206 = vsel %vm155, %v204, %v205
    %v207 = vrot.slane %v61, 7
    %v208 = vrot.slane %v62, 7
    %v209 = vsel %vm155, %v207, %v208
    %v210 = vrot.slane %v63, 7
    %v211 = vrot.slane %v64, 7
    %v212 = vsel %vm155, %v210, %v211
    %v213 = vrot.slane %v65, 7
    %v214 = vrot.slane %v66, 7
    %v215 = vsel %vm155, %v213, %v214
    %v216 = vrot.slane %v67, 7
    %v217 = vrot.slane %v68, 7
    %v218 = vsel %vm155, %v216, %v217
    %v219 = vrot.slane %v69, 7
    %v220 = vrot.slane %v70, 7
    %v221 = vsel %vm155, %v219, %v220
    %v222 = vrot.slane %v71, 7
    %v223 = vrot.slane %v72, 7
    %v224 = vsel %vm155, %v222, %v223
    %v225 = vrot.slane %v73, 7
    %v226 = vrot.slane %v74, 7
    %v227 = vsel %vm155, %v225, %v226
    %v228 = vrot.slane %v75, 7
    %v229 = vrot.slane %v76, 7
    %v230 = vsel %vm155, %v228, %v229
    %v231 = vrot.slane %v77, 7
    %v232 = vrot.slane %v78, 7
    %v233 = vsel %vm155, %v231, %v232
    %v234 = vrot.slane %v79, 7
    %v235 = vrot.slane %v80, 7
    %v236 = vsel %vm155, %v234, %v235
    %v237 = vrot.slane %v81, 7
    %v238 = vrot.slane %v82, 7
    %v239 = vsel %vm155, %v237, %v238
    %v240 = vrot.slane %v83, 7
    %v241 = vrot.slane %v84, 7
    %v242 = vsel %vm155, %v240, %v241
    %v243 = vrot.slane %v85, 7
    %v244 = vrot.slane %v86, 7
    %v245 = vsel %vm155, %v243, %v244
    %v246 = vrot.slane %v87, 7
    %v247 = vrot.slane %v88, 7
    %v248 = vsel %vm155, %v246, %v247
    %v249 = vrot.slane %v89, 7
    %v250 = vrot.slane %v90, 7
    %v251 = vsel %vm155, %v249, %v250
    %v348 = vrot.slane %v28, 6
    %v349 = vrot.slane %v30, 6
    %v350 = vrot.slane %v32, 6
    %v351 = vrot.slane %v34, 6
    %v352 = vrot.slane %v36, 6
    %v353 = vrot.slane %v38, 6
    %v354 = vrot.slane %v40, 6
    %v355 = vrot.slane %v42, 6
    %v356 = vrot.slane %v44, 6
    %v357 = vrot.slane %v46, 6
    %v358 = vrot.slane %v48, 6
    %v359 = vrot.slane %v50, 6
    %v360 = vrot.slane %v52, 6
    %v361 = vrot.slane %v54, 6
    %v362 = vrot.slane %v56, 6
    %v363 = vrot.slane %v58, 6
    %v364 = vrot.slane %v60, 6
    %v365 = vrot.slane %v62, 6
    %v366 = vrot.slane %v64, 6
    %v367 = vrot.slane %v66, 6
    %v368 = vrot.slane %v68, 6
    %v369 = vrot.slane %v70, 6
    %v370 = vrot.slane %v72, 6
    %v371 = vrot.slane %v74, 6
    %v372 = vrot.slane %v76, 6
    %v373 = vrot.slane %v78, 6
    %v374 = vrot.slane %v80, 6
    %v375 = vrot.slane %v82, 6
    %v376 = vrot.slane %v84, 6
    %v377 = vrot.slane %v86, 6
    %v378 = vrot.slane %v88, 6
    %v379 = vrot.slane %v90, 6
    %v412 = vsel %vm155, %v27, %v156
    %v413 = vsel %vm155, %v29, %v159
    %v414 = vsel %vm155, %v31, %v162
    %v415 = vsel %vm155, %v33, %v165
    %v416 = vsel %vm155, %v35, %v168
    %v417 = vsel %vm155, %v37, %v171
    %v418 = vsel %vm155, %v39, %v174
    %v419 = vsel %vm155, %v41, %v177
    %v420 = vsel %vm155, %v43, %v180
    %v421 = vsel %vm155, %v45, %v183
    %v422 = vsel %vm155, %v47, %v186
    %v423 = vsel %vm155, %v49, %v189
    %v424 = vsel %vm155, %v51, %v192
    %v425 = vsel %vm155, %v53, %v195
    %v426 = vsel %vm155, %v55, %v198
    %v427 = vsel %vm155, %v57, %v201
    %v428 = vsel %vm155, %v59, %v204
    %v429 = vsel %vm155, %v61, %v207
    %v430 = vsel %vm155, %v63, %v210
    %v431 = vsel %vm155, %v65, %v213
    %v432 = vsel %vm155, %v67, %v216
    %v433 = vsel %vm155, %v69, %v219
    %v434 = vsel %vm155, %v71, %v222
    %v435 = vsel %vm155, %v73, %v225
    %v436 = vsel %vm155, %v75, %v228
    %v437 = vsel %vm155, %v77, %v231
    %v438 = vsel %vm155, %v79, %v234
    %v439 = vsel %vm155, %v81, %v237
    %v440 = vsel %vm155, %v83, %v240
    %v441 = vsel %vm155, %v85, %v243
    %v442 = vsel %vm155, %v87, %v246
    %v443 = vsel %vm155, %v89, %v249
    %v444 = vsel %vm155, %v157, %v348
    %v445 = vsel %vm155, %v160, %v349
    %v446 = vsel %vm155, %v163, %v350
    %v447 = vsel %vm155, %v166, %v351
    %v448 = vsel %vm155, %v169, %v352
    %v449 = vsel %vm155, %v172, %v353
    %v450 = vsel %vm155, %v175, %v354
    %v451 = vsel %vm155, %v178, %v355
    %v452 = vsel %vm155, %v181, %v356
    %v453 = vsel %vm155, %v184, %v357
    %v454 = vsel %vm155, %v187, %v358
    %v455 = vsel %vm155, %v190, %v359
    %v456 = vsel %vm155, %v193, %v360
    %v457 = vsel %vm155, %v196, %v361
    %v458 = vsel %vm155, %v199, %v362
    %v459 = vsel %vm155, %v202, %v363
    %v460 = vsel %vm155, %v205, %v364
    %v461 = vsel %vm155, %v208, %v365
    %v462 = vsel %vm155, %v211, %v366
    %v463 = vsel %vm155, %v214, %v367
    %v464 = vsel %vm155, %v217, %v368
    %v465 = vsel %vm155, %v220, %v369
    %v466 = vsel %vm155, %v223, %v370
    %v467 = vsel %vm155, %v226, %v371
    %v468 = vsel %vm155, %v229, %v372
    %v469 = vsel %vm155, %v232, %v373
    %v470 = vsel %vm155, %v235, %v374
    %v471 = vsel %vm155, %v238, %v375
    %v472 = vsel %vm155, %v241, %v376
    %v473 = vsel %vm155, %v244, %v377
    %v474 = vsel %vm155, %v247, %v378
    %v475 = vsel %vm155, %v250, %v379
    %476 = vxpose.xlu0.b32.start [1/16] %v412, 128
    %477 = vxpose.xlu0.b32.cont [2/16] %v158, 128
    %478 = vxpose.xlu0.b32.cont [3/16] %v412, 128
    %479 = vxpose.xlu0.b32.cont [4/16] %v158, 128
    %480 = vxpose.xlu0.b32.cont [5/16] %v413, 128
    %481 = vxpose.xlu0.b32.cont [6/16] %v161, 128
    %482 = vxpose.xlu0.b32.cont [7/16] %v414, 128
    %483 = vxpose.xlu0.b32.cont [8/16] %v164, 128
    %484 = vxpose.xlu0.b32.cont [9/16] %v415, 128
    %485 = vxpose.xlu0.b32.cont [10/16] %v167, 128
    %486 = vxpose.xlu0.b32.cont [11/16] %v416, 128
    %487 = vxpose.xlu0.b32.cont [12/16] %v170, 128
    %488 = vxpose.xlu0.b32.cont [13/16] %v417, 128
    %489 = vxpose.xlu0.b32.cont [14/16] %v173, 128
    %490 = vxpose.xlu0.b32.cont [15/16] %v418, 128
    %491 = vxpose.xlu0.b32.end [16/16] %v176, 128
    %v492 = vpop.trf.xlu0
    %v493 = vpop.trf.xlu0
    %v494 = vpop.trf.xlu0
    %v495 = vpop.trf.xlu0
    %v496 = vpop.trf.xlu0
    %v497 = vpop.trf.xlu0
    %v498 = vpop.trf.xlu0
    %v499 = vpop.trf.xlu0
    %v500 = vpop.trf.xlu0
    %v501 = vpop.trf.xlu0
    %v502 = vpop.trf.xlu0
    %v503 = vpop.trf.xlu0
    %v504 = vpop.trf.xlu0
    %v505 = vpop.trf.xlu0
    %v506 = vpop.trf.xlu0
    %v507 = vpop.trf.xlu0
    %508 = vxpose.xlu0.b32.start [1/16] %v419, 128
    %509 = vxpose.xlu0.b32.cont [2/16] %v179, 128
    %510 = vxpose.xlu0.b32.cont [3/16] %v420, 128
    %511 = vxpose.xlu0.b32.cont [4/16] %v182, 128
    %512 = vxpose.xlu0.b32.cont [5/16] %v421, 128
    %513 = vxpose.xlu0.b32.cont [6/16] %v185, 128
    %514 = vxpose.xlu0.b32.cont [7/16] %v422, 128
    %515 = vxpose.xlu0.b32.cont [8/16] %v188, 128
    %516 = vxpose.xlu0.b32.cont [9/16] %v423, 128
    %517 = vxpose.xlu0.b32.cont [10/16] %v191, 128
    %518 = vxpose.xlu0.b32.cont [11/16] %v424, 128
    %519 = vxpose.xlu0.b32.cont [12/16] %v194, 128
    %520 = vxpose.xlu0.b32.cont [13/16] %v425, 128
    %521 = vxpose.xlu0.b32.cont [14/16] %v197, 128
    %522 = vxpose.xlu0.b32.cont [15/16] %v426, 128
    %523 = vxpose.xlu0.b32.end [16/16] %v200, 128
    %v524 = vpop.trf.xlu0
    %v525 = vpop.trf.xlu0
    %v526 = vpop.trf.xlu0
    %v527 = vpop.trf.xlu0
    %v528 = vpop.trf.xlu0
    %v529 = vpop.trf.xlu0
    %v530 = vpop.trf.xlu0
    %v531 = vpop.trf.xlu0
    %v532 = vpop.trf.xlu0
    %v533 = vpop.trf.xlu0
    %v534 = vpop.trf.xlu0
    %v535 = vpop.trf.xlu0
    %v536 = vpop.trf.xlu0
    %v537 = vpop.trf.xlu0
    %v538 = vpop.trf.xlu0
    %v539 = vpop.trf.xlu0
    %540 = vxpose.xlu0.b32.start [1/16] %v428, 128
    %541 = vxpose.xlu0.b32.cont [2/16] %v206, 128
    %542 = vxpose.xlu0.b32.cont [3/16] %v428, 128
    %543 = vxpose.xlu0.b32.cont [4/16] %v206, 128
    %544 = vxpose.xlu0.b32.cont [5/16] %v429, 128
    %545 = vxpose.xlu0.b32.cont [6/16] %v209, 128
    %546 = vxpose.xlu0.b32.cont [7/16] %v430, 128
    %547 = vxpose.xlu0.b32.cont [8/16] %v212, 128
    %548 = vxpose.xlu0.b32.cont [9/16] %v431, 128
    %549 = vxpose.xlu0.b32.cont [10/16] %v215, 128
    %550 = vxpose.xlu0.b32.cont [11/16] %v432, 128
    %551 = vxpose.xlu0.b32.cont [12/16] %v218, 128
    %552 = vxpose.xlu0.b32.cont [13/16] %v433, 128
    %553 = vxpose.xlu0.b32.cont [14/16] %v221, 128
    %554 = vxpose.xlu0.b32.cont [15/16] %v434, 128
    %555 = vxpose.xlu0.b32.end [16/16] %v224, 128
    %v556 = vpop.trf.xlu0
    %v557 = vpop.trf.xlu0
    %v558 = vpop.trf.xlu0
    %v559 = vpop.trf.xlu0
    %v560 = vpop.trf.xlu0
    %v561 = vpop.trf.xlu0
    %v562 = vpop.trf.xlu0
    %v563 = vpop.trf.xlu0
    %v564 = vpop.trf.xlu0
    %v565 = vpop.trf.xlu0
    %v566 = vpop.trf.xlu0
    %v567 = vpop.trf.xlu0
    %v568 = vpop.trf.xlu0
    %v569 = vpop.trf.xlu0
    %v570 = vpop.trf.xlu0
    %v571 = vpop.trf.xlu0
    %572 = vxpose.xlu0.b32.start [1/16] %v435, 128
    %573 = vxpose.xlu0.b32.cont [2/16] %v227, 128
    %574 = vxpose.xlu0.b32.cont [3/16] %v436, 128
    %575 = vxpose.xlu0.b32.cont [4/16] %v230, 128
    %576 = vxpose.xlu0.b32.cont [5/16] %v437, 128
    %577 = vxpose.xlu0.b32.cont [6/16] %v233, 128
    %578 = vxpose.xlu0.b32.cont [7/16] %v438, 128
    %579 = vxpose.xlu0.b32.cont [8/16] %v236, 128
    %580 = vxpose.xlu0.b32.cont [9/16] %v439, 128
    %581 = vxpose.xlu0.b32.cont [10/16] %v239, 128
    %582 = vxpose.xlu0.b32.cont [11/16] %v440, 128
    %583 = vxpose.xlu0.b32.cont [12/16] %v242, 128
    %584 = vxpose.xlu0.b32.cont [13/16] %v441, 128
    %585 = vxpose.xlu0.b32.cont [14/16] %v245, 128
    %586 = vxpose.xlu0.b32.cont [15/16] %v442, 128
    %587 = vxpose.xlu0.b32.end [16/16] %v248, 128
    %v588 = vpop.trf.xlu0
    %v589 = vpop.trf.xlu0
    %v590 = vpop.trf.xlu0
    %v591 = vpop.trf.xlu0
    %v592 = vpop.trf.xlu0
    %v593 = vpop.trf.xlu0
    %v594 = vpop.trf.xlu0
    %v595 = vpop.trf.xlu0
    %v596 = vpop.trf.xlu0
    %v597 = vpop.trf.xlu0
    %v598 = vpop.trf.xlu0
    %v599 = vpop.trf.xlu0
    %v600 = vpop.trf.xlu0
    %v601 = vpop.trf.xlu0
    %v602 = vpop.trf.xlu0
    %v603 = vpop.trf.xlu0
    %604 = vst [vmem:[#allocation2] sm:$0xff] %v492
    %605 = vst [vmem:[#allocation2 + $0x8] sm:$0xff] %v524
    %606 = vst [vmem:[#allocation2 + $0x10] sm:$0xff] %v556
    %607 = vst [vmem:[#allocation2 + $0x18] sm:$0xff] %v588
    %vm668 = vcmask 1046528
    %v669 = vrot.slane %v412, 1
    %v670 = vrot.slane %v158, 1
    %v671 = vsel %vm668, %v669, %v670
    %v672 = vrot.slane %v444, 1
    %v673 = vsel %vm668, %v670, %v672
    %v674 = vrot.slane %v413, 1
    %v675 = vrot.slane %v161, 1
    %v676 = vsel %vm668, %v674, %v675
    %v677 = vrot.slane %v445, 1
    %v678 = vsel %vm668, %v675, %v677
    %v679 = vrot.slane %v414, 1
    %v680 = vrot.slane %v164, 1
    %v681 = vsel %vm668, %v679, %v680
    %v682 = vrot.slane %v446, 1
    %v683 = vsel %vm668, %v680, %v682
    %v684 = vrot.slane %v415, 1
    %v685 = vrot.slane %v167, 1
    %v686 = vsel %vm668, %v684, %v685
    %v687 = vrot.slane %v447, 1
    %v688 = vsel %vm668, %v685, %v687
    %v689 = vrot.slane %v416, 1
    %v690 = vrot.slane %v170, 1
    %v691 = vsel %vm668, %v689, %v690
    %v692 = vrot.slane %v448, 1
    %v693 = vsel %vm668, %v690, %v692
    %v694 = vrot.slane %v417, 1
    %v695 = vrot.slane %v173, 1
    %v696 = vsel %vm668, %v694, %v695
    %v697 = vrot.slane %v449, 1
    %v698 = vsel %vm668, %v695, %v697
    %v699 = vrot.slane %v418, 1
    %v700 = vrot.slane %v176, 1
    %v701 = vsel %vm668, %v699, %v700
    %v702 = vrot.slane %v450, 1
    %v703 = vsel %vm668, %v700, %v702
    %v704 = vrot.slane %v419, 1
    %v705 = vrot.slane %v179, 1
    %v706 = vsel %vm668, %v704, %v705
    %v707 = vrot.slane %v451, 1
    %v708 = vsel %vm668, %v705, %v707
    %v709 = vrot.slane %v420, 1
    %v710 = vrot.slane %v182, 1
    %v711 = vsel %vm668, %v709, %v710
    %v712 = vrot.slane %v452, 1
    %v713 = vsel %vm668, %v710, %v712
    %v714 = vrot.slane %v421, 1
    %v715 = vrot.slane %v185, 1
    %v716 = vsel %vm668, %v714, %v715
    %v717 = vrot.slane %v453, 1
    %v718 = vsel %vm668, %v715, %v717
    %v719 = vrot.slane %v422, 1
    %v720 = vrot.slane %v188, 1
    %v721 = vsel %vm668, %v719, %v720
    %v722 = vrot.slane %v454, 1
    %v723 = vsel %vm668, %v720, %v722
    %v724 = vrot.slane %v423, 1
    %v725 = vrot.slane %v191, 1
    %v726 = vsel %vm668, %v724, %v725
    %v727 = vrot.slane %v455, 1
    %v728 = vsel %vm668, %v725, %v727
    %v729 = vrot.slane %v424, 1
    %v730 = vrot.slane %v194, 1
    %v731 = vsel %vm668, %v729, %v730
    %v732 = vrot.slane %v456, 1
    %v733 = vsel %vm668, %v730, %v732
    %v734 = vrot.slane %v425, 1
    %v735 = vrot.slane %v197, 1
    %v736 = vsel %vm668, %v734, %v735
    %v737 = vrot.slane %v457, 1
    %v738 = vsel %vm668, %v735, %v737
    %v739 = vrot.slane %v426, 1
    %v740 = vrot.slane %v200, 1
    %v741 = vsel %vm668, %v739, %v740
    %v742 = vrot.slane %v458, 1
    %v743 = vsel %vm668, %v740, %v742
    %v744 = vrot.slane %v428, 1
    %v745 = vrot.slane %v206, 1
    %v746 = vsel %vm668, %v744, %v745
    %v747 = vrot.slane %v460, 1
    %v748 = vsel %vm668, %v745, %v747
    %v749 = vrot.slane %v429, 1
    %v750 = vrot.slane %v209, 1
    %v751 = vsel %vm668, %v749, %v750
    %v752 = vrot.slane %v461, 1
    %v753 = vsel %vm668, %v750, %v752
    %v754 = vrot.slane %v430, 1
    %v755 = vrot.slane %v212, 1
    %v756 = vsel %vm668, %v754, %v755
    %v757 = vrot.slane %v462, 1
    %v758 = vsel %vm668, %v755, %v757
    %v759 = vrot.slane %v431, 1
    %v760 = vrot.slane %v215, 1
    %v761 = vsel %vm668, %v759, %v760
    %v762 = vrot.slane %v463, 1
    %v763 = vsel %vm668, %v760, %v762
    %v764 = vrot.slane %v432, 1
    %v765 = vrot.slane %v218, 1
    %v766 = vsel %vm668, %v764, %v765
    %v767 = vrot.slane %v464, 1
    %v768 = vsel %vm668, %v765, %v767
    %v769 = vrot.slane %v433, 1
    %v770 = vrot.slane %v221, 1
    %v771 = vsel %vm668, %v769, %v770
    %v772 = vrot.slane %v465, 1
    %v773 = vsel %vm668, %v770, %v772
    %v774 = vrot.slane %v434, 1
    %v775 = vrot.slane %v224, 1
    %v776 = vsel %vm668, %v774, %v775
    %v777 = vrot.slane %v466, 1
    %v778 = vsel %vm668, %v775, %v777
    %v779 = vrot.slane %v435, 1
    %v780 = vrot.slane %v227, 1
    %v781 = vsel %vm668, %v779, %v780
    %v782 = vrot.slane %v467, 1
    %v783 = vsel %vm668, %v780, %v782
    %v784 = vrot.slane %v436, 1
    %v785 = vrot.slane %v230, 1
    %v786 = vsel %vm668, %v784, %v785
    %v787 = vrot.slane %v468, 1
    %v788 = vsel %vm668, %v785, %v787
    %v789 = vrot.slane %v437, 1
    %v790 = vrot.slane %v233, 1
    %v791 = vsel %vm668, %v789, %v790
    %v792 = vrot.slane %v469, 1
    %v793 = vsel %vm668, %v790, %v792
    %v794 = vrot.slane %v438, 1
    %v795 = vrot.slane %v236, 1
    %v796 = vsel %vm668, %v794, %v795
    %v797 = vrot.slane %v470, 1
    %v798 = vsel %vm668, %v795, %v797
    %v799 = vrot.slane %v439, 1
    %v800 = vrot.slane %v239, 1
    %v801 = vsel %vm668, %v799, %v800
    %v802 = vrot.slane %v471, 1
    %v803 = vsel %vm668, %v800, %v802
    %v804 = vrot.slane %v440, 1
    %v805 = vrot.slane %v242, 1
    %v806 = vsel %vm668, %v804, %v805
    %v807 = vrot.slane %v472, 1
    %v808 = vsel %vm668, %v805, %v807
    %v809 = vrot.slane %v441, 1
    %v810 = vrot.slane %v245, 1
    %v811 = vsel %vm668, %v809, %v810
    %v812 = vrot.slane %v473, 1
    %v813 = vsel %vm668, %v810, %v812
    %v814 = vrot.slane %v442, 1
    %v815 = vrot.slane %v248, 1
    %v816 = vsel %vm668, %v814, %v815
    %v817 = vrot.slane %v474, 1
    %v818 = vsel %vm668, %v815, %v817
    %879 = vxpose.xlu0.b32.start [1/16] %v671, 128
    %880 = vxpose.xlu0.b32.cont [2/16] %v673, 128
    %881 = vxpose.xlu0.b32.cont [3/16] %v671, 128
    %882 = vxpose.xlu0.b32.cont [4/16] %v673, 128
    %883 = vxpose.xlu0.b32.cont [5/16] %v676, 128
    %884 = vxpose.xlu0.b32.cont [6/16] %v678, 128
    %885 = vxpose.xlu0.b32.cont [7/16] %v681, 128
    %886 = vxpose.xlu0.b32.cont [8/16] %v683, 128
    %887 = vxpose.xlu0.b32.cont [9/16] %v686, 128
    %888 = vxpose.xlu0.b32.cont [10/16] %v688, 128
    %889 = vxpose.xlu0.b32.cont [11/16] %v691, 128
    %890 = vxpose.xlu0.b32.cont [12/16] %v693, 128
    %891 = vxpose.xlu0.b32.cont [13/16] %v696, 128
    %892 = vxpose.xlu0.b32.cont [14/16] %v698, 128
    %893 = vxpose.xlu0.b32.cont [15/16] %v701, 128
    %894 = vxpose.xlu0.b32.end [16/16] %v703, 128
    %v895 = vpop.trf.xlu0
    %v896 = vpop.trf.xlu0
    %v897 = vpop.trf.xlu0
    %v898 = vpop.trf.xlu0
    %v899 = vpop.trf.xlu0
    %v900 = vpop.trf.xlu0
    %v901 = vpop.trf.xlu0
    %v902 = vpop.trf.xlu0
    %v903 = vpop.trf.xlu0
    %v904 = vpop.trf.xlu0
    %v905 = vpop.trf.xlu0
    %v906 = vpop.trf.xlu0
    %v907 = vpop.trf.xlu0
    %v908 = vpop.trf.xlu0
    %v909 = vpop.trf.xlu0
    %v910 = vpop.trf.xlu0
    %911 = vxpose.xlu0.b32.start [1/16] %v706, 128
    %912 = vxpose.xlu0.b32.cont [2/16] %v708, 128
    %913 = vxpose.xlu0.b32.cont [3/16] %v711, 128
    %914 = vxpose.xlu0.b32.cont [4/16] %v713, 128
    %915 = vxpose.xlu0.b32.cont [5/16] %v716, 128
    %916 = vxpose.xlu0.b32.cont [6/16] %v718, 128
    %917 = vxpose.xlu0.b32.cont [7/16] %v721, 128
    %918 = vxpose.xlu0.b32.cont [8/16] %v723, 128
    %919 = vxpose.xlu0.b32.cont [9/16] %v726, 128
    %920 = vxpose.xlu0.b32.cont [10/16] %v728, 128
    %921 = vxpose.xlu0.b32.cont [11/16] %v731, 128
    %922 = vxpose.xlu0.b32.cont [12/16] %v733, 128
    %923 = vxpose.xlu0.b32.cont [13/16] %v736, 128
    %924 = vxpose.xlu0.b32.cont [14/16] %v738, 128
    %925 = vxpose.xlu0.b32.cont [15/16] %v741, 128
    %926 = vxpose.xlu0.b32.end [16/16] %v743, 128
    %v927 = vpop.trf.xlu0
    %v928 = vpop.trf.xlu0
    %v929 = vpop.trf.xlu0
    %v930 = vpop.trf.xlu0
    %v931 = vpop.trf.xlu0
    %v932 = vpop.trf.xlu0
    %v933 = vpop.trf.xlu0
    %v934 = vpop.trf.xlu0
    %v935 = vpop.trf.xlu0
    %v936 = vpop.trf.xlu0
    %v937 = vpop.trf.xlu0
    %v938 = vpop.trf.xlu0
    %v939 = vpop.trf.xlu0
    %v940 = vpop.trf.xlu0
    %v941 = vpop.trf.xlu0
    %v942 = vpop.trf.xlu0
    %943 = vxpose.xlu0.b32.start [1/16] %v746, 128
    %944 = vxpose.xlu0.b32.cont [2/16] %v748, 128
    %945 = vxpose.xlu0.b32.cont [3/16] %v746, 128
    %946 = vxpose.xlu0.b32.cont [4/16] %v748, 128
    %947 = vxpose.xlu0.b32.cont [5/16] %v751, 128
    %948 = vxpose.xlu0.b32.cont [6/16] %v753, 128
    %949 = vxpose.xlu0.b32.cont [7/16] %v756, 128
    %950 = vxpose.xlu0.b32.cont [8/16] %v758, 128
    %951 = vxpose.xlu0.b32.cont [9/16] %v761, 128
    %952 = vxpose.xlu0.b32.cont [10/16] %v763, 128
    %953 = vxpose.xlu0.b32.cont [11/16] %v766, 128
    %954 = vxpose.xlu0.b32.cont [12/16] %v768, 128
    %955 = vxpose.xlu0.b32.cont [13/16] %v771, 128
    %956 = vxpose.xlu0.b32.cont [14/16] %v773, 128
    %957 = vxpose.xlu0.b32.cont [15/16] %v776, 128
    %958 = vxpose.xlu0.b32.end [16/16] %v778, 128
    %v959 = vpop.trf.xlu0
    %v960 = vpop.trf.xlu0
    %v961 = vpop.trf.xlu0
    %v962 = vpop.trf.xlu0
    %v963 = vpop.trf.xlu0
    %v964 = vpop.trf.xlu0
    %v965 = vpop.trf.xlu0
    %v966 = vpop.trf.xlu0
    %v967 = vpop.trf.xlu0
    %v968 = vpop.trf.xlu0
    %v969 = vpop.trf.xlu0
    %v970 = vpop.trf.xlu0
    %v971 = vpop.trf.xlu0
    %v972 = vpop.trf.xlu0
    %v973 = vpop.trf.xlu0
    %v974 = vpop.trf.xlu0
    %975 = vxpose.xlu0.b32.start [1/16] %v781, 128
    %976 = vxpose.xlu0.b32.cont [2/16] %v783, 128
    %977 = vxpose.xlu0.b32.cont [3/16] %v786, 128
    %978 = vxpose.xlu0.b32.cont [4/16] %v788, 128
    %979 = vxpose.xlu0.b32.cont [5/16] %v791, 128
    %980 = vxpose.xlu0.b32.cont [6/16] %v793, 128
    %981 = vxpose.xlu0.b32.cont [7/16] %v796, 128
    %982 = vxpose.xlu0.b32.cont [8/16] %v798, 128
    %983 = vxpose.xlu0.b32.cont [9/16] %v801, 128
    %984 = vxpose.xlu0.b32.cont [10/16] %v803, 128
    %985 = vxpose.xlu0.b32.cont [11/16] %v806, 128
    %986 = vxpose.xlu0.b32.cont [12/16] %v808, 128
    %987 = vxpose.xlu0.b32.cont [13/16] %v811, 128
    %988 = vxpose.xlu0.b32.cont [14/16] %v813, 128
    %989 = vxpose.xlu0.b32.cont [15/16] %v816, 128
    %990 = vxpose.xlu0.b32.end [16/16] %v818, 128
    %v991 = vpop.trf.xlu0
    %v992 = vpop.trf.xlu0
    %v993 = vpop.trf.xlu0
    %v994 = vpop.trf.xlu0
    %v995 = vpop.trf.xlu0
    %v996 = vpop.trf.xlu0
    %v997 = vpop.trf.xlu0
    %v998 = vpop.trf.xlu0
    %v999 = vpop.trf.xlu0
    %v1000 = vpop.trf.xlu0
    %v1001 = vpop.trf.xlu0
    %v1002 = vpop.trf.xlu0
    %v1003 = vpop.trf.xlu0
    %v1004 = vpop.trf.xlu0
    %v1005 = vpop.trf.xlu0
    %v1006 = vpop.trf.xlu0
    %1007 = vst [vmem:[#allocation2 + $0x20] sm:$0xff] %v895
    %1008 = vst [vmem:[#allocation2 + $0x28] sm:$0xff] %v927
    %1009 = vst [vmem:[#allocation2 + $0x30] sm:$0xff] %v959
    %1010 = vst [vmem:[#allocation2 + $0x38] sm:$0xff] %v991
    %vm1011 = vcmask 1045504
    %v1012 = vrot.slane %v412, 2
    %v1013 = vrot.slane %v158, 2
    %v1014 = vsel %vm1011, %v1012, %v1013
    %v1015 = vrot.slane %v444, 2
    %v1016 = vsel %vm1011, %v1013, %v1015
    %v1017 = vrot.slane %v413, 2
    %v1018 = vrot.slane %v161, 2
    %v1019 = vsel %vm1011, %v1017, %v1018
    %v1020 = vrot.slane %v445, 2
    %v1021 = vsel %vm1011, %v1018, %v1020
    %v1022 = vrot.slane %v414, 2
    %v1023 = vrot.slane %v164, 2
    %v1024 = vsel %vm1011, %v1022, %v1023
    %v1025 = vrot.slane %v446, 2
    %v1026 = vsel %vm1011, %v1023, %v1025
    %v1027 = vrot.slane %v415, 2
    %v1028 = vrot.slane %v167, 2
    %v1029 = vsel %vm1011, %v1027, %v1028
    %v1030 = vrot.slane %v447, 2
    %v1031 = vsel %vm1011, %v1028, %v1030
    %v1032 = vrot.slane %v416, 2
    %v1033 = vrot.slane %v170, 2
    %v1034 = vsel %vm1011, %v1032, %v1033
    %v1035 = vrot.slane %v448, 2
    %v1036 = vsel %vm1011, %v1033, %v1035
    %v1037 = vrot.slane %v417, 2
    %v1038 = vrot.slane %v173, 2
    %v1039 = vsel %vm1011, %v1037, %v1038
    %v1040 = vrot.slane %v449, 2
    %v1041 = vsel %vm1011, %v1038, %v1040
    %v1042 = vrot.slane %v418, 2
    %v1043 = vrot.slane %v176, 2
    %v1044 = vsel %vm1011, %v1042, %v1043
    %v1045 = vrot.slane %v450, 2
    %v1046 = vsel %vm1011, %v1043, %v1045
    %v1047 = vrot.slane %v419, 2
    %v1048 = vrot.slane %v179, 2
    %v1049 = vsel %vm1011, %v1047, %v1048
    %v1050 = vrot.slane %v451, 2
    %v1051 = vsel %vm1011, %v1048, %v1050
    %v1052 = vrot.slane %v420, 2
    %v1053 = vrot.slane %v182, 2
    %v1054 = vsel %vm1011, %v1052, %v1053
    %v1055 = vrot.slane %v452, 2
    %v1056 = vsel %vm1011, %v1053, %v1055
    %v1057 = vrot.slane %v421, 2
    %v1058 = vrot.slane %v185, 2
    %v1059 = vsel %vm1011, %v1057, %v1058
    %v1060 = vrot.slane %v453, 2
    %v1061 = vsel %vm1011, %v1058, %v1060
    %v1062 = vrot.slane %v422, 2
    %v1063 = vrot.slane %v188, 2
    %v1064 = vsel %vm1011, %v1062, %v1063
    %v1065 = vrot.slane %v454, 2
    %v1066 = vsel %vm1011, %v1063, %v1065
    %v1067 = vrot.slane %v423, 2
    %v1068 = vrot.slane %v191, 2
    %v1069 = vsel %vm1011, %v1067, %v1068
    %v1070 = vrot.slane %v455, 2
    %v1071 = vsel %vm1011, %v1068, %v1070
    %v1072 = vrot.slane %v424, 2
    %v1073 = vrot.slane %v194, 2
    %v1074 = vsel %vm1011, %v1072, %v1073
    %v1075 = vrot.slane %v456, 2
    %v1076 = vsel %vm1011, %v1073, %v1075
    %v1077 = vrot.slane %v425, 2
    %v1078 = vrot.slane %v197, 2
    %v1079 = vsel %vm1011, %v1077, %v1078
    %v1080 = vrot.slane %v457, 2
    %v1081 = vsel %vm1011, %v1078, %v1080
    %v1082 = vrot.slane %v426, 2
    %v1083 = vrot.slane %v200, 2
    %v1084 = vsel %vm1011, %v1082, %v1083
    %v1085 = vrot.slane %v458, 2
    %v1086 = vsel %vm1011, %v1083, %v1085
    %v1087 = vrot.slane %v428, 2
    %v1088 = vrot.slane %v206, 2
    %v1089 = vsel %vm1011, %v1087, %v1088
    %v1090 = vrot.slane %v460, 2
    %v1091 = vsel %vm1011, %v1088, %v1090
    %v1092 = vrot.slane %v429, 2
    %v1093 = vrot.slane %v209, 2
    %v1094 = vsel %vm1011, %v1092, %v1093
    %v1095 = vrot.slane %v461, 2
    %v1096 = vsel %vm1011, %v1093, %v1095
    %v1097 = vrot.slane %v430, 2
    %v1098 = vrot.slane %v212, 2
    %v1099 = vsel %vm1011, %v1097, %v1098
    %v1100 = vrot.slane %v462, 2
    %v1101 = vsel %vm1011, %v1098, %v1100
    %v1102 = vrot.slane %v431, 2
    %v1103 = vrot.slane %v215, 2
    %v1104 = vsel %vm1011, %v1102, %v1103
    %v1105 = vrot.slane %v463, 2
    %v1106 = vsel %vm1011, %v1103, %v1105
    %v1107 = vrot.slane %v432, 2
    %v1108 = vrot.slane %v218, 2
    %v1109 = vsel %vm1011, %v1107, %v1108
    %v1110 = vrot.slane %v464, 2
    %v1111 = vsel %vm1011, %v1108, %v1110
    %v1112 = vrot.slane %v433, 2
    %v1113 = vrot.slane %v221, 2
    %v1114 = vsel %vm1011, %v1112, %v1113
    %v1115 = vrot.slane %v465, 2
    %v1116 = vsel %vm1011, %v1113, %v1115
    %v1117 = vrot.slane %v434, 2
    %v1118 = vrot.slane %v224, 2
    %v1119 = vsel %vm1011, %v1117, %v1118
    %v1120 = vrot.slane %v466, 2
    %v1121 = vsel %vm1011, %v1118, %v1120
    %v1122 = vrot.slane %v435, 2
    %v1123 = vrot.slane %v227, 2
    %v1124 = vsel %vm1011, %v1122, %v1123
    %v1125 = vrot.slane %v467, 2
    %v1126 = vsel %vm1011, %v1123, %v1125
    %v1127 = vrot.slane %v436, 2
    %v1128 = vrot.slane %v230, 2
    %v1129 = vsel %vm1011, %v1127, %v1128
    %v1130 = vrot.slane %v468, 2
    %v1131 = vsel %vm1011, %v1128, %v1130
    %v1132 = vrot.slane %v437, 2
    %v1133 = vrot.slane %v233, 2
    %v1134 = vsel %vm1011, %v1132, %v1133
    %v1135 = vrot.slane %v469, 2
    %v1136 = vsel %vm1011, %v1133, %v1135
    %v1137 = vrot.slane %v438, 2
    %v1138 = vrot.slane %v236, 2
    %v1139 = vsel %vm1011, %v1137, %v1138
    %v1140 = vrot.slane %v470, 2
    %v1141 = vsel %vm1011, %v1138, %v1140
    %v1142 = vrot.slane %v439, 2
    %v1143 = vrot.slane %v239, 2
    %v1144 = vsel %vm1011, %v1142, %v1143
    %v1145 = vrot.slane %v471, 2
    %v1146 = vsel %vm1011, %v1143, %v1145
    %v1147 = vrot.slane %v440, 2
    %v1148 = vrot.slane %v242, 2
    %v1149 = vsel %vm1011, %v1147, %v1148
    %v1150 = vrot.slane %v472, 2
    %v1151 = vsel %vm1011, %v1148, %v1150
    %v1152 = vrot.slane %v441, 2
    %v1153 = vrot.slane %v245, 2
    %v1154 = vsel %vm1011, %v1152, %v1153
    %v1155 = vrot.slane %v473, 2
    %v1156 = vsel %vm1011, %v1153, %v1155
    %v1157 = vrot.slane %v442, 2
    %v1158 = vrot.slane %v248, 2
    %v1159 = vsel %vm1011, %v1157, %v1158
    %v1160 = vrot.slane %v474, 2
    %v1161 = vsel %vm1011, %v1158, %v1160
    %1222 = vxpose.xlu0.b32.start [1/16] %v1014, 128
    %1223 = vxpose.xlu0.b32.cont [2/16] %v1016, 128
    %1224 = vxpose.xlu0.b32.cont [3/16] %v1014, 128
    %1225 = vxpose.xlu0.b32.cont [4/16] %v1016, 128
    %1226 = vxpose.xlu0.b32.cont [5/16] %v1019, 128
    %1227 = vxpose.xlu0.b32.cont [6/16] %v1021, 128
    %1228 = vxpose.xlu0.b32.cont [7/16] %v1024, 128
    %1229 = vxpose.xlu0.b32.cont [8/16] %v1026, 128
    %1230 = vxpose.xlu0.b32.cont [9/16] %v1029, 128
    %1231 = vxpose.xlu0.b32.cont [10/16] %v1031, 128
    %1232 = vxpose.xlu0.b32.cont [11/16] %v1034, 128
    %1233 = vxpose.xlu0.b32.cont [12/16] %v1036, 128
    %1234 = vxpose.xlu0.b32.cont [13/16] %v1039, 128
    %1235 = vxpose.xlu0.b32.cont [14/16] %v1041, 128
    %1236 = vxpose.xlu0.b32.cont [15/16] %v1044, 128
    %1237 = vxpose.xlu0.b32.end [16/16] %v1046, 128
    %v1238 = vpop.trf.xlu0
    %v1239 = vpop.trf.xlu0
    %v1240 = vpop.trf.xlu0
    %v1241 = vpop.trf.xlu0
    %v1242 = vpop.trf.xlu0
    %v1243 = vpop.trf.xlu0
    %v1244 = vpop.trf.xlu0
    %v1245 = vpop.trf.xlu0
    %v1246 = vpop.trf.xlu0
    %v1247 = vpop.trf.xlu0
    %v1248 = vpop.trf.xlu0
    %v1249 = vpop.trf.xlu0
    %v1250 = vpop.trf.xlu0
    %v1251 = vpop.trf.xlu0
    %v1252 = vpop.trf.xlu0
    %v1253 = vpop.trf.xlu0
    %1254 = vxpose.xlu0.b32.start [1/16] %v1049, 128
    %1255 = vxpose.xlu0.b32.cont [2/16] %v1051, 128
    %1256 = vxpose.xlu0.b32.cont [3/16] %v1054, 128
    %1257 = vxpose.xlu0.b32.cont [4/16] %v1056, 128
    %1258 = vxpose.xlu0.b32.cont [5/16] %v1059, 128
    %1259 = vxpose.xlu0.b32.cont [6/16] %v1061, 128
    %1260 = vxpose.xlu0.b32.cont [7/16] %v1064, 128
    %1261 = vxpose.xlu0.b32.cont [8/16] %v1066, 128
    %1262 = vxpose.xlu0.b32.cont [9/16] %v1069, 128
    %1263 = vxpose.xlu0.b32.cont [10/16] %v1071, 128
    %1264 = vxpose.xlu0.b32.cont [11/16] %v1074, 128
    %1265 = vxpose.xlu0.b32.cont [12/16] %v1076, 128
    %1266 = vxpose.xlu0.b32.cont [13/16] %v1079, 128
    %1267 = vxpose.xlu0.b32.cont [14/16] %v1081, 128
    %1268 = vxpose.xlu0.b32.cont [15/16] %v1084, 128
    %1269 = vxpose.xlu0.b32.end [16/16] %v1086, 128
    %v1270 = vpop.trf.xlu0
    %v1271 = vpop.trf.xlu0
    %v1272 = vpop.trf.xlu0
    %v1273 = vpop.trf.xlu0
    %v1274 = vpop.trf.xlu0
    %v1275 = vpop.trf.xlu0
    %v1276 = vpop.trf.xlu0
    %v1277 = vpop.trf.xlu0
    %v1278 = vpop.trf.xlu0
    %v1279 = vpop.trf.xlu0
    %v1280 = vpop.trf.xlu0
    %v1281 = vpop.trf.xlu0
    %v1282 = vpop.trf.xlu0
    %v1283 = vpop.trf.xlu0
    %v1284 = vpop.trf.xlu0
    %v1285 = vpop.trf.xlu0
    %1286 = vxpose.xlu0.b32.start [1/16] %v1089, 128
    %1287 = vxpose.xlu0.b32.cont [2/16] %v1091, 128
    %1288 = vxpose.xlu0.b32.cont [3/16] %v1089, 128
    %1289 = vxpose.xlu0.b32.cont [4/16] %v1091, 128
    %1290 = vxpose.xlu0.b32.cont [5/16] %v1094, 128
    %1291 = vxpose.xlu0.b32.cont [6/16] %v1096, 128
    %1292 = vxpose.xlu0.b32.cont [7/16] %v1099, 128
    %1293 = vxpose.xlu0.b32.cont [8/16] %v1101, 128
    %1294 = vxpose.xlu0.b32.cont [9/16] %v1104, 128
    %1295 = vxpose.xlu0.b32.cont [10/16] %v1106, 128
    %1296 = vxpose.xlu0.b32.cont [11/16] %v1109, 128
    %1297 = vxpose.xlu0.b32.cont [12/16] %v1111, 128
    %1298 = vxpose.xlu0.b32.cont [13/16] %v1114, 128
    %1299 = vxpose.xlu0.b32.cont [14/16] %v1116, 128
    %1300 = vxpose.xlu0.b32.cont [15/16] %v1119, 128
    %1301 = vxpose.xlu0.b32.end [16/16] %v1121, 128
    %v1302 = vpop.trf.xlu0
    %v1303 = vpop.trf.xlu0
    %v1304 = vpop.trf.xlu0
    %v1305 = vpop.trf.xlu0
    %v1306 = vpop.trf.xlu0
    %v1307 = vpop.trf.xlu0
    %v1308 = vpop.trf.xlu0
    %v1309 = vpop.trf.xlu0
    %v1310 = vpop.trf.xlu0
    %v1311 = vpop.trf.xlu0
    %v1312 = vpop.trf.xlu0
    %v1313 = vpop.trf.xlu0
    %v1314 = vpop.trf.xlu0
    %v1315 = vpop.trf.xlu0
    %v1316 = vpop.trf.xlu0
    %v1317 = vpop.trf.xlu0
    %1318 = vxpose.xlu0.b32.start [1/16] %v1124, 128
    %1319 = vxpose.xlu0.b32.cont [2/16] %v1126, 128
    %1320 = vxpose.xlu0.b32.cont [3/16] %v1129, 128
    %1321 = vxpose.xlu0.b32.cont [4/16] %v1131, 128
    %1322 = vxpose.xlu0.b32.cont [5/16] %v1134, 128
    %1323 = vxpose.xlu0.b32.cont [6/16] %v1136, 128
    %1324 = vxpose.xlu0.b32.cont [7/16] %v1139, 128
    %1325 = vxpose.xlu0.b32.cont [8/16] %v1141, 128
    %1326 = vxpose.xlu0.b32.cont [9/16] %v1144, 128
    %1327 = vxpose.xlu0.b32.cont [10/16] %v1146, 128
    %1328 = vxpose.xlu0.b32.cont [11/16] %v1149, 128
    %1329 = vxpose.xlu0.b32.cont [12/16] %v1151, 128
    %1330 = vxpose.xlu0.b32.cont [13/16] %v1154, 128
    %1331 = vxpose.xlu0.b32.cont [14/16] %v1156, 128
    %1332 = vxpose.xlu0.b32.cont [15/16] %v1159, 128
    %1333 = vxpose.xlu0.b32.end [16/16] %v1161, 128
    %v1334 = vpop.trf.xlu0
    %v1335 = vpop.trf.xlu0
    %v1336 = vpop.trf.xlu0
    %v1337 = vpop.trf.xlu0
    %v1338 = vpop.trf.xlu0
    %v1339 = vpop.trf.xlu0
    %v1340 = vpop.trf.xlu0
    %v1341 = vpop.trf.xlu0
    %v1342 = vpop.trf.xlu0
    %v1343 = vpop.trf.xlu0
    %v1344 = vpop.trf.xlu0
    %v1345 = vpop.trf.xlu0
    %v1346 = vpop.trf.xlu0
    %v1347 = vpop.trf.xlu0
    %v1348 = vpop.trf.xlu0
    %v1349 = vpop.trf.xlu0
    %1350 = vst [vmem:[#allocation2 + $0x40] sm:$0xff] %v1238
    %1351 = vst [vmem:[#allocation2 + $0x48] sm:$0xff] %v1270
    %1352 = vst [vmem:[#allocation2 + $0x50] sm:$0xff] %v1302
    %1353 = vst [vmem:[#allocation2 + $0x58] sm:$0xff] %v1334
    %1354 = vxpose.xlu0.b32.start [1/16] %v412, 128
    %1355 = vxpose.xlu0.b32.cont [2/16] %v158, 128
    %1356 = vxpose.xlu0.b32.cont [3/16] %v413, 128
    %1357 = vxpose.xlu0.b32.cont [4/16] %v161, 128
    %1358 = vxpose.xlu0.b32.cont [5/16] %v414, 128
    %1359 = vxpose.xlu0.b32.cont [6/16] %v164, 128
    %1360 = vxpose.xlu0.b32.cont [7/16] %v415, 128
    %1361 = vxpose.xlu0.b32.cont [8/16] %v167, 128
    %1362 = vxpose.xlu0.b32.cont [9/16] %v416, 128
    %1363 = vxpose.xlu0.b32.cont [10/16] %v170, 128
    %1364 = vxpose.xlu0.b32.cont [11/16] %v417, 128
    %1365 = vxpose.xlu0.b32.cont [12/16] %v173, 128
    %1366 = vxpose.xlu0.b32.cont [13/16] %v418, 128
    %1367 = vxpose.xlu0.b32.cont [14/16] %v176, 128
    %1368 = vxpose.xlu0.b32.cont [15/16] %v419, 128
    %1369 = vxpose.xlu0.b32.end [16/16] %v179, 128
    %v1370 = vpop.trf.xlu0
    %v1371 = vpop.trf.xlu0
    %v1372 = vpop.trf.xlu0
    %v1373 = vpop.trf.xlu0
    %v1374 = vpop.trf.xlu0
    %v1375 = vpop.trf.xlu0
    %v1376 = vpop.trf.xlu0
    %v1377 = vpop.trf.xlu0
    %v1378 = vpop.trf.xlu0
    %v1379 = vpop.trf.xlu0
    %v1380 = vpop.trf.xlu0
    %v1381 = vpop.trf.xlu0
    %v1382 = vpop.trf.xlu0
    %v1383 = vpop.trf.xlu0
    %v1384 = vpop.trf.xlu0
    %v1385 = vpop.trf.xlu0
    %1386 = vxpose.xlu0.b32.start [1/16] %v420, 128
    %1387 = vxpose.xlu0.b32.cont [2/16] %v182, 128
    %1388 = vxpose.xlu0.b32.cont [3/16] %v421, 128
    %1389 = vxpose.xlu0.b32.cont [4/16] %v185, 128
    %1390 = vxpose.xlu0.b32.cont [5/16] %v422, 128
    %1391 = vxpose.xlu0.b32.cont [6/16] %v188, 128
    %1392 = vxpose.xlu0.b32.cont [7/16] %v423, 128
    %1393 = vxpose.xlu0.b32.cont [8/16] %v191, 128
    %1394 = vxpose.xlu0.b32.cont [9/16] %v424, 128
    %1395 = vxpose.xlu0.b32.cont [10/16] %v194, 128
    %1396 = vxpose.xlu0.b32.cont [11/16] %v425, 128
    %1397 = vxpose.xlu0.b32.cont [12/16] %v197, 128
    %1398 = vxpose.xlu0.b32.cont [13/16] %v426, 128
    %1399 = vxpose.xlu0.b32.cont [14/16] %v200, 128
    %1400 = vxpose.xlu0.b32.cont [15/16] %v427, 128
    %1401 = vxpose.xlu0.b32.end [16/16] %v203, 128
    %v1402 = vpop.trf.xlu0
    %v1403 = vpop.trf.xlu0
    %v1404 = vpop.trf.xlu0
    %v1405 = vpop.trf.xlu0
    %v1406 = vpop.trf.xlu0
    %v1407 = vpop.trf.xlu0
    %v1408 = vpop.trf.xlu0
    %v1409 = vpop.trf.xlu0
    %v1410 = vpop.trf.xlu0
    %v1411 = vpop.trf.xlu0
    %v1412 = vpop.trf.xlu0
    %v1413 = vpop.trf.xlu0
    %v1414 = vpop.trf.xlu0
    %v1415 = vpop.trf.xlu0
    %v1416 = vpop.trf.xlu0
    %v1417 = vpop.trf.xlu0
    %1418 = vxpose.xlu0.b32.start [1/16] %v428, 128
    %1419 = vxpose.xlu0.b32.cont [2/16] %v206, 128
    %1420 = vxpose.xlu0.b32.cont [3/16] %v429, 128
    %1421 = vxpose.xlu0.b32.cont [4/16] %v209, 128
    %1422 = vxpose.xlu0.b32.cont [5/16] %v430, 128
    %1423 = vxpose.xlu0.b32.cont [6/16] %v212, 128
    %1424 = vxpose.xlu0.b32.cont [7/16] %v431, 128
    %1425 = vxpose.xlu0.b32.cont [8/16] %v215, 128
    %1426 = vxpose.xlu0.b32.cont [9/16] %v432, 128
    %1427 = vxpose.xlu0.b32.cont [10/16] %v218, 128
    %1428 = vxpose.xlu0.b32.cont [11/16] %v433, 128
    %1429 = vxpose.xlu0.b32.cont [12/16] %v221, 128
    %1430 = vxpose.xlu0.b32.cont [13/16] %v434, 128
    %1431 = vxpose.xlu0.b32.cont [14/16] %v224, 128
    %1432 = vxpose.xlu0.b32.cont [15/16] %v435, 128
    %1433 = vxpose.xlu0.b32.end [16/16] %v227, 128
    %v1434 = vpop.trf.xlu0
    %v1435 = vpop.trf.xlu0
    %v1436 = vpop.trf.xlu0
    %v1437 = vpop.trf.xlu0
    %v1438 = vpop.trf.xlu0
    %v1439 = vpop.trf.xlu0
    %v1440 = vpop.trf.xlu0
    %v1441 = vpop.trf.xlu0
    %v1442 = vpop.trf.xlu0
    %v1443 = vpop.trf.xlu0
    %v1444 = vpop.trf.xlu0
    %v1445 = vpop.trf.xlu0
    %v1446 = vpop.trf.xlu0
    %v1447 = vpop.trf.xlu0
    %v1448 = vpop.trf.xlu0
    %v1449 = vpop.trf.xlu0
    %1450 = vxpose.xlu0.b32.start [1/16] %v436, 128
    %1451 = vxpose.xlu0.b32.cont [2/16] %v230, 128
    %1452 = vxpose.xlu0.b32.cont [3/16] %v437, 128
    %1453 = vxpose.xlu0.b32.cont [4/16] %v233, 128
    %1454 = vxpose.xlu0.b32.cont [5/16] %v438, 128
    %1455 = vxpose.xlu0.b32.cont [6/16] %v236, 128
    %1456 = vxpose.xlu0.b32.cont [7/16] %v439, 128
    %1457 = vxpose.xlu0.b32.cont [8/16] %v239, 128
    %1458 = vxpose.xlu0.b32.cont [9/16] %v440, 128
    %1459 = vxpose.xlu0.b32.cont [10/16] %v242, 128
    %1460 = vxpose.xlu0.b32.cont [11/16] %v441, 128
    %1461 = vxpose.xlu0.b32.cont [12/16] %v245, 128
    %1462 = vxpose.xlu0.b32.cont [13/16] %v442, 128
    %1463 = vxpose.xlu0.b32.cont [14/16] %v248, 128
    %1464 = vxpose.xlu0.b32.cont [15/16] %v443, 128
    %1465 = vxpose.xlu0.b32.end [16/16] %v251, 128
    %v1466 = vpop.trf.xlu0
    %v1467 = vpop.trf.xlu0
    %v1468 = vpop.trf.xlu0
    %v1469 = vpop.trf.xlu0
    %v1470 = vpop.trf.xlu0
    %v1471 = vpop.trf.xlu0
    %v1472 = vpop.trf.xlu0
    %v1473 = vpop.trf.xlu0
    %v1474 = vpop.trf.xlu0
    %v1475 = vpop.trf.xlu0
    %v1476 = vpop.trf.xlu0
    %v1477 = vpop.trf.xlu0
    %v1478 = vpop.trf.xlu0
    %v1479 = vpop.trf.xlu0
    %v1480 = vpop.trf.xlu0
    %v1481 = vpop.trf.xlu0
    %1482 = vst [vmem:[#allocation2 + $0x60] sm:$0xff] %v1370
    %1483 = vst [vmem:[#allocation2 + $0x68] sm:$0xff] %v1402
    %1484 = vst [vmem:[#allocation2 + $0x70] sm:$0xff] %v1434
    %1485 = vst [vmem:[#allocation2 + $0x78] sm:$0xff] %v1466
    %v1490 = vrot.slane %v427, 1
    %v1491 = vrot.slane %v203, 1
    %v1492 = vsel %vm668, %v1490, %v1491
    %v1493 = vrot.slane %v459, 1
    %v1494 = vsel %vm668, %v1491, %v1493
    %v1495 = vrot.slane %v443, 1
    %v1496 = vrot.slane %v251, 1
    %v1497 = vsel %vm668, %v1495, %v1496
    %v1498 = vrot.slane %v475, 1
    %v1499 = vsel %vm668, %v1496, %v1498
    %1504 = vxpose.xlu0.b32.start [1/16] %v671, 128
    %1505 = vxpose.xlu0.b32.cont [2/16] %v673, 128
    %1506 = vxpose.xlu0.b32.cont [3/16] %v676, 128
    %1507 = vxpose.xlu0.b32.cont [4/16] %v678, 128
    %1508 = vxpose.xlu0.b32.cont [5/16] %v681, 128
    %1509 = vxpose.xlu0.b32.cont [6/16] %v683, 128
    %1510 = vxpose.xlu0.b32.cont [7/16] %v686, 128
    %1511 = vxpose.xlu0.b32.cont [8/16] %v688, 128
    %1512 = vxpose.xlu0.b32.cont [9/16] %v691, 128
    %1513 = vxpose.xlu0.b32.cont [10/16] %v693, 128
    %1514 = vxpose.xlu0.b32.cont [11/16] %v696, 128
    %1515 = vxpose.xlu0.b32.cont [12/16] %v698, 128
    %1516 = vxpose.xlu0.b32.cont [13/16] %v701, 128
    %1517 = vxpose.xlu0.b32.cont [14/16] %v703, 128
    %1518 = vxpose.xlu0.b32.cont [15/16] %v706, 128
    %1519 = vxpose.xlu0.b32.end [16/16] %v708, 128
    %v1520 = vpop.trf.xlu0
    %v1521 = vpop.trf.xlu0
    %v1522 = vpop.trf.xlu0
    %v1523 = vpop.trf.xlu0
    %v1524 = vpop.trf.xlu0
    %v1525 = vpop.trf.xlu0
    %v1526 = vpop.trf.xlu0
    %v1527 = vpop.trf.xlu0
    %v1528 = vpop.trf.xlu0
    %v1529 = vpop.trf.xlu0
    %v1530 = vpop.trf.xlu0
    %v1531 = vpop.trf.xlu0
    %v1532 = vpop.trf.xlu0
    %v1533 = vpop.trf.xlu0
    %v1534 = vpop.trf.xlu0
    %v1535 = vpop.trf.xlu0
    %1536 = vxpose.xlu0.b32.start [1/16] %v711, 128
    %1537 = vxpose.xlu0.b32.cont [2/16] %v713, 128
    %1538 = vxpose.xlu0.b32.cont [3/16] %v716, 128
    %1539 = vxpose.xlu0.b32.cont [4/16] %v718, 128
    %1540 = vxpose.xlu0.b32.cont [5/16] %v721, 128
    %1541 = vxpose.xlu0.b32.cont [6/16] %v723, 128
    %1542 = vxpose.xlu0.b32.cont [7/16] %v726, 128
    %1543 = vxpose.xlu0.b32.cont [8/16] %v728, 128
    %1544 = vxpose.xlu0.b32.cont [9/16] %v731, 128
    %1545 = vxpose.xlu0.b32.cont [10/16] %v733, 128
    %1546 = vxpose.xlu0.b32.cont [11/16] %v736, 128
    %1547 = vxpose.xlu0.b32.cont [12/16] %v738, 128
    %1548 = vxpose.xlu0.b32.cont [13/16] %v741, 128
    %1549 = vxpose.xlu0.b32.cont [14/16] %v743, 128
    %1550 = vxpose.xlu0.b32.cont [15/16] %v1492, 128
    %1551 = vxpose.xlu0.b32.end [16/16] %v1494, 128
    %v1552 = vpop.trf.xlu0
    %v1553 = vpop.trf.xlu0
    %v1554 = vpop.trf.xlu0
    %v1555 = vpop.trf.xlu0
    %v1556 = vpop.trf.xlu0
    %v1557 = vpop.trf.xlu0
    %v1558 = vpop.trf.xlu0
    %v1559 = vpop.trf.xlu0
    %v1560 = vpop.trf.xlu0
    %v1561 = vpop.trf.xlu0
    %v1562 = vpop.trf.xlu0
    %v1563 = vpop.trf.xlu0
    %v1564 = vpop.trf.xlu0
    %v1565 = vpop.trf.xlu0
    %v1566 = vpop.trf.xlu0
    %v1567 = vpop.trf.xlu0
    %1568 = vxpose.xlu0.b32.start [1/16] %v746, 128
    %1569 = vxpose.xlu0.b32.cont [2/16] %v748, 128
    %1570 = vxpose.xlu0.b32.cont [3/16] %v751, 128
    %1571 = vxpose.xlu0.b32.cont [4/16] %v753, 128
    %1572 = vxpose.xlu0.b32.cont [5/16] %v756, 128
    %1573 = vxpose.xlu0.b32.cont [6/16] %v758, 128
    %1574 = vxpose.xlu0.b32.cont [7/16] %v761, 128
    %1575 = vxpose.xlu0.b32.cont [8/16] %v763, 128
    %1576 = vxpose.xlu0.b32.cont [9/16] %v766, 128
    %1577 = vxpose.xlu0.b32.cont [10/16] %v768, 128
    %1578 = vxpose.xlu0.b32.cont [11/16] %v771, 128
    %1579 = vxpose.xlu0.b32.cont [12/16] %v773, 128
    %1580 = vxpose.xlu0.b32.cont [13/16] %v776, 128
    %1581 = vxpose.xlu0.b32.cont [14/16] %v778, 128
    %1582 = vxpose.xlu0.b32.cont [15/16] %v781, 128
    %1583 = vxpose.xlu0.b32.end [16/16] %v783, 128
    %v1584 = vpop.trf.xlu0
    %v1585 = vpop.trf.xlu0
    %v1586 = vpop.trf.xlu0
    %v1587 = vpop.trf.xlu0
    %v1588 = vpop.trf.xlu0
    %v1589 = vpop.trf.xlu0
    %v1590 = vpop.trf.xlu0
    %v1591 = vpop.trf.xlu0
    %v1592 = vpop.trf.xlu0
    %v1593 = vpop.trf.xlu0
    %v1594 = vpop.trf.xlu0
    %v1595 = vpop.trf.xlu0
    %v1596 = vpop.trf.xlu0
    %v1597 = vpop.trf.xlu0
    %v1598 = vpop.trf.xlu0
    %v1599 = vpop.trf.xlu0
    %1600 = vxpose.xlu0.b32.start [1/16] %v786, 128
    %1601 = vxpose.xlu0.b32.cont [2/16] %v788, 128
    %1602 = vxpose.xlu0.b32.cont [3/16] %v791, 128
    %1603 = vxpose.xlu0.b32.cont [4/16] %v793, 128
    %1604 = vxpose.xlu0.b32.cont [5/16] %v796, 128
    %1605 = vxpose.xlu0.b32.cont [6/16] %v798, 128
    %1606 = vxpose.xlu0.b32.cont [7/16] %v801, 128
    %1607 = vxpose.xlu0.b32.cont [8/16] %v803, 128
    %1608 = vxpose.xlu0.b32.cont [9/16] %v806, 128
    %1609 = vxpose.xlu0.b32.cont [10/16] %v808, 128
    %1610 = vxpose.xlu0.b32.cont [11/16] %v811, 128
    %1611 = vxpose.xlu0.b32.cont [12/16] %v813, 128
    %1612 = vxpose.xlu0.b32.cont [13/16] %v816, 128
    %1613 = vxpose.xlu0.b32.cont [14/16] %v818, 128
    %1614 = vxpose.xlu0.b32.cont [15/16] %v1497, 128
    %1615 = vxpose.xlu0.b32.end [16/16] %v1499, 128
    %v1616 = vpop.trf.xlu0
    %v1617 = vpop.trf.xlu0
    %v1618 = vpop.trf.xlu0
    %v1619 = vpop.trf.xlu0
    %v1620 = vpop.trf.xlu0
    %v1621 = vpop.trf.xlu0
    %v1622 = vpop.trf.xlu0
    %v1623 = vpop.trf.xlu0
    %v1624 = vpop.trf.xlu0
    %v1625 = vpop.trf.xlu0
    %v1626 = vpop.trf.xlu0
    %v1627 = vpop.trf.xlu0
    %v1628 = vpop.trf.xlu0
    %v1629 = vpop.trf.xlu0
    %v1630 = vpop.trf.xlu0
    %v1631 = vpop.trf.xlu0
    %1632 = vst [vmem:[#allocation2 + $0x80] sm:$0xff] %v1520
    %1633 = vst [vmem:[#allocation2 + $0x88] sm:$0xff] %v1552
    %1634 = vst [vmem:[#allocation2 + $0x90] sm:$0xff] %v1584
    %1635 = vst [vmem:[#allocation2 + $0x98] sm:$0xff] %v1616
    %v1636 = vrot.slane %v427, 2
    %v1637 = vrot.slane %v203, 2
    %v1638 = vsel %vm1011, %v1636, %v1637
    %v1639 = vrot.slane %v459, 2
    %v1640 = vsel %vm1011, %v1637, %v1639
    %v1641 = vrot.slane %v443, 2
    %v1642 = vrot.slane %v251, 2
    %v1643 = vsel %vm1011, %v1641, %v1642
    %v1644 = vrot.slane %v475, 2
    %v1645 = vsel %vm1011, %v1642, %v1644
    %1650 = vxpose.xlu0.b32.start [1/16] %v1014, 128
    %1651 = vxpose.xlu0.b32.cont [2/16] %v1016, 128
    %1652 = vxpose.xlu0.b32.cont [3/16] %v1019, 128
    %1653 = vxpose.xlu0.b32.cont [4/16] %v1021, 128
    %1654 = vxpose.xlu0.b32.cont [5/16] %v1024, 128
    %1655 = vxpose.xlu0.b32.cont [6/16] %v1026, 128
    %1656 = vxpose.xlu0.b32.cont [7/16] %v1029, 128
    %1657 = vxpose.xlu0.b32.cont [8/16] %v1031, 128
    %1658 = vxpose.xlu0.b32.cont [9/16] %v1034, 128
    %1659 = vxpose.xlu0.b32.cont [10/16] %v1036, 128
    %1660 = vxpose.xlu0.b32.cont [11/16] %v1039, 128
    %1661 = vxpose.xlu0.b32.cont [12/16] %v1041, 128
    %1662 = vxpose.xlu0.b32.cont [13/16] %v1044, 128
    %1663 = vxpose.xlu0.b32.cont [14/16] %v1046, 128
    %1664 = vxpose.xlu0.b32.cont [15/16] %v1049, 128
    %1665 = vxpose.xlu0.b32.end [16/16] %v1051, 128
    %v1666 = vpop.trf.xlu0
    %v1667 = vpop.trf.xlu0
    %v1668 = vpop.trf.xlu0
    %v1669 = vpop.trf.xlu0
    %v1670 = vpop.trf.xlu0
    %v1671 = vpop.trf.xlu0
    %v1672 = vpop.trf.xlu0
    %v1673 = vpop.trf.xlu0
    %v1674 = vpop.trf.xlu0
    %v1675 = vpop.trf.xlu0
    %v1676 = vpop.trf.xlu0
    %v1677 = vpop.trf.xlu0
    %v1678 = vpop.trf.xlu0
    %v1679 = vpop.trf.xlu0
    %v1680 = vpop.trf.xlu0
    %v1681 = vpop.trf.xlu0
    %1682 = vxpose.xlu0.b32.start [1/16] %v1054, 128
    %1683 = vxpose.xlu0.b32.cont [2/16] %v1056, 128
    %1684 = vxpose.xlu0.b32.cont [3/16] %v1059, 128
    %1685 = vxpose.xlu0.b32.cont [4/16] %v1061, 128
    %1686 = vxpose.xlu0.b32.cont [5/16] %v1064, 128
    %1687 = vxpose.xlu0.b32.cont [6/16] %v1066, 128
    %1688 = vxpose.xlu0.b32.cont [7/16] %v1069, 128
    %1689 = vxpose.xlu0.b32.cont [8/16] %v1071, 128
    %1690 = vxpose.xlu0.b32.cont [9/16] %v1074, 128
    %1691 = vxpose.xlu0.b32.cont [10/16] %v1076, 128
    %1692 = vxpose.xlu0.b32.cont [11/16] %v1079, 128
    %1693 = vxpose.xlu0.b32.cont [12/16] %v1081, 128
    %1694 = vxpose.xlu0.b32.cont [13/16] %v1084, 128
    %1695 = vxpose.xlu0.b32.cont [14/16] %v1086, 128
    %1696 = vxpose.xlu0.b32.cont [15/16] %v1638, 128
    %1697 = vxpose.xlu0.b32.end [16/16] %v1640, 128
    %v1698 = vpop.trf.xlu0
    %v1699 = vpop.trf.xlu0
    %v1700 = vpop.trf.xlu0
    %v1701 = vpop.trf.xlu0
    %v1702 = vpop.trf.xlu0
    %v1703 = vpop.trf.xlu0
    %v1704 = vpop.trf.xlu0
    %v1705 = vpop.trf.xlu0
    %v1706 = vpop.trf.xlu0
    %v1707 = vpop.trf.xlu0
    %v1708 = vpop.trf.xlu0
    %v1709 = vpop.trf.xlu0
    %v1710 = vpop.trf.xlu0
    %v1711 = vpop.trf.xlu0
    %v1712 = vpop.trf.xlu0
    %v1713 = vpop.trf.xlu0
    %1714 = vxpose.xlu0.b32.start [1/16] %v1089, 128
    %1715 = vxpose.xlu0.b32.cont [2/16] %v1091, 128
    %1716 = vxpose.xlu0.b32.cont [3/16] %v1094, 128
    %1717 = vxpose.xlu0.b32.cont [4/16] %v1096, 128
    %1718 = vxpose.xlu0.b32.cont [5/16] %v1099, 128
    %1719 = vxpose.xlu0.b32.cont [6/16] %v1101, 128
    %1720 = vxpose.xlu0.b32.cont [7/16] %v1104, 128
    %1721 = vxpose.xlu0.b32.cont [8/16] %v1106, 128
    %1722 = vxpose.xlu0.b32.cont [9/16] %v1109, 128
    %1723 = vxpose.xlu0.b32.cont [10/16] %v1111, 128
    %1724 = vxpose.xlu0.b32.cont [11/16] %v1114, 128
    %1725 = vxpose.xlu0.b32.cont [12/16] %v1116, 128
    %1726 = vxpose.xlu0.b32.cont [13/16] %v1119, 128
    %1727 = vxpose.xlu0.b32.cont [14/16] %v1121, 128
    %1728 = vxpose.xlu0.b32.cont [15/16] %v1124, 128
    %1729 = vxpose.xlu0.b32.end [16/16] %v1126, 128
    %v1730 = vpop.trf.xlu0
    %v1731 = vpop.trf.xlu0
    %v1732 = vpop.trf.xlu0
    %v1733 = vpop.trf.xlu0
    %v1734 = vpop.trf.xlu0
    %v1735 = vpop.trf.xlu0
    %v1736 = vpop.trf.xlu0
    %v1737 = vpop.trf.xlu0
    %v1738 = vpop.trf.xlu0
    %v1739 = vpop.trf.xlu0
    %v1740 = vpop.trf.xlu0
    %v1741 = vpop.trf.xlu0
    %v1742 = vpop.trf.xlu0
    %v1743 = vpop.trf.xlu0
    %v1744 = vpop.trf.xlu0
    %v1745 = vpop.trf.xlu0
    %1746 = vxpose.xlu0.b32.start [1/16] %v1129, 128
    %1747 = vxpose.xlu0.b32.cont [2/16] %v1131, 128
    %1748 = vxpose.xlu0.b32.cont [3/16] %v1134, 128
    %1749 = vxpose.xlu0.b32.cont [4/16] %v1136, 128
    %1750 = vxpose.xlu0.b32.cont [5/16] %v1139, 128
    %1751 = vxpose.xlu0.b32.cont [6/16] %v1141, 128
    %1752 = vxpose.xlu0.b32.cont [7/16] %v1144, 128
    %1753 = vxpose.xlu0.b32.cont [8/16] %v1146, 128
    %1754 = vxpose.xlu0.b32.cont [9/16] %v1149, 128
    %1755 = vxpose.xlu0.b32.cont [10/16] %v1151, 128
    %1756 = vxpose.xlu0.b32.cont [11/16] %v1154, 128
    %1757 = vxpose.xlu0.b32.cont [12/16] %v1156, 128
    %1758 = vxpose.xlu0.b32.cont [13/16] %v1159, 128
    %1759 = vxpose.xlu0.b32.cont [14/16] %v1161, 128
    %1760 = vxpose.xlu0.b32.cont [15/16] %v1643, 128
    %1761 = vxpose.xlu0.b32.end [16/16] %v1645, 128
    %v1762 = vpop.trf.xlu0
    %v1763 = vpop.trf.xlu0
    %v1764 = vpop.trf.xlu0
    %v1765 = vpop.trf.xlu0
    %v1766 = vpop.trf.xlu0
    %v1767 = vpop.trf.xlu0
    %v1768 = vpop.trf.xlu0
    %v1769 = vpop.trf.xlu0
    %v1770 = vpop.trf.xlu0
    %v1771 = vpop.trf.xlu0
    %v1772 = vpop.trf.xlu0
    %v1773 = vpop.trf.xlu0
    %v1774 = vpop.trf.xlu0
    %v1775 = vpop.trf.xlu0
    %v1776 = vpop.trf.xlu0
    %v1777 = vpop.trf.xlu0
    %1778 = vst [vmem:[#allocation2 + $0xa0] sm:$0xff] %v1666
    %1779 = vst [vmem:[#allocation2 + $0xa8] sm:$0xff] %v1698
    %1780 = vst [vmem:[#allocation2 + $0xb0] sm:$0xff] %v1730
    %1781 = vst [vmem:[#allocation2 + $0xb8] sm:$0xff] %v1762
    %1782 = vxpose.xlu0.b32.start [1/16] %v413, 128
    %1783 = vxpose.xlu0.b32.cont [2/16] %v161, 128
    %1784 = vxpose.xlu0.b32.cont [3/16] %v414, 128
    %1785 = vxpose.xlu0.b32.cont [4/16] %v164, 128
    %1786 = vxpose.xlu0.b32.cont [5/16] %v415, 128
    %1787 = vxpose.xlu0.b32.cont [6/16] %v167, 128
    %1788 = vxpose.xlu0.b32.cont [7/16] %v416, 128
    %1789 = vxpose.xlu0.b32.cont [8/16] %v170, 128
    %1790 = vxpose.xlu0.b32.cont [9/16] %v417, 128
    %1791 = vxpose.xlu0.b32.cont [10/16] %v173, 128
    %1792 = vxpose.xlu0.b32.cont [11/16] %v418, 128
    %1793 = vxpose.xlu0.b32.cont [12/16] %v176, 128
    %1794 = vxpose.xlu0.b32.cont [13/16] %v419, 128
    %1795 = vxpose.xlu0.b32.cont [14/16] %v179, 128
    %1796 = vxpose.xlu0.b32.cont [15/16] %v420, 128
    %1797 = vxpose.xlu0.b32.end [16/16] %v182, 128
    %v1798 = vpop.trf.xlu0
    %v1799 = vpop.trf.xlu0
    %v1800 = vpop.trf.xlu0
    %v1801 = vpop.trf.xlu0
    %v1802 = vpop.trf.xlu0
    %v1803 = vpop.trf.xlu0
    %v1804 = vpop.trf.xlu0
    %v1805 = vpop.trf.xlu0
    %v1806 = vpop.trf.xlu0
    %v1807 = vpop.trf.xlu0
    %v1808 = vpop.trf.xlu0
    %v1809 = vpop.trf.xlu0
    %v1810 = vpop.trf.xlu0
    %v1811 = vpop.trf.xlu0
    %v1812 = vpop.trf.xlu0
    %v1813 = vpop.trf.xlu0
    %1814 = vxpose.xlu0.b32.start [1/16] %v421, 128
    %1815 = vxpose.xlu0.b32.cont [2/16] %v185, 128
    %1816 = vxpose.xlu0.b32.cont [3/16] %v422, 128
    %1817 = vxpose.xlu0.b32.cont [4/16] %v188, 128
    %1818 = vxpose.xlu0.b32.cont [5/16] %v423, 128
    %1819 = vxpose.xlu0.b32.cont [6/16] %v191, 128
    %1820 = vxpose.xlu0.b32.cont [7/16] %v424, 128
    %1821 = vxpose.xlu0.b32.cont [8/16] %v194, 128
    %1822 = vxpose.xlu0.b32.cont [9/16] %v425, 128
    %1823 = vxpose.xlu0.b32.cont [10/16] %v197, 128
    %1824 = vxpose.xlu0.b32.cont [11/16] %v426, 128
    %1825 = vxpose.xlu0.b32.cont [12/16] %v200, 128
    %1826 = vxpose.xlu0.b32.cont [13/16] %v427, 128
    %1827 = vxpose.xlu0.b32.cont [14/16] %v203, 128
    %1828 = vxpose.xlu0.b32.cont [15/16] %v427, 128
    %1829 = vxpose.xlu0.b32.end [16/16] %v203, 128
    %v1830 = vpop.trf.xlu0
    %v1831 = vpop.trf.xlu0
    %v1832 = vpop.trf.xlu0
    %v1833 = vpop.trf.xlu0
    %v1834 = vpop.trf.xlu0
    %v1835 = vpop.trf.xlu0
    %v1836 = vpop.trf.xlu0
    %v1837 = vpop.trf.xlu0
    %v1838 = vpop.trf.xlu0
    %v1839 = vpop.trf.xlu0
    %v1840 = vpop.trf.xlu0
    %v1841 = vpop.trf.xlu0
    %v1842 = vpop.trf.xlu0
    %v1843 = vpop.trf.xlu0
    %v1844 = vpop.trf.xlu0
    %v1845 = vpop.trf.xlu0
    %1846 = vxpose.xlu0.b32.start [1/16] %v429, 128
    %1847 = vxpose.xlu0.b32.cont [2/16] %v209, 128
    %1848 = vxpose.xlu0.b32.cont [3/16] %v430, 128
    %1849 = vxpose.xlu0.b32.cont [4/16] %v212, 128
    %1850 = vxpose.xlu0.b32.cont [5/16] %v431, 128
    %1851 = vxpose.xlu0.b32.cont [6/16] %v215, 128
    %1852 = vxpose.xlu0.b32.cont [7/16] %v432, 128
    %1853 = vxpose.xlu0.b32.cont [8/16] %v218, 128
    %1854 = vxpose.xlu0.b32.cont [9/16] %v433, 128
    %1855 = vxpose.xlu0.b32.cont [10/16] %v221, 128
    %1856 = vxpose.xlu0.b32.cont [11/16] %v434, 128
    %1857 = vxpose.xlu0.b32.cont [12/16] %v224, 128
    %1858 = vxpose.xlu0.b32.cont [13/16] %v435, 128
    %1859 = vxpose.xlu0.b32.cont [14/16] %v227, 128
    %1860 = vxpose.xlu0.b32.cont [15/16] %v436, 128
    %1861 = vxpose.xlu0.b32.end [16/16] %v230, 128
    %v1862 = vpop.trf.xlu0
    %v1863 = vpop.trf.xlu0
    %v1864 = vpop.trf.xlu0
    %v1865 = vpop.trf.xlu0
    %v1866 = vpop.trf.xlu0
    %v1867 = vpop.trf.xlu0
    %v1868 = vpop.trf.xlu0
    %v1869 = vpop.trf.xlu0
    %v1870 = vpop.trf.xlu0
    %v1871 = vpop.trf.xlu0
    %v1872 = vpop.trf.xlu0
    %v1873 = vpop.trf.xlu0
    %v1874 = vpop.trf.xlu0
    %v1875 = vpop.trf.xlu0
    %v1876 = vpop.trf.xlu0
    %v1877 = vpop.trf.xlu0
    %1878 = vxpose.xlu0.b32.start [1/16] %v437, 128
    %1879 = vxpose.xlu0.b32.cont [2/16] %v233, 128
    %1880 = vxpose.xlu0.b32.cont [3/16] %v438, 128
    %1881 = vxpose.xlu0.b32.cont [4/16] %v236, 128
    %1882 = vxpose.xlu0.b32.cont [5/16] %v439, 128
    %1883 = vxpose.xlu0.b32.cont [6/16] %v239, 128
    %1884 = vxpose.xlu0.b32.cont [7/16] %v440, 128
    %1885 = vxpose.xlu0.b32.cont [8/16] %v242, 128
    %1886 = vxpose.xlu0.b32.cont [9/16] %v441, 128
    %1887 = vxpose.xlu0.b32.cont [10/16] %v245, 128
    %1888 = vxpose.xlu0.b32.cont [11/16] %v442, 128
    %1889 = vxpose.xlu0.b32.cont [12/16] %v248, 128
    %1890 = vxpose.xlu0.b32.cont [13/16] %v443, 128
    %1891 = vxpose.xlu0.b32.cont [14/16] %v251, 128
    %1892 = vxpose.xlu0.b32.cont [15/16] %v443, 128
    %1893 = vxpose.xlu0.b32.end [16/16] %v251, 128
    %v1894 = vpop.trf.xlu0
    %v1895 = vpop.trf.xlu0
    %v1896 = vpop.trf.xlu0
    %v1897 = vpop.trf.xlu0
    %v1898 = vpop.trf.xlu0
    %v1899 = vpop.trf.xlu0
    %v1900 = vpop.trf.xlu0
    %v1901 = vpop.trf.xlu0
    %v1902 = vpop.trf.xlu0
    %v1903 = vpop.trf.xlu0
    %v1904 = vpop.trf.xlu0
    %v1905 = vpop.trf.xlu0
    %v1906 = vpop.trf.xlu0
    %v1907 = vpop.trf.xlu0
    %v1908 = vpop.trf.xlu0
    %v1909 = vpop.trf.xlu0
    %1910 = vst [vmem:[#allocation2 + $0xc0] sm:$0xff] %v1798
    %1911 = vst [vmem:[#allocation2 + $0xc8] sm:$0xff] %v1830
    %1912 = vst [vmem:[#allocation2 + $0xd0] sm:$0xff] %v1862
    %1913 = vst [vmem:[#allocation2 + $0xd8] sm:$0xff] %v1894
    %1914 = vxpose.xlu0.b32.start [1/16] %v676, 128
    %1915 = vxpose.xlu0.b32.cont [2/16] %v678, 128
    %1916 = vxpose.xlu0.b32.cont [3/16] %v681, 128
    %1917 = vxpose.xlu0.b32.cont [4/16] %v683, 128
    %1918 = vxpose.xlu0.b32.cont [5/16] %v686, 128
    %1919 = vxpose.xlu0.b32.cont [6/16] %v688, 128
    %1920 = vxpose.xlu0.b32.cont [7/16] %v691, 128
    %1921 = vxpose.xlu0.b32.cont [8/16] %v693, 128
    %1922 = vxpose.xlu0.b32.cont [9/16] %v696, 128
    %1923 = vxpose.xlu0.b32.cont [10/16] %v698, 128
    %1924 = vxpose.xlu0.b32.cont [11/16] %v701, 128
    %1925 = vxpose.xlu0.b32.cont [12/16] %v703, 128
    %1926 = vxpose.xlu0.b32.cont [13/16] %v706, 128
    %1927 = vxpose.xlu0.b32.cont [14/16] %v708, 128
    %1928 = vxpose.xlu0.b32.cont [15/16] %v711, 128
    %1929 = vxpose.xlu0.b32.end [16/16] %v713, 128
    %v1930 = vpop.trf.xlu0
    %v1931 = vpop.trf.xlu0
    %v1932 = vpop.trf.xlu0
    %v1933 = vpop.trf.xlu0
    %v1934 = vpop.trf.xlu0
    %v1935 = vpop.trf.xlu0
    %v1936 = vpop.trf.xlu0
    %v1937 = vpop.trf.xlu0
    %v1938 = vpop.trf.xlu0
    %v1939 = vpop.trf.xlu0
    %v1940 = vpop.trf.xlu0
    %v1941 = vpop.trf.xlu0
    %v1942 = vpop.trf.xlu0
    %v1943 = vpop.trf.xlu0
    %v1944 = vpop.trf.xlu0
    %v1945 = vpop.trf.xlu0
    %1946 = vxpose.xlu0.b32.start [1/16] %v716, 128
    %1947 = vxpose.xlu0.b32.cont [2/16] %v718, 128
    %1948 = vxpose.xlu0.b32.cont [3/16] %v721, 128
    %1949 = vxpose.xlu0.b32.cont [4/16] %v723, 128
    %1950 = vxpose.xlu0.b32.cont [5/16] %v726, 128
    %1951 = vxpose.xlu0.b32.cont [6/16] %v728, 128
    %1952 = vxpose.xlu0.b32.cont [7/16] %v731, 128
    %1953 = vxpose.xlu0.b32.cont [8/16] %v733, 128
    %1954 = vxpose.xlu0.b32.cont [9/16] %v736, 128
    %1955 = vxpose.xlu0.b32.cont [10/16] %v738, 128
    %1956 = vxpose.xlu0.b32.cont [11/16] %v741, 128
    %1957 = vxpose.xlu0.b32.cont [12/16] %v743, 128
    %1958 = vxpose.xlu0.b32.cont [13/16] %v1492, 128
    %1959 = vxpose.xlu0.b32.cont [14/16] %v1494, 128
    %1960 = vxpose.xlu0.b32.cont [15/16] %v1492, 128
    %1961 = vxpose.xlu0.b32.end [16/16] %v1494, 128
    %v1962 = vpop.trf.xlu0
    %v1963 = vpop.trf.xlu0
    %v1964 = vpop.trf.xlu0
    %v1965 = vpop.trf.xlu0
    %v1966 = vpop.trf.xlu0
    %v1967 = vpop.trf.xlu0
    %v1968 = vpop.trf.xlu0
    %v1969 = vpop.trf.xlu0
    %v1970 = vpop.trf.xlu0
    %v1971 = vpop.trf.xlu0
    %v1972 = vpop.trf.xlu0
    %v1973 = vpop.trf.xlu0
    %v1974 = vpop.trf.xlu0
    %v1975 = vpop.trf.xlu0
    %v1976 = vpop.trf.xlu0
    %v1977 = vpop.trf.xlu0
    %1978 = vxpose.xlu0.b32.start [1/16] %v751, 128
    %1979 = vxpose.xlu0.b32.cont [2/16] %v753, 128
    %1980 = vxpose.xlu0.b32.cont [3/16] %v756, 128
    %1981 = vxpose.xlu0.b32.cont [4/16] %v758, 128
    %1982 = vxpose.xlu0.b32.cont [5/16] %v761, 128
    %1983 = vxpose.xlu0.b32.cont [6/16] %v763, 128
    %1984 = vxpose.xlu0.b32.cont [7/16] %v766, 128
    %1985 = vxpose.xlu0.b32.cont [8/16] %v768, 128
    %1986 = vxpose.xlu0.b32.cont [9/16] %v771, 128
    %1987 = vxpose.xlu0.b32.cont [10/16] %v773, 128
    %1988 = vxpose.xlu0.b32.cont [11/16] %v776, 128
    %1989 = vxpose.xlu0.b32.cont [12/16] %v778, 128
    %1990 = vxpose.xlu0.b32.cont [13/16] %v781, 128
    %1991 = vxpose.xlu0.b32.cont [14/16] %v783, 128
    %1992 = vxpose.xlu0.b32.cont [15/16] %v786, 128
    %1993 = vxpose.xlu0.b32.end [16/16] %v788, 128
    %v1994 = vpop.trf.xlu0
    %v1995 = vpop.trf.xlu0
    %v1996 = vpop.trf.xlu0
    %v1997 = vpop.trf.xlu0
    %v1998 = vpop.trf.xlu0
    %v1999 = vpop.trf.xlu0
    %v2000 = vpop.trf.xlu0
    %v2001 = vpop.trf.xlu0
    %v2002 = vpop.trf.xlu0
    %v2003 = vpop.trf.xlu0
    %v2004 = vpop.trf.xlu0
    %v2005 = vpop.trf.xlu0
    %v2006 = vpop.trf.xlu0
    %v2007 = vpop.trf.xlu0
    %v2008 = vpop.trf.xlu0
    %v2009 = vpop.trf.xlu0
    %2010 = vxpose.xlu0.b32.start [1/16] %v791, 128
    %2011 = vxpose.xlu0.b32.cont [2/16] %v793, 128
    %2012 = vxpose.xlu0.b32.cont [3/16] %v796, 128
    %2013 = vxpose.xlu0.b32.cont [4/16] %v798, 128
    %2014 = vxpose.xlu0.b32.cont [5/16] %v801, 128
    %2015 = vxpose.xlu0.b32.cont [6/16] %v803, 128
    %2016 = vxpose.xlu0.b32.cont [7/16] %v806, 128
    %2017 = vxpose.xlu0.b32.cont [8/16] %v808, 128
    %2018 = vxpose.xlu0.b32.cont [9/16] %v811, 128
    %2019 = vxpose.xlu0.b32.cont [10/16] %v813, 128
    %2020 = vxpose.xlu0.b32.cont [11/16] %v816, 128
    %2021 = vxpose.xlu0.b32.cont [12/16] %v818, 128
    %2022 = vxpose.xlu0.b32.cont [13/16] %v1497, 128
    %2023 = vxpose.xlu0.b32.cont [14/16] %v1499, 128
    %2024 = vxpose.xlu0.b32.cont [15/16] %v1497, 128
    %2025 = vxpose.xlu0.b32.end [16/16] %v1499, 128
    %v2026 = vpop.trf.xlu0
    %v2027 = vpop.trf.xlu0
    %v2028 = vpop.trf.xlu0
    %v2029 = vpop.trf.xlu0
    %v2030 = vpop.trf.xlu0
    %v2031 = vpop.trf.xlu0
    %v2032 = vpop.trf.xlu0
    %v2033 = vpop.trf.xlu0
    %v2034 = vpop.trf.xlu0
    %v2035 = vpop.trf.xlu0
    %v2036 = vpop.trf.xlu0
    %v2037 = vpop.trf.xlu0
    %v2038 = vpop.trf.xlu0
    %v2039 = vpop.trf.xlu0
    %v2040 = vpop.trf.xlu0
    %v2041 = vpop.trf.xlu0
    %2042 = vst [vmem:[#allocation2 + $0xe0] sm:$0xff] %v1930
    %2043 = vst [vmem:[#allocation2 + $0xe8] sm:$0xff] %v1962
    %2044 = vst [vmem:[#allocation2 + $0xf0] sm:$0xff] %v1994
    %2045 = vst [vmem:[#allocation2 + $0xf8] sm:$0xff] %v2026
    %2046 = vxpose.xlu0.b32.start [1/16] %v1019, 128
    %2047 = vxpose.xlu0.b32.cont [2/16] %v1021, 128
    %2048 = vxpose.xlu0.b32.cont [3/16] %v1024, 128
    %2049 = vxpose.xlu0.b32.cont [4/16] %v1026, 128
    %2050 = vxpose.xlu0.b32.cont [5/16] %v1029, 128
    %2051 = vxpose.xlu0.b32.cont [6/16] %v1031, 128
    %2052 = vxpose.xlu0.b32.cont [7/16] %v1034, 128
    %2053 = vxpose.xlu0.b32.cont [8/16] %v1036, 128
    %2054 = vxpose.xlu0.b32.cont [9/16] %v1039, 128
    %2055 = vxpose.xlu0.b32.cont [10/16] %v1041, 128
    %2056 = vxpose.xlu0.b32.cont [11/16] %v1044, 128
    %2057 = vxpose.xlu0.b32.cont [12/16] %v1046, 128
    %2058 = vxpose.xlu0.b32.cont [13/16] %v1049, 128
    %2059 = vxpose.xlu0.b32.cont [14/16] %v1051, 128
    %2060 = vxpose.xlu0.b32.cont [15/16] %v1054, 128
    %2061 = vxpose.xlu0.b32.end [16/16] %v1056, 128
    %v2062 = vpop.trf.xlu0
    %v2063 = vpop.trf.xlu0
    %v2064 = vpop.trf.xlu0
    %v2065 = vpop.trf.xlu0
    %v2066 = vpop.trf.xlu0
    %v2067 = vpop.trf.xlu0
    %v2068 = vpop.trf.xlu0
    %v2069 = vpop.trf.xlu0
    %v2070 = vpop.trf.xlu0
    %v2071 = vpop.trf.xlu0
    %v2072 = vpop.trf.xlu0
    %v2073 = vpop.trf.xlu0
    %v2074 = vpop.trf.xlu0
    %v2075 = vpop.trf.xlu0
    %v2076 = vpop.trf.xlu0
    %v2077 = vpop.trf.xlu0
    %2078 = vxpose.xlu0.b32.start [1/16] %v1059, 128
    %2079 = vxpose.xlu0.b32.cont [2/16] %v1061, 128
    %2080 = vxpose.xlu0.b32.cont [3/16] %v1064, 128
    %2081 = vxpose.xlu0.b32.cont [4/16] %v1066, 128
    %2082 = vxpose.xlu0.b32.cont [5/16] %v1069, 128
    %2083 = vxpose.xlu0.b32.cont [6/16] %v1071, 128
    %2084 = vxpose.xlu0.b32.cont [7/16] %v1074, 128
    %2085 = vxpose.xlu0.b32.cont [8/16] %v1076, 128
    %2086 = vxpose.xlu0.b32.cont [9/16] %v1079, 128
    %2087 = vxpose.xlu0.b32.cont [10/16] %v1081, 128
    %2088 = vxpose.xlu0.b32.cont [11/16] %v1084, 128
    %2089 = vxpose.xlu0.b32.cont [12/16] %v1086, 128
    %2090 = vxpose.xlu0.b32.cont [13/16] %v1638, 128
    %2091 = vxpose.xlu0.b32.cont [14/16] %v1640, 128
    %2092 = vxpose.xlu0.b32.cont [15/16] %v1638, 128
    %2093 = vxpose.xlu0.b32.end [16/16] %v1640, 128
    %v2094 = vpop.trf.xlu0
    %v2095 = vpop.trf.xlu0
    %v2096 = vpop.trf.xlu0
    %v2097 = vpop.trf.xlu0
    %v2098 = vpop.trf.xlu0
    %v2099 = vpop.trf.xlu0
    %v2100 = vpop.trf.xlu0
    %v2101 = vpop.trf.xlu0
    %v2102 = vpop.trf.xlu0
    %v2103 = vpop.trf.xlu0
    %v2104 = vpop.trf.xlu0
    %v2105 = vpop.trf.xlu0
    %v2106 = vpop.trf.xlu0
    %v2107 = vpop.trf.xlu0
    %v2108 = vpop.trf.xlu0
    %v2109 = vpop.trf.xlu0
    %2110 = vxpose.xlu0.b32.start [1/16] %v1094, 128
    %2111 = vxpose.xlu0.b32.cont [2/16] %v1096, 128
    %2112 = vxpose.xlu0.b32.cont [3/16] %v1099, 128
    %2113 = vxpose.xlu0.b32.cont [4/16] %v1101, 128
    %2114 = vxpose.xlu0.b32.cont [5/16] %v1104, 128
    %2115 = vxpose.xlu0.b32.cont [6/16] %v1106, 128
    %2116 = vxpose.xlu0.b32.cont [7/16] %v1109, 128
    %2117 = vxpose.xlu0.b32.cont [8/16] %v1111, 128
    %2118 = vxpose.xlu0.b32.cont [9/16] %v1114, 128
    %2119 = vxpose.xlu0.b32.cont [10/16] %v1116, 128
    %2120 = vxpose.xlu0.b32.cont [11/16] %v1119, 128
    %2121 = vxpose.xlu0.b32.cont [12/16] %v1121, 128
    %2122 = vxpose.xlu0.b32.cont [13/16] %v1124, 128
    %2123 = vxpose.xlu0.b32.cont [14/16] %v1126, 128
    %2124 = vxpose.xlu0.b32.cont [15/16] %v1129, 128
    %2125 = vxpose.xlu0.b32.end [16/16] %v1131, 128
    %v2126 = vpop.trf.xlu0
    %v2127 = vpop.trf.xlu0
    %v2128 = vpop.trf.xlu0
    %v2129 = vpop.trf.xlu0
    %v2130 = vpop.trf.xlu0
    %v2131 = vpop.trf.xlu0
    %v2132 = vpop.trf.xlu0
    %v2133 = vpop.trf.xlu0
    %v2134 = vpop.trf.xlu0
    %v2135 = vpop.trf.xlu0
    %v2136 = vpop.trf.xlu0
    %v2137 = vpop.trf.xlu0
    %v2138 = vpop.trf.xlu0
    %v2139 = vpop.trf.xlu0
    %v2140 = vpop.trf.xlu0
    %v2141 = vpop.trf.xlu0
    %2142 = vxpose.xlu0.b32.start [1/16] %v1134, 128
    %2143 = vxpose.xlu0.b32.cont [2/16] %v1136, 128
    %2144 = vxpose.xlu0.b32.cont [3/16] %v1139, 128
    %2145 = vxpose.xlu0.b32.cont [4/16] %v1141, 128
    %2146 = vxpose.xlu0.b32.cont [5/16] %v1144, 128
    %2147 = vxpose.xlu0.b32.cont [6/16] %v1146, 128
    %2148 = vxpose.xlu0.b32.cont [7/16] %v1149, 128
    %2149 = vxpose.xlu0.b32.cont [8/16] %v1151, 128
    %2150 = vxpose.xlu0.b32.cont [9/16] %v1154, 128
    %2151 = vxpose.xlu0.b32.cont [10/16] %v1156, 128
    %2152 = vxpose.xlu0.b32.cont [11/16] %v1159, 128
    %2153 = vxpose.xlu0.b32.cont [12/16] %v1161, 128
    %2154 = vxpose.xlu0.b32.cont [13/16] %v1643, 128
    %2155 = vxpose.xlu0.b32.cont [14/16] %v1645, 128
    %2156 = vxpose.xlu0.b32.cont [15/16] %v1643, 128
    %2157 = vxpose.xlu0.b32.end [16/16] %v1645, 128
    %v2158 = vpop.trf.xlu0
    %v2159 = vpop.trf.xlu0
    %v2160 = vpop.trf.xlu0
    %v2161 = vpop.trf.xlu0
    %v2162 = vpop.trf.xlu0
    %v2163 = vpop.trf.xlu0
    %v2164 = vpop.trf.xlu0
    %v2165 = vpop.trf.xlu0
    %v2166 = vpop.trf.xlu0
    %v2167 = vpop.trf.xlu0
    %v2168 = vpop.trf.xlu0
    %v2169 = vpop.trf.xlu0
    %v2170 = vpop.trf.xlu0
    %v2171 = vpop.trf.xlu0
    %v2172 = vpop.trf.xlu0
    %v2173 = vpop.trf.xlu0
    %2174 = vst [vmem:[#allocation2 + $0x100] sm:$0xff] %v2062
    %2175 = vst [vmem:[#allocation2 + $0x108] sm:$0xff] %v2094
    %2176 = vst [vmem:[#allocation2 + $0x110] sm:$0xff] %v2126
    %2177 = vst [vmem:[#allocation2 + $0x118] sm:$0xff] %v2158
    %v2178 = vld [vmem:[%s1] sm:$0xff]
    %v2179 = vld [vmem:[#allocation2] sm:$0xff]
    %v2180 = vld [vmem:[#allocation2 + $0x8] sm:$0xff]
    %v2181 = vld [vmem:[#allocation2 + $0x10] sm:$0xff]
    %v2182 = vld [vmem:[#allocation2 + $0x18] sm:$0xff]
    %v2183 = vld [vmem:[#allocation2 + $0x20] sm:$0xff]
    %v2184 = vld [vmem:[#allocation2 + $0x28] sm:$0xff]
    %v2185 = vld [vmem:[#allocation2 + $0x30] sm:$0xff]
    %v2186 = vld [vmem:[#allocation2 + $0x38] sm:$0xff]
    %v2187 = vld [vmem:[#allocation2 + $0x40] sm:$0xff]
    %v2188 = vld [vmem:[#allocation2 + $0x48] sm:$0xff]
    %v2189 = vld [vmem:[#allocation2 + $0x50] sm:$0xff]
    %v2190 = vld [vmem:[#allocation2 + $0x58] sm:$0xff]
    %v2191 = vld [vmem:[#allocation2 + $0x60] sm:$0xff]
    %v2192 = vld [vmem:[#allocation2 + $0x68] sm:$0xff]
    %v2193 = vld [vmem:[#allocation2 + $0x70] sm:$0xff]
    %v2194 = vld [vmem:[#allocation2 + $0x78] sm:$0xff]
    %v2195 = vld [vmem:[#allocation2 + $0x80] sm:$0xff]
    %v2196 = vld [vmem:[#allocation2 + $0x88] sm:$0xff]
    %v2197 = vld [vmem:[#allocation2 + $0x90] sm:$0xff]
    %v2198 = vld [vmem:[#allocation2 + $0x98] sm:$0xff]
    %v2199 = vld [vmem:[#allocation2 + $0xa0] sm:$0xff]
    %v2200 = vld [vmem:[#allocation2 + $0xa8] sm:$0xff]
    %v2201 = vld [vmem:[#allocation2 + $0xb0] sm:$0xff]
    %v2202 = vld [vmem:[#allocation2 + $0xb8] sm:$0xff]
    %v2203 = vld [vmem:[#allocation2 + $0xc0] sm:$0xff]
    %v2204 = vld [vmem:[#allocation2 + $0xc8] sm:$0xff]
    %v2205 = vld [vmem:[#allocation2 + $0xd0] sm:$0xff]
    %v2206 = vld [vmem:[#allocation2 + $0xd8] sm:$0xff]
    %v2207 = vld [vmem:[#allocation2 + $0xe0] sm:$0xff]
    %v2208 = vld [vmem:[#allocation2 + $0xe8] sm:$0xff]
    %v2209 = vld [vmem:[#allocation2 + $0xf0] sm:$0xff]
    %v2210 = vld [vmem:[#allocation2 + $0xf8] sm:$0xff]
    %v2211 = vld [vmem:[#allocation2 + $0x100] sm:$0xff]
    %v2212 = vld [vmem:[#allocation2 + $0x108] sm:$0xff]
    %v2213 = vld [vmem:[#allocation2 + $0x110] sm:$0xff]
    %v2214 = vld [vmem:[#allocation2 + $0x118] sm:$0xff]
    %vm2215 = vcmask 588800
    %v2217 = vsel %vm2215, %v2178, 0
    %2219 = vmatprep.subr.mxu0 %v2180
    %2220 = vmatpush1.msra.mxu0 %v2179
    %2221 = vmatprep.subr.mxu0 %v2184
    %2222 = vmatpush1.msra.mxu0 %v2183
    %2223 = vmatprep.subr.mxu0 %v2188
    %2224 = vmatpush1.msra.mxu0 %v2187
    %2225 = vmatprep.subr.mxu0 %v2192
    %2226 = vmatpush1.msra.mxu0 %v2191
    %2227 = vmatprep.subr.mxu0 %v2196
    %2228 = vmatpush1.msra.mxu0 %v2195
    %2229 = vmatprep.subr.mxu0 %v2200
    %2230 = vmatpush1.msra.mxu0 %v2199
    %2231 = vmatprep.subr.mxu0 %v2204
    %2232 = vmatpush1.msra.mxu0 %v2203
    %2233 = vmatprep.subr.mxu0 %v2208
    %2234 = vmatpush1.msra.mxu0 %v2207
    %2235 = vmatprep.subr.mxu0 %v2212
    %2236 = vmatpush1.msra.mxu0 %v2211
    %2237 = vmatprep.subr.mxu0 0.0
    %2238 = vmatpush1.msra.mxu0 0.0
    %2239 = vmatprep.subr.mxu0 0.0
    %2240 = vmatpush1.msra.mxu0 0.0
    %2241 = vmatprep.subr.mxu0 0.0
    %2242 = vmatpush1.msra.mxu0 0.0
    %2243 = vmatprep.subr.mxu0 0.0
    %2244 = vmatpush1.msra.mxu0 0.0
    %2245 = vmatprep.subr.mxu0 0.0
    %2246 = vmatpush1.msra.mxu0 0.0
    %2247 = vmatprep.subr.mxu0 0.0
    %2248 = vmatpush1.msra.mxu0 0.0
    %2249 = vmatprep.subr.mxu0 0.0
    %2250 = vmatpush1.msra.mxu0 0.0
    %2251 = vmatprep.subr.mxu0 0.0
    %2252 = vmatpush1.msra.mxu0 0.0
    %2253 = vmatprep.subr.mxu0 0.0
    %2254 = vmatpush1.msra.mxu0 0.0
    %2255 = vmatprep.subr.mxu0 0.0
    %2256 = vmatpush1.msra.mxu0 0.0
    %2257 = vmatprep.subr.mxu0 0.0
    %2258 = vmatpush1.msra.mxu0 0.0
    %2259 = vmatprep.subr.mxu0 0.0
    %2260 = vmatpush1.msra.mxu0 0.0
    %2261 = vmatprep.subr.mxu0 0.0
    %2262 = vmatpush1.msra.mxu0 0.0
    %2263 = vmatprep.subr.mxu0 0.0
    %2264 = vmatpush1.msra.mxu0 0.0
    %2265 = vmatprep.subr.mxu0 0.0
    %2266 = vmatpush1.msra.mxu0 0.0
    %2267 = vmatprep.subr.mxu0 0.0
    %2268 = vmatpush1.msra.mxu0 0.0
    %2269 = vmatprep.subr.mxu0 0.0
    %2270 = vmatpush1.msra.mxu0 0.0
    %2271 = vmatprep.subr.mxu0 0.0
    %2272 = vmatpush1.msra.mxu0 0.0
    %2273 = vmatprep.subr.mxu0 0.0
    %2274 = vmatpush1.msra.mxu0 0.0
    %2275 = vmatprep.subr.mxu0 0.0
    %2276 = vmatpush1.msra.mxu0 0.0
    %2277 = vmatprep.subr.mxu0 0.0
    %2278 = vmatpush1.msra.mxu0 0.0
    %2279 = vmatprep.subr.mxu0 0.0
    %2280 = vmatpush1.msra.mxu0 0.0
    %2281 = vmatprep.subr.mxu0 0.0
    %2282 = vmatpush1.msra.mxu0 0.0
    %2283 = vmatprep.mubr.f32.mxu0 0.0
    %2284 = vmatmul.mubr.f32.gmra.mrb[0].mxu0 %v2217
    %v2285 = vpop.f32.mrb[0].mxu0
    %v2286 = vadd.f32 0.0, %v2285
    %v2287 = vpop.f32.mrb[0].mxu0
    %v2288 = vadd.f32 0.0, %v2287
    %2289 = vdwg.mxu0
    %2290 = vmatprep.subr.mxu0 %v2182
    %2291 = vmatpush1.msra.mxu0 %v2181
    %2292 = vmatprep.subr.mxu0 %v2186
    %2293 = vmatpush1.msra.mxu0 %v2185
    %2294 = vmatprep.subr.mxu0 %v2190
    %2295 = vmatpush1.msra.mxu0 %v2189
    %2296 = vmatprep.subr.mxu0 %v2194
    %2297 = vmatpush1.msra.mxu0 %v2193
    %2298 = vmatprep.subr.mxu0 %v2198
    %2299 = vmatpush1.msra.mxu0 %v2197
    %2300 = vmatprep.subr.mxu0 %v2202
    %2301 = vmatpush1.msra.mxu0 %v2201
    %2302 = vmatprep.subr.mxu0 %v2206
    %2303 = vmatpush1.msra.mxu0 %v2205
    %2304 = vmatprep.subr.mxu0 %v2210
    %2305 = vmatpush1.msra.mxu0 %v2209
    %2306 = vmatprep.subr.mxu0 %v2214
    %2307 = vmatpush1.msra.mxu0 %v2213
    %2308 = vmatprep.subr.mxu0 0.0
    %2309 = vmatpush1.msra.mxu0 0.0
    %2310 = vmatprep.subr.mxu0 0.0
    %2311 = vmatpush1.msra.mxu0 0.0
    %2312 = vmatprep.subr.mxu0 0.0
    %2313 = vmatpush1.msra.mxu0 0.0
    %2314 = vmatprep.subr.mxu0 0.0
    %2315 = vmatpush1.msra.mxu0 0.0
    %2316 = vmatprep.subr.mxu0 0.0
    %2317 = vmatpush1.msra.mxu0 0.0
    %2318 = vmatprep.subr.mxu0 0.0
    %2319 = vmatpush1.msra.mxu0 0.0
    %2320 = vmatprep.subr.mxu0 0.0
    %2321 = vmatpush1.msra.mxu0 0.0
    %2322 = vmatprep.subr.mxu0 0.0
    %2323 = vmatpush1.msra.mxu0 0.0
    %2324 = vmatprep.subr.mxu0 0.0
    %2325 = vmatpush1.msra.mxu0 0.0
    %2326 = vmatprep.subr.mxu0 0.0
    %2327 = vmatpush1.msra.mxu0 0.0
    %2328 = vmatprep.subr.mxu0 0.0
    %2329 = vmatpush1.msra.mxu0 0.0
    %2330 = vmatprep.subr.mxu0 0.0
    %2331 = vmatpush1.msra.mxu0 0.0
    %2332 = vmatprep.subr.mxu0 0.0
    %2333 = vmatpush1.msra.mxu0 0.0
    %2334 = vmatprep.subr.mxu0 0.0
    %2335 = vmatpush1.msra.mxu0 0.0
    %2336 = vmatprep.subr.mxu0 0.0
    %2337 = vmatpush1.msra.mxu0 0.0
    %2338 = vmatprep.subr.mxu0 0.0
    %2339 = vmatpush1.msra.mxu0 0.0
    %2340 = vmatprep.subr.mxu0 0.0
    %2341 = vmatpush1.msra.mxu0 0.0
    %2342 = vmatprep.subr.mxu0 0.0
    %2343 = vmatpush1.msra.mxu0 0.0
    %2344 = vmatprep.subr.mxu0 0.0
    %2345 = vmatpush1.msra.mxu0 0.0
    %2346 = vmatprep.subr.mxu0 0.0
    %2347 = vmatpush1.msra.mxu0 0.0
    %2348 = vmatprep.subr.mxu0 0.0
    %2349 = vmatpush1.msra.mxu0 0.0
    %2350 = vmatprep.subr.mxu0 0.0
    %2351 = vmatpush1.msra.mxu0 0.0
    %2352 = vmatprep.subr.mxu0 0.0
    %2353 = vmatpush1.msra.mxu0 0.0
    %2354 = vmatprep.mubr.f32.mxu0 0.0
    %2355 = vmatmul.mubr.f32.gmra.mrb[0].mxu0 %v2217
    %v2356 = vpop.f32.mrb[0].mxu0
    %v2357 = vadd.f32 0.0, %v2356
    %v2358 = vpop.f32.mrb[0].mxu0
    %v2359 = vadd.f32 0.0, %v2358
    %2360 = vdwg.mxu0
    %v2361 = vld [vmem:[%s3] sm:$0xff]
    %v2362 = vld [vmem:[%s4] sm:$0xff]
    %v2363 = vadd.f32 %v2286, %v2288
    %v2364 = vadd.f32 %v2363, %v2357
    %v2365 = vadd.f32 %v2364, %v2359
    %2366 = vadd.xlane.f32.xlu0 %v2365
    %v2367 = vpop.xlane.xlu0 %2366
    %v2368 = vmul.f32 %v2286, %v2286
    %v2369 = vmul.f32 %v2288, %v2288
    %v2370 = vmul.f32 %v2357, %v2357
    %v2371 = vmul.f32 %v2359, %v2359
    %v2372 = vadd.f32 %v2368, %v2369
    %v2373 = vadd.f32 %v2372, %v2370
    %v2374 = vadd.f32 %v2373, %v2371
    %2375 = vadd.xlane.f32.xlu0 %v2374
    %v2376 = vpop.xlane.xlu0 %2375
    %v2377 = vmul.f32 %v2367, 0.001953125
    %v2378 = vmul.f32 %v2376, 0.001953125
    %v2379 = vmul.f32 %v2377, %v2377
    %v2380 = vsub.f32 %v2378, %v2379
    %v2381 = vadd.f32 %v2380, 1e-05
    %v2382 = vrsqrt.pop %v2381
    %v2383 = vmul.f32 %v2361, %v2382
    %v2384 = vmul.f32 %v2377, %v2383
    %v2385 = vsub.f32 %v2362, %v2384
    %2387 = vset.pattern.permute.xlu0 0
    %2388 = vperm.xlu0 %2387, %v2383
    %v2389 = vpop.permute.xlu0 %2388
    %v2391 = vmul.f32 %v2286, %v2389
    %v2392 = vmul.f32 %v2288, %v2389
    %v2393 = vmul.f32 %v2357, %v2389
    %v2394 = vmul.f32 %v2359, %v2389
    %2396 = vset.pattern.permute.xlu0 0
    %2397 = vperm.xlu0 %2396, %v2385
    %v2398 = vpop.permute.xlu0 %2397
    %v2400 = vadd.f32 %v2391, %v2398
    %v2401 = vadd.f32 %v2392, %v2398
    %v2402 = vadd.f32 %v2393, %v2398
    %v2403 = vadd.f32 %v2394, %v2398
    %v2404 = vmax.f32 %v2400, 0.0
    %v2405 = vmax.f32 %v2401, 0.0
    %v2406 = vmax.f32 %v2402, 0.0
    %v2407 = vmax.f32 %v2403, 0.0
    %2408 = vxpose.xlu0.b32.start [1/16] %v2404, 128
    %2409 = vxpose.xlu0.b32.cont [2/16] 0.0, 128
    %2410 = vxpose.xlu0.b32.cont [3/16] 0.0, 128
    %2411 = vxpose.xlu0.b32.cont [4/16] 0.0, 128
    %2412 = vxpose.xlu0.b32.cont [5/16] 0.0, 128
    %2413 = vxpose.xlu0.b32.cont [6/16] 0.0, 128
    %2414 = vxpose.xlu0.b32.cont [7/16] 0.0, 128
    %2415 = vxpose.xlu0.b32.cont [8/16] 0.0, 128
    %2416 = vxpose.xlu0.b32.cont [9/16] 0.0, 128
    %2417 = vxpose.xlu0.b32.cont [10/16] 0.0, 128
    %2418 = vxpose.xlu0.b32.cont [11/16] 0.0, 128
    %2419 = vxpose.xlu0.b32.cont [12/16] 0.0, 128
    %2420 = vxpose.xlu0.b32.cont [13/16] 0.0, 128
    %2421 = vxpose.xlu0.b32.cont [14/16] 0.0, 128
    %2422 = vxpose.xlu0.b32.cont [15/16] 0.0, 128
    %2423 = vxpose.xlu0.b32.end [16/16] 0.0, 128
    %v2424 = vpop.trf.xlu0
    %v2425 = vpop.trf.xlu0
    %v2426 = vpop.trf.xlu0
    %v2427 = vpop.trf.xlu0
    %v2428 = vpop.trf.xlu0
    %v2429 = vpop.trf.xlu0
    %v2430 = vpop.trf.xlu0
    %v2431 = vpop.trf.xlu0
    %v2432 = vpop.trf.xlu0
    %v2433 = vpop.trf.xlu0
    %v2434 = vpop.trf.xlu0
    %v2435 = vpop.trf.xlu0
    %v2436 = vpop.trf.xlu0
    %v2437 = vpop.trf.xlu0
    %v2438 = vpop.trf.xlu0
    %v2439 = vpop.trf.xlu0
    %2440 = vxpose.xlu0.b32.start [1/16] %v2405, 128
    %2441 = vxpose.xlu0.b32.cont [2/16] 0.0, 128
    %2442 = vxpose.xlu0.b32.cont [3/16] 0.0, 128
    %2443 = vxpose.xlu0.b32.cont [4/16] 0.0, 128
    %2444 = vxpose.xlu0.b32.cont [5/16] 0.0, 128
    %2445 = vxpose.xlu0.b32.cont [6/16] 0.0, 128
    %2446 = vxpose.xlu0.b32.cont [7/16] 0.0, 128
    %2447 = vxpose.xlu0.b32.cont [8/16] 0.0, 128
    %2448 = vxpose.xlu0.b32.cont [9/16] 0.0, 128
    %2449 = vxpose.xlu0.b32.cont [10/16] 0.0, 128
    %2450 = vxpose.xlu0.b32.cont [11/16] 0.0, 128
    %2451 = vxpose.xlu0.b32.cont [12/16] 0.0, 128
    %2452 = vxpose.xlu0.b32.cont [13/16] 0.0, 128
    %2453 = vxpose.xlu0.b32.cont [14/16] 0.0, 128
    %2454 = vxpose.xlu0.b32.cont [15/16] 0.0, 128
    %2455 = vxpose.xlu0.b32.end [16/16] 0.0, 128
    %v2456 = vpop.trf.xlu0
    %v2457 = vpop.trf.xlu0
    %v2458 = vpop.trf.xlu0
    %v2459 = vpop.trf.xlu0
    %v2460 = vpop.trf.xlu0
    %v2461 = vpop.trf.xlu0
    %v2462 = vpop.trf.xlu0
    %v2463 = vpop.trf.xlu0
    %v2464 = vpop.trf.xlu0
    %v2465 = vpop.trf.xlu0
    %v2466 = vpop.trf.xlu0
    %v2467 = vpop.trf.xlu0
    %v2468 = vpop.trf.xlu0
    %v2469 = vpop.trf.xlu0
    %v2470 = vpop.trf.xlu0
    %v2471 = vpop.trf.xlu0
    %2472 = vxpose.xlu0.b32.start [1/16] %v2406, 128
    %2473 = vxpose.xlu0.b32.cont [2/16] 0.0, 128
    %2474 = vxpose.xlu0.b32.cont [3/16] 0.0, 128
    %2475 = vxpose.xlu0.b32.cont [4/16] 0.0, 128
    %2476 = vxpose.xlu0.b32.cont [5/16] 0.0, 128
    %2477 = vxpose.xlu0.b32.cont [6/16] 0.0, 128
    %2478 = vxpose.xlu0.b32.cont [7/16] 0.0, 128
    %2479 = vxpose.xlu0.b32.cont [8/16] 0.0, 128
    %2480 = vxpose.xlu0.b32.cont [9/16] 0.0, 128
    %2481 = vxpose.xlu0.b32.cont [10/16] 0.0, 128
    %2482 = vxpose.xlu0.b32.cont [11/16] 0.0, 128
    %2483 = vxpose.xlu0.b32.cont [12/16] 0.0, 128
    %2484 = vxpose.xlu0.b32.cont [13/16] 0.0, 128
    %2485 = vxpose.xlu0.b32.cont [14/16] 0.0, 128
    %2486 = vxpose.xlu0.b32.cont [15/16] 0.0, 128
    %2487 = vxpose.xlu0.b32.end [16/16] 0.0, 128
    %v2488 = vpop.trf.xlu0
    %v2489 = vpop.trf.xlu0
    %v2490 = vpop.trf.xlu0
    %v2491 = vpop.trf.xlu0
    %v2492 = vpop.trf.xlu0
    %v2493 = vpop.trf.xlu0
    %v2494 = vpop.trf.xlu0
    %v2495 = vpop.trf.xlu0
    %v2496 = vpop.trf.xlu0
    %v2497 = vpop.trf.xlu0
    %v2498 = vpop.trf.xlu0
    %v2499 = vpop.trf.xlu0
    %v2500 = vpop.trf.xlu0
    %v2501 = vpop.trf.xlu0
    %v2502 = vpop.trf.xlu0
    %v2503 = vpop.trf.xlu0
    %2504 = vxpose.xlu0.b32.start [1/16] %v2407, 128
    %2505 = vxpose.xlu0.b32.cont [2/16] 0.0, 128
    %2506 = vxpose.xlu0.b32.cont [3/16] 0.0, 128
    %2507 = vxpose.xlu0.b32.cont [4/16] 0.0, 128
    %2508 = vxpose.xlu0.b32.cont [5/16] 0.0, 128
    %2509 = vxpose.xlu0.b32.cont [6/16] 0.0, 128
    %2510 = vxpose.xlu0.b32.cont [7/16] 0.0, 128
    %2511 = vxpose.xlu0.b32.cont [8/16] 0.0, 128
    %2512 = vxpose.xlu0.b32.cont [9/16] 0.0, 128
    %2513 = vxpose.xlu0.b32.cont [10/16] 0.0, 128
    %2514 = vxpose.xlu0.b32.cont [11/16] 0.0, 128
    %2515 = vxpose.xlu0.b32.cont [12/16] 0.0, 128
    %2516 = vxpose.xlu0.b32.cont [13/16] 0.0, 128
    %2517 = vxpose.xlu0.b32.cont [14/16] 0.0, 128
    %2518 = vxpose.xlu0.b32.cont [15/16] 0.0, 128
    %2519 = vxpose.xlu0.b32.end [16/16] 0.0, 128
    %v2520 = vpop.trf.xlu0
    %v2521 = vpop.trf.xlu0
    %v2522 = vpop.trf.xlu0
    %v2523 = vpop.trf.xlu0
    %v2524 = vpop.trf.xlu0
    %v2525 = vpop.trf.xlu0
    %v2526 = vpop.trf.xlu0
    %v2527 = vpop.trf.xlu0
    %v2528 = vpop.trf.xlu0
    %v2529 = vpop.trf.xlu0
    %v2530 = vpop.trf.xlu0
    %v2531 = vpop.trf.xlu0
    %v2532 = vpop.trf.xlu0
    %v2533 = vpop.trf.xlu0
    %v2534 = vpop.trf.xlu0
    %v2535 = vpop.trf.xlu0
    %v2600 = vrot.slane %v2424, 7
    %v2601 = vrot.slane %v2425, 7
    %v2602 = vsel %vm155, %v2600, %v2601
    %v2603 = vrot.slane %v2426, 7
    %v2604 = vrot.slane %v2427, 7
    %v2605 = vsel %vm155, %v2603, %v2604
    %v2606 = vrot.slane %v2428, 7
    %v2607 = vrot.slane %v2429, 7
    %v2608 = vsel %vm155, %v2606, %v2607
    %v2609 = vrot.slane %v2430, 7
    %v2610 = vrot.slane %v2431, 7
    %v2611 = vsel %vm155, %v2609, %v2610
    %v2612 = vrot.slane %v2432, 7
    %v2613 = vrot.slane %v2433, 7
    %v2614 = vsel %vm155, %v2612, %v2613
    %v2615 = vrot.slane %v2434, 7
    %v2616 = vrot.slane %v2435, 7
    %v2617 = vsel %vm155, %v2615, %v2616
    %v2618 = vrot.slane %v2436, 7
    %v2619 = vrot.slane %v2437, 7
    %v2620 = vsel %vm155, %v2618, %v2619
    %v2621 = vrot.slane %v2438, 7
    %v2622 = vrot.slane %v2439, 7
    %v2623 = vsel %vm155, %v2621, %v2622
    %v2624 = vrot.slane %v2456, 7
    %v2625 = vrot.slane %v2457, 7
    %v2626 = vsel %vm155, %v2624, %v2625
    %v2627 = vrot.slane %v2458, 7
    %v2628 = vrot.slane %v2459, 7
    %v2629 = vsel %vm155, %v2627, %v2628
    %v2630 = vrot.slane %v2460, 7
    %v2631 = vrot.slane %v2461, 7
    %v2632 = vsel %vm155, %v2630, %v2631
    %v2633 = vrot.slane %v2462, 7
    %v2634 = vrot.slane %v2463, 7
    %v2635 = vsel %vm155, %v2633, %v2634
    %v2636 = vrot.slane %v2464, 7
    %v2637 = vrot.slane %v2465, 7
    %v2638 = vsel %vm155, %v2636, %v2637
    %v2639 = vrot.slane %v2466, 7
    %v2640 = vrot.slane %v2467, 7
    %v2641 = vsel %vm155, %v2639, %v2640
    %v2642 = vrot.slane %v2468, 7
    %v2643 = vrot.slane %v2469, 7
    %v2644 = vsel %vm155, %v2642, %v2643
    %v2645 = vrot.slane %v2470, 7
    %v2646 = vrot.slane %v2471, 7
    %v2647 = vsel %vm155, %v2645, %v2646
    %v2648 = vrot.slane %v2488, 7
    %v2649 = vrot.slane %v2489, 7
    %v2650 = vsel %vm155, %v2648, %v2649
    %v2651 = vrot.slane %v2490, 7
    %v2652 = vrot.slane %v2491, 7
    %v2653 = vsel %vm155, %v2651, %v2652
    %v2654 = vrot.slane %v2492, 7
    %v2655 = vrot.slane %v2493, 7
    %v2656 = vsel %vm155, %v2654, %v2655
    %v2657 = vrot.slane %v2494, 7
    %v2658 = vrot.slane %v2495, 7
    %v2659 = vsel %vm155, %v2657, %v2658
    %v2660 = vrot.slane %v2496, 7
    %v2661 = vrot.slane %v2497, 7
    %v2662 = vsel %vm155, %v2660, %v2661
    %v2663 = vrot.slane %v2498, 7
    %v2664 = vrot.slane %v2499, 7
    %v2665 = vsel %vm155, %v2663, %v2664
    %v2666 = vrot.slane %v2500, 7
    %v2667 = vrot.slane %v2501, 7
    %v2668 = vsel %vm155, %v2666, %v2667
    %v2669 = vrot.slane %v2502, 7
    %v2670 = vrot.slane %v2503, 7
    %v2671 = vsel %vm155, %v2669, %v2670
    %v2672 = vrot.slane %v2520, 7
    %v2673 = vrot.slane %v2521, 7
    %v2674 = vsel %vm155, %v2672, %v2673
    %v2675 = vrot.slane %v2522, 7
    %v2676 = vrot.slane %v2523, 7
    %v2677 = vsel %vm155, %v2675, %v2676
    %v2678 = vrot.slane %v2524, 7
    %v2679 = vrot.slane %v2525, 7
    %v2680 = vsel %vm155, %v2678, %v2679
    %v2681 = vrot.slane %v2526, 7
    %v2682 = vrot.slane %v2527, 7
    %v2683 = vsel %vm155, %v2681, %v2682
    %v2684 = vrot.slane %v2528, 7
    %v2685 = vrot.slane %v2529, 7
    %v2686 = vsel %vm155, %v2684, %v2685
    %v2687 = vrot.slane %v2530, 7
    %v2688 = vrot.slane %v2531, 7
    %v2689 = vsel %vm155, %v2687, %v2688
    %v2690 = vrot.slane %v2532, 7
    %v2691 = vrot.slane %v2533, 7
    %v2692 = vsel %vm155, %v2690, %v2691
    %v2693 = vrot.slane %v2534, 7
    %v2694 = vrot.slane %v2535, 7
    %v2695 = vsel %vm155, %v2693, %v2694
    %v2792 = vrot.slane %v2425, 6
    %v2793 = vrot.slane %v2427, 6
    %v2794 = vrot.slane %v2429, 6
    %v2795 = vrot.slane %v2431, 6
    %v2796 = vrot.slane %v2433, 6
    %v2797 = vrot.slane %v2435, 6
    %v2798 = vrot.slane %v2437, 6
    %v2799 = vrot.slane %v2439, 6
    %v2800 = vrot.slane %v2457, 6
    %v2801 = vrot.slane %v2459, 6
    %v2802 = vrot.slane %v2461, 6
    %v2803 = vrot.slane %v2463, 6
    %v2804 = vrot.slane %v2465, 6
    %v2805 = vrot.slane %v2467, 6
    %v2806 = vrot.slane %v2469, 6
    %v2807 = vrot.slane %v2471, 6
    %v2808 = vrot.slane %v2489, 6
    %v2809 = vrot.slane %v2491, 6
    %v2810 = vrot.slane %v2493, 6
    %v2811 = vrot.slane %v2495, 6
    %v2812 = vrot.slane %v2497, 6
    %v2813 = vrot.slane %v2499, 6
    %v2814 = vrot.slane %v2501, 6
    %v2815 = vrot.slane %v2503, 6
    %v2816 = vrot.slane %v2521, 6
    %v2817 = vrot.slane %v2523, 6
    %v2818 = vrot.slane %v2525, 6
    %v2819 = vrot.slane %v2527, 6
    %v2820 = vrot.slane %v2529, 6
    %v2821 = vrot.slane %v2531, 6
    %v2822 = vrot.slane %v2533, 6
    %v2823 = vrot.slane %v2535, 6
    %v2856 = vsel %vm155, %v2424, %v2600
    %v2857 = vsel %vm155, %v2426, %v2603
    %v2858 = vsel %vm155, %v2428, %v2606
    %v2859 = vsel %vm155, %v2430, %v2609
    %v2860 = vsel %vm155, %v2432, %v2612
    %v2861 = vsel %vm155, %v2434, %v2615
    %v2862 = vsel %vm155, %v2436, %v2618
    %v2863 = vsel %vm155, %v2438, %v2621
    %v2864 = vsel %vm155, %v2456, %v2624
    %v2865 = vsel %vm155, %v2458, %v2627
    %v2866 = vsel %vm155, %v2460, %v2630
    %v2867 = vsel %vm155, %v2462, %v2633
    %v2868 = vsel %vm155, %v2464, %v2636
    %v2869 = vsel %vm155, %v2466, %v2639
    %v2870 = vsel %vm155, %v2468, %v2642
    %v2871 = vsel %vm155, %v2470, %v2645
    %v2872 = vsel %vm155, %v2488, %v2648
    %v2873 = vsel %vm155, %v2490, %v2651
    %v2874 = vsel %vm155, %v2492, %v2654
    %v2875 = vsel %vm155, %v2494, %v2657
    %v2876 = vsel %vm155, %v2496, %v2660
    %v2877 = vsel %vm155, %v2498, %v2663
    %v2878 = vsel %vm155, %v2500, %v2666
    %v2879 = vsel %vm155, %v2502, %v2669
    %v2880 = vsel %vm155, %v2520, %v2672
    %v2881 = vsel %vm155, %v2522, %v2675
    %v2882 = vsel %vm155, %v2524, %v2678
    %v2883 = vsel %vm155, %v2526, %v2681
    %v2884 = vsel %vm155, %v2528, %v2684
    %v2885 = vsel %vm155, %v2530, %v2687
    %v2886 = vsel %vm155, %v2532, %v2690
    %v2887 = vsel %vm155, %v2534, %v2693
    %v2888 = vsel %vm155, %v2601, %v2792
    %v2889 = vsel %vm155, %v2604, %v2793
    %v2890 = vsel %vm155, %v2607, %v2794
    %v2891 = vsel %vm155, %v2610, %v2795
    %v2892 = vsel %vm155, %v2613, %v2796
    %v2893 = vsel %vm155, %v2616, %v2797
    %v2894 = vsel %vm155, %v2619, %v2798
    %v2895 = vsel %vm155, %v2622, %v2799
    %v2896 = vsel %vm155, %v2625, %v2800
    %v2897 = vsel %vm155, %v2628, %v2801
    %v2898 = vsel %vm155, %v2631, %v2802
    %v2899 = vsel %vm155, %v2634, %v2803
    %v2900 = vsel %vm155, %v2637, %v2804
    %v2901 = vsel %vm155, %v2640, %v2805
    %v2902 = vsel %vm155, %v2643, %v2806
    %v2903 = vsel %vm155, %v2646, %v2807
    %v2904 = vsel %vm155, %v2649, %v2808
    %v2905 = vsel %vm155, %v2652, %v2809
    %v2906 = vsel %vm155, %v2655, %v2810
    %v2907 = vsel %vm155, %v2658, %v2811
    %v2908 = vsel %vm155, %v2661, %v2812
    %v2909 = vsel %vm155, %v2664, %v2813
    %v2910 = vsel %vm155, %v2667, %v2814
    %v2911 = vsel %vm155, %v2670, %v2815
    %v2912 = vsel %vm155, %v2673, %v2816
    %v2913 = vsel %vm155, %v2676, %v2817
    %v2914 = vsel %vm155, %v2679, %v2818
    %v2915 = vsel %vm155, %v2682, %v2819
    %v2916 = vsel %vm155, %v2685, %v2820
    %v2917 = vsel %vm155, %v2688, %v2821
    %v2918 = vsel %vm155, %v2691, %v2822
    %v2919 = vsel %vm155, %v2694, %v2823
    %2920 = vxpose.xlu0.b32.start [1/16] %v2856, 128
    %2921 = vxpose.xlu0.b32.cont [2/16] %v2602, 128
    %2922 = vxpose.xlu0.b32.cont [3/16] %v2856, 128
    %2923 = vxpose.xlu0.b32.cont [4/16] %v2602, 128
    %2924 = vxpose.xlu0.b32.cont [5/16] %v2857, 128
    %2925 = vxpose.xlu0.b32.cont [6/16] %v2605, 128
    %2926 = vxpose.xlu0.b32.cont [7/16] %v2858, 128
    %2927 = vxpose.xlu0.b32.cont [8/16] %v2608, 128
    %2928 = vxpose.xlu0.b32.cont [9/16] %v2859, 128
    %2929 = vxpose.xlu0.b32.cont [10/16] %v2611, 128
    %2930 = vxpose.xlu0.b32.cont [11/16] %v2860, 128
    %2931 = vxpose.xlu0.b32.cont [12/16] %v2614, 128
    %2932 = vxpose.xlu0.b32.cont [13/16] %v2861, 128
    %2933 = vxpose.xlu0.b32.cont [14/16] %v2617, 128
    %2934 = vxpose.xlu0.b32.cont [15/16] %v2862, 128
    %2935 = vxpose.xlu0.b32.end [16/16] %v2620, 128
    %v2936 = vpop.trf.xlu0
    %v2937 = vpop.trf.xlu0
    %v2938 = vpop.trf.xlu0
    %v2939 = vpop.trf.xlu0
    %v2940 = vpop.trf.xlu0
    %v2941 = vpop.trf.xlu0
    %v2942 = vpop.trf.xlu0
    %v2943 = vpop.trf.xlu0
    %v2944 = vpop.trf.xlu0
    %v2945 = vpop.trf.xlu0
    %v2946 = vpop.trf.xlu0
    %v2947 = vpop.trf.xlu0
    %v2948 = vpop.trf.xlu0
    %v2949 = vpop.trf.xlu0
    %v2950 = vpop.trf.xlu0
    %v2951 = vpop.trf.xlu0
    %2952 = vxpose.xlu0.b32.start [1/16] %v2863, 128
    %2953 = vxpose.xlu0.b32.cont [2/16] %v2623, 128
    %2954 = vxpose.xlu0.b32.cont [3/16] %v2864, 128
    %2955 = vxpose.xlu0.b32.cont [4/16] %v2626, 128
    %2956 = vxpose.xlu0.b32.cont [5/16] %v2865, 128
    %2957 = vxpose.xlu0.b32.cont [6/16] %v2629, 128
    %2958 = vxpose.xlu0.b32.cont [7/16] %v2866, 128
    %2959 = vxpose.xlu0.b32.cont [8/16] %v2632, 128
    %2960 = vxpose.xlu0.b32.cont [9/16] %v2867, 128
    %2961 = vxpose.xlu0.b32.cont [10/16] %v2635, 128
    %2962 = vxpose.xlu0.b32.cont [11/16] %v2868, 128
    %2963 = vxpose.xlu0.b32.cont [12/16] %v2638, 128
    %2964 = vxpose.xlu0.b32.cont [13/16] %v2869, 128
    %2965 = vxpose.xlu0.b32.cont [14/16] %v2641, 128
    %2966 = vxpose.xlu0.b32.cont [15/16] %v2870, 128
    %2967 = vxpose.xlu0.b32.end [16/16] %v2644, 128
    %v2968 = vpop.trf.xlu0
    %v2969 = vpop.trf.xlu0
    %v2970 = vpop.trf.xlu0
    %v2971 = vpop.trf.xlu0
    %v2972 = vpop.trf.xlu0
    %v2973 = vpop.trf.xlu0
    %v2974 = vpop.trf.xlu0
    %v2975 = vpop.trf.xlu0
    %v2976 = vpop.trf.xlu0
    %v2977 = vpop.trf.xlu0
    %v2978 = vpop.trf.xlu0
    %v2979 = vpop.trf.xlu0
    %v2980 = vpop.trf.xlu0
    %v2981 = vpop.trf.xlu0
    %v2982 = vpop.trf.xlu0
    %v2983 = vpop.trf.xlu0
    %2984 = vxpose.xlu0.b32.start [1/16] %v2872, 128
    %2985 = vxpose.xlu0.b32.cont [2/16] %v2650, 128
    %2986 = vxpose.xlu0.b32.cont [3/16] %v2872, 128
    %2987 = vxpose.xlu0.b32.cont [4/16] %v2650, 128
    %2988 = vxpose.xlu0.b32.cont [5/16] %v2873, 128
    %2989 = vxpose.xlu0.b32.cont [6/16] %v2653, 128
    %2990 = vxpose.xlu0.b32.cont [7/16] %v2874, 128
    %2991 = vxpose.xlu0.b32.cont [8/16] %v2656, 128
    %2992 = vxpose.xlu0.b32.cont [9/16] %v2875, 128
    %2993 = vxpose.xlu0.b32.cont [10/16] %v2659, 128
    %2994 = vxpose.xlu0.b32.cont [11/16] %v2876, 128
    %2995 = vxpose.xlu0.b32.cont [12/16] %v2662, 128
    %2996 = vxpose.xlu0.b32.cont [13/16] %v2877, 128
    %2997 = vxpose.xlu0.b32.cont [14/16] %v2665, 128
    %2998 = vxpose.xlu0.b32.cont [15/16] %v2878, 128
    %2999 = vxpose.xlu0.b32.end [16/16] %v2668, 128
    %v3000 = vpop.trf.xlu0
    %v3001 = vpop.trf.xlu0
    %v3002 = vpop.trf.xlu0
    %v3003 = vpop.trf.xlu0
    %v3004 = vpop.trf.xlu0
    %v3005 = vpop.trf.xlu0
    %v3006 = vpop.trf.xlu0
    %v3007 = vpop.trf.xlu0
    %v3008 = vpop.trf.xlu0
    %v3009 = vpop.trf.xlu0
    %v3010 = vpop.trf.xlu0
    %v3011 = vpop.trf.xlu0
    %v3012 = vpop.trf.xlu0
    %v3013 = vpop.trf.xlu0
    %v3014 = vpop.trf.xlu0
    %v3015 = vpop.trf.xlu0
    %3016 = vxpose.xlu0.b32.start [1/16] %v2879, 128
    %3017 = vxpose.xlu0.b32.cont [2/16] %v2671, 128
    %3018 = vxpose.xlu0.b32.cont [3/16] %v2880, 128
    %3019 = vxpose.xlu0.b32.cont [4/16] %v2674, 128
    %3020 = vxpose.xlu0.b32.cont [5/16] %v2881, 128
    %3021 = vxpose.xlu0.b32.cont [6/16] %v2677, 128
    %3022 = vxpose.xlu0.b32.cont [7/16] %v2882, 128
    %3023 = vxpose.xlu0.b32.cont [8/16] %v2680, 128
    %3024 = vxpose.xlu0.b32.cont [9/16] %v2883, 128
    %3025 = vxpose.xlu0.b32.cont [10/16] %v2683, 128
    %3026 = vxpose.xlu0.b32.cont [11/16] %v2884, 128
    %3027 = vxpose.xlu0.b32.cont [12/16] %v2686, 128
    %3028 = vxpose.xlu0.b32.cont [13/16] %v2885, 128
    %3029 = vxpose.xlu0.b32.cont [14/16] %v2689, 128
    %3030 = vxpose.xlu0.b32.cont [15/16] %v2886, 128
    %3031 = vxpose.xlu0.b32.end [16/16] %v2692, 128
    %v3032 = vpop.trf.xlu0
    %v3033 = vpop.trf.xlu0
    %v3034 = vpop.trf.xlu0
    %v3035 = vpop.trf.xlu0
    %v3036 = vpop.trf.xlu0
    %v3037 = vpop.trf.xlu0
    %v3038 = vpop.trf.xlu0
    %v3039 = vpop.trf.xlu0
    %v3040 = vpop.trf.xlu0
    %v3041 = vpop.trf.xlu0
    %v3042 = vpop.trf.xlu0
    %v3043 = vpop.trf.xlu0
    %v3044 = vpop.trf.xlu0
    %v3045 = vpop.trf.xlu0
    %v3046 = vpop.trf.xlu0
    %v3047 = vpop.trf.xlu0
    %3048 = vst [vmem:[#allocation2] sm:$0xff] %v2936
    %3049 = vst [vmem:[#allocation2 + $0x8] sm:$0xff] %v2968
    %3050 = vst [vmem:[#allocation2 + $0x10] sm:$0xff] %v3000
    %3051 = vst [vmem:[#allocation2 + $0x18] sm:$0xff] %v3032
    %v3112 = vrot.slane %v2856, 1
    %v3113 = vrot.slane %v2602, 1
    %v3114 = vsel %vm668, %v3112, %v3113
    %v3115 = vrot.slane %v2888, 1
    %v3116 = vsel %vm668, %v3113, %v3115
    %v3117 = vrot.slane %v2857, 1
    %v3118 = vrot.slane %v2605, 1
    %v3119 = vsel %vm668, %v3117, %v3118
    %v3120 = vrot.slane %v2889, 1
    %v3121 = vsel %vm668, %v3118, %v3120
    %v3122 = vrot.slane %v2858, 1
    %v3123 = vrot.slane %v2608, 1
    %v3124 = vsel %vm668, %v3122, %v3123
    %v3125 = vrot.slane %v2890, 1
    %v3126 = vsel %vm668, %v3123, %v3125
    %v3127 = vrot.slane %v2859, 1
    %v3128 = vrot.slane %v2611, 1
    %v3129 = vsel %vm668, %v3127, %v3128
    %v3130 = vrot.slane %v2891, 1
    %v3131 = vsel %vm668, %v3128, %v3130
    %v3132 = vrot.slane %v2860, 1
    %v3133 = vrot.slane %v2614, 1
    %v3134 = vsel %vm668, %v3132, %v3133
    %v3135 = vrot.slane %v2892, 1
    %v3136 = vsel %vm668, %v3133, %v3135
    %v3137 = vrot.slane %v2861, 1
    %v3138 = vrot.slane %v2617, 1
    %v3139 = vsel %vm668, %v3137, %v3138
    %v3140 = vrot.slane %v2893, 1
    %v3141 = vsel %vm668, %v3138, %v3140
    %v3142 = vrot.slane %v2862, 1
    %v3143 = vrot.slane %v2620, 1
    %v3144 = vsel %vm668, %v3142, %v3143
    %v3145 = vrot.slane %v2894, 1
    %v3146 = vsel %vm668, %v3143, %v3145
    %v3147 = vrot.slane %v2863, 1
    %v3148 = vrot.slane %v2623, 1
    %v3149 = vsel %vm668, %v3147, %v3148
    %v3150 = vrot.slane %v2895, 1
    %v3151 = vsel %vm668, %v3148, %v3150
    %v3152 = vrot.slane %v2864, 1
    %v3153 = vrot.slane %v2626, 1
    %v3154 = vsel %vm668, %v3152, %v3153
    %v3155 = vrot.slane %v2896, 1
    %v3156 = vsel %vm668, %v3153, %v3155
    %v3157 = vrot.slane %v2865, 1
    %v3158 = vrot.slane %v2629, 1
    %v3159 = vsel %vm668, %v3157, %v3158
    %v3160 = vrot.slane %v2897, 1
    %v3161 = vsel %vm668, %v3158, %v3160
    %v3162 = vrot.slane %v2866, 1
    %v3163 = vrot.slane %v2632, 1
    %v3164 = vsel %vm668, %v3162, %v3163
    %v3165 = vrot.slane %v2898, 1
    %v3166 = vsel %vm668, %v3163, %v3165
    %v3167 = vrot.slane %v2867, 1
    %v3168 = vrot.slane %v2635, 1
    %v3169 = vsel %vm668, %v3167, %v3168
    %v3170 = vrot.slane %v2899, 1
    %v3171 = vsel %vm668, %v3168, %v3170
    %v3172 = vrot.slane %v2868, 1
    %v3173 = vrot.slane %v2638, 1
    %v3174 = vsel %vm668, %v3172, %v3173
    %v3175 = vrot.slane %v2900, 1
    %v3176 = vsel %vm668, %v3173, %v3175
    %v3177 = vrot.slane %v2869, 1
    %v3178 = vrot.slane %v2641, 1
    %v3179 = vsel %vm668, %v3177, %v3178
    %v3180 = vrot.slane %v2901, 1
    %v3181 = vsel %vm668, %v3178, %v3180
    %v3182 = vrot.slane %v2870, 1
    %v3183 = vrot.slane %v2644, 1
    %v3184 = vsel %vm668, %v3182, %v3183
    %v3185 = vrot.slane %v2902, 1
    %v3186 = vsel %vm668, %v3183, %v3185
    %v3187 = vrot.slane %v2872, 1
    %v3188 = vrot.slane %v2650, 1
    %v3189 = vsel %vm668, %v3187, %v3188
    %v3190 = vrot.slane %v2904, 1
    %v3191 = vsel %vm668, %v3188, %v3190
    %v3192 = vrot.slane %v2873, 1
    %v3193 = vrot.slane %v2653, 1
    %v3194 = vsel %vm668, %v3192, %v3193
    %v3195 = vrot.slane %v2905, 1
    %v3196 = vsel %vm668, %v3193, %v3195
    %v3197 = vrot.slane %v2874, 1
    %v3198 = vrot.slane %v2656, 1
    %v3199 = vsel %vm668, %v3197, %v3198
    %v3200 = vrot.slane %v2906, 1
    %v3201 = vsel %vm668, %v3198, %v3200
    %v3202 = vrot.slane %v2875, 1
    %v3203 = vrot.slane %v2659, 1
    %v3204 = vsel %vm668, %v3202, %v3203
    %v3205 = vrot.slane %v2907, 1
    %v3206 = vsel %vm668, %v3203, %v3205
    %v3207 = vrot.slane %v2876, 1
    %v3208 = vrot.slane %v2662, 1
    %v3209 = vsel %vm668, %v3207, %v3208
    %v3210 = vrot.slane %v2908, 1
    %v3211 = vsel %vm668, %v3208, %v3210
    %v3212 = vrot.slane %v2877, 1
    %v3213 = vrot.slane %v2665, 1
    %v3214 = vsel %vm668, %v3212, %v3213
    %v3215 = vrot.slane %v2909, 1
    %v3216 = vsel %vm668, %v3213, %v3215
    %v3217 = vrot.slane %v2878, 1
    %v3218 = vrot.slane %v2668, 1
    %v3219 = vsel %vm668, %v3217, %v3218
    %v3220 = vrot.slane %v2910, 1
    %v3221 = vsel %vm668, %v3218, %v3220
    %v3222 = vrot.slane %v2879, 1
    %v3223 = vrot.slane %v2671, 1
    %v3224 = vsel %vm668, %v3222, %v3223
    %v3225 = vrot.slane %v2911, 1
    %v3226 = vsel %vm668, %v3223, %v3225
    %v3227 = vrot.slane %v2880, 1
    %v3228 = vrot.slane %v2674, 1
    %v3229 = vsel %vm668, %v3227, %v3228
    %v3230 = vrot.slane %v2912, 1
    %v3231 = vsel %vm668, %v3228, %v3230
    %v3232 = vrot.slane %v2881, 1
    %v3233 = vrot.slane %v2677, 1
    %v3234 = vsel %vm668, %v3232, %v3233
    %v3235 = vrot.slane %v2913, 1
    %v3236 = vsel %vm668, %v3233, %v3235
    %v3237 = vrot.slane %v2882, 1
    %v3238 = vrot.slane %v2680, 1
    %v3239 = vsel %vm668, %v3237, %v3238
    %v3240 = vrot.slane %v2914, 1
    %v3241 = vsel %vm668, %v3238, %v3240
    %v3242 = vrot.slane %v2883, 1
    %v3243 = vrot.slane %v2683, 1
    %v3244 = vsel %vm668, %v3242, %v3243
    %v3245 = vrot.slane %v2915, 1
    %v3246 = vsel %vm668, %v3243, %v3245
    %v3247 = vrot.slane %v2884, 1
    %v3248 = vrot.slane %v2686, 1
    %v3249 = vsel %vm668, %v3247, %v3248
    %v3250 = vrot.slane %v2916, 1
    %v3251 = vsel %vm668, %v3248, %v3250
    %v3252 = vrot.slane %v2885, 1
    %v3253 = vrot.slane %v2689, 1
    %v3254 = vsel %vm668, %v3252, %v3253
    %v3255 = vrot.slane %v2917, 1
    %v3256 = vsel %vm668, %v3253, %v3255
    %v3257 = vrot.slane %v2886, 1
    %v3258 = vrot.slane %v2692, 1
    %v3259 = vsel %vm668, %v3257, %v3258
    %v3260 = vrot.slane %v2918, 1
    %v3261 = vsel %vm668, %v3258, %v3260
    %3322 = vxpose.xlu0.b32.start [1/16] %v3114, 128
    %3323 = vxpose.xlu0.b32.cont [2/16] %v3116, 128
    %3324 = vxpose.xlu0.b32.cont [3/16] %v3114, 128
    %3325 = vxpose.xlu0.b32.cont [4/16] %v3116, 128
    %3326 = vxpose.xlu0.b32.cont [5/16] %v3119, 128
    %3327 = vxpose.xlu0.b32.cont [6/16] %v3121, 128
    %3328 = vxpose.xlu0.b32.cont [7/16] %v3124, 128
    %3329 = vxpose.xlu0.b32.cont [8/16] %v3126, 128
    %3330 = vxpose.xlu0.b32.cont [9/16] %v3129, 128
    %3331 = vxpose.xlu0.b32.cont [10/16] %v3131, 128
    %3332 = vxpose.xlu0.b32.cont [11/16] %v3134, 128
    %3333 = vxpose.xlu0.b32.cont [12/16] %v3136, 128
    %3334 = vxpose.xlu0.b32.cont [13/16] %v3139, 128
    %3335 = vxpose.xlu0.b32.cont [14/16] %v3141, 128
    %3336 = vxpose.xlu0.b32.cont [15/16] %v3144, 128
    %3337 = vxpose.xlu0.b32.end [16/16] %v3146, 128
    %v3338 = vpop.trf.xlu0
    %v3339 = vpop.trf.xlu0
    %v3340 = vpop.trf.xlu0
    %v3341 = vpop.trf.xlu0
    %v3342 = vpop.trf.xlu0
    %v3343 = vpop.trf.xlu0
    %v3344 = vpop.trf.xlu0
    %v3345 = vpop.trf.xlu0
    %v3346 = vpop.trf.xlu0
    %v3347 = vpop.trf.xlu0
    %v3348 = vpop.trf.xlu0
    %v3349 = vpop.trf.xlu0
    %v3350 = vpop.trf.xlu0
    %v3351 = vpop.trf.xlu0
    %v3352 = vpop.trf.xlu0
    %v3353 = vpop.trf.xlu0
    %3354 = vxpose.xlu0.b32.start [1/16] %v3149, 128
    %3355 = vxpose.xlu0.b32.cont [2/16] %v3151, 128
    %3356 = vxpose.xlu0.b32.cont [3/16] %v3154, 128
    %3357 = vxpose.xlu0.b32.cont [4/16] %v3156, 128
    %3358 = vxpose.xlu0.b32.cont [5/16] %v3159, 128
    %3359 = vxpose.xlu0.b32.cont [6/16] %v3161, 128
    %3360 = vxpose.xlu0.b32.cont [7/16] %v3164, 128
    %3361 = vxpose.xlu0.b32.cont [8/16] %v3166, 128
    %3362 = vxpose.xlu0.b32.cont [9/16] %v3169, 128
    %3363 = vxpose.xlu0.b32.cont [10/16] %v3171, 128
    %3364 = vxpose.xlu0.b32.cont [11/16] %v3174, 128
    %3365 = vxpose.xlu0.b32.cont [12/16] %v3176, 128
    %3366 = vxpose.xlu0.b32.cont [13/16] %v3179, 128
    %3367 = vxpose.xlu0.b32.cont [14/16] %v3181, 128
    %3368 = vxpose.xlu0.b32.cont [15/16] %v3184, 128
    %3369 = vxpose.xlu0.b32.end [16/16] %v3186, 128
    %v3370 = vpop.trf.xlu0
    %v3371 = vpop.trf.xlu0
    %v3372 = vpop.trf.xlu0
    %v3373 = vpop.trf.xlu0
    %v3374 = vpop.trf.xlu0
    %v3375 = vpop.trf.xlu0
    %v3376 = vpop.trf.xlu0
    %v3377 = vpop.trf.xlu0
    %v3378 = vpop.trf.xlu0
    %v3379 = vpop.trf.xlu0
    %v3380 = vpop.trf.xlu0
    %v3381 = vpop.trf.xlu0
    %v3382 = vpop.trf.xlu0
    %v3383 = vpop.trf.xlu0
    %v3384 = vpop.trf.xlu0
    %v3385 = vpop.trf.xlu0
    %3386 = vxpose.xlu0.b32.start [1/16] %v3189, 128
    %3387 = vxpose.xlu0.b32.cont [2/16] %v3191, 128
    %3388 = vxpose.xlu0.b32.cont [3/16] %v3189, 128
    %3389 = vxpose.xlu0.b32.cont [4/16] %v3191, 128
    %3390 = vxpose.xlu0.b32.cont [5/16] %v3194, 128
    %3391 = vxpose.xlu0.b32.cont [6/16] %v3196, 128
    %3392 = vxpose.xlu0.b32.cont [7/16] %v3199, 128
    %3393 = vxpose.xlu0.b32.cont [8/16] %v3201, 128
    %3394 = vxpose.xlu0.b32.cont [9/16] %v3204, 128
    %3395 = vxpose.xlu0.b32.cont [10/16] %v3206, 128
    %3396 = vxpose.xlu0.b32.cont [11/16] %v3209, 128
    %3397 = vxpose.xlu0.b32.cont [12/16] %v3211, 128
    %3398 = vxpose.xlu0.b32.cont [13/16] %v3214, 128
    %3399 = vxpose.xlu0.b32.cont [14/16] %v3216, 128
    %3400 = vxpose.xlu0.b32.cont [15/16] %v3219, 128
    %3401 = vxpose.xlu0.b32.end [16/16] %v3221, 128
    %v3402 = vpop.trf.xlu0
    %v3403 = vpop.trf.xlu0
    %v3404 = vpop.trf.xlu0
    %v3405 = vpop.trf.xlu0
    %v3406 = vpop.trf.xlu0
    %v3407 = vpop.trf.xlu0
    %v3408 = vpop.trf.xlu0
    %v3409 = vpop.trf.xlu0
    %v3410 = vpop.trf.xlu0
    %v3411 = vpop.trf.xlu0
    %v3412 = vpop.trf.xlu0
    %v3413 = vpop.trf.xlu0
    %v3414 = vpop.trf.xlu0
    %v3415 = vpop.trf.xlu0
    %v3416 = vpop.trf.xlu0
    %v3417 = vpop.trf.xlu0
    %3418 = vxpose.xlu0.b32.start [1/16] %v3224, 128
    %3419 = vxpose.xlu0.b32.cont [2/16] %v3226, 128
    %3420 = vxpose.xlu0.b32.cont [3/16] %v3229, 128
    %3421 = vxpose.xlu0.b32.cont [4/16] %v3231, 128
    %3422 = vxpose.xlu0.b32.cont [5/16] %v3234, 128
    %3423 = vxpose.xlu0.b32.cont [6/16] %v3236, 128
    %3424 = vxpose.xlu0.b32.cont [7/16] %v3239, 128
    %3425 = vxpose.xlu0.b32.cont [8/16] %v3241, 128
    %3426 = vxpose.xlu0.b32.cont [9/16] %v3244, 128
    %3427 = vxpose.xlu0.b32.cont [10/16] %v3246, 128
    %3428 = vxpose.xlu0.b32.cont [11/16] %v3249, 128
    %3429 = vxpose.xlu0.b32.cont [12/16] %v3251, 128
    %3430 = vxpose.xlu0.b32.cont [13/16] %v3254, 128
    %3431 = vxpose.xlu0.b32.cont [14/16] %v3256, 128
    %3432 = vxpose.xlu0.b32.cont [15/16] %v3259, 128
    %3433 = vxpose.xlu0.b32.end [16/16] %v3261, 128
    %v3434 = vpop.trf.xlu0
    %v3435 = vpop.trf.xlu0
    %v3436 = vpop.trf.xlu0
    %v3437 = vpop.trf.xlu0
    %v3438 = vpop.trf.xlu0
    %v3439 = vpop.trf.xlu0
    %v3440 = vpop.trf.xlu0
    %v3441 = vpop.trf.xlu0
    %v3442 = vpop.trf.xlu0
    %v3443 = vpop.trf.xlu0
    %v3444 = vpop.trf.xlu0
    %v3445 = vpop.trf.xlu0
    %v3446 = vpop.trf.xlu0
    %v3447 = vpop.trf.xlu0
    %v3448 = vpop.trf.xlu0
    %v3449 = vpop.trf.xlu0
    %3450 = vst [vmem:[#allocation2 + $0x20] sm:$0xff] %v3338
    %3451 = vst [vmem:[#allocation2 + $0x28] sm:$0xff] %v3370
    %3452 = vst [vmem:[#allocation2 + $0x30] sm:$0xff] %v3402
    %3453 = vst [vmem:[#allocation2 + $0x38] sm:$0xff] %v3434
    %v3454 = vrot.slane %v2856, 2
    %v3455 = vrot.slane %v2602, 2
    %v3456 = vsel %vm1011, %v3454, %v3455
    %v3457 = vrot.slane %v2888, 2
    %v3458 = vsel %vm1011, %v3455, %v3457
    %v3459 = vrot.slane %v2857, 2
    %v3460 = vrot.slane %v2605, 2
    %v3461 = vsel %vm1011, %v3459, %v3460
    %v3462 = vrot.slane %v2889, 2
    %v3463 = vsel %vm1011, %v3460, %v3462
    %v3464 = vrot.slane %v2858, 2
    %v3465 = vrot.slane %v2608, 2
    %v3466 = vsel %vm1011, %v3464, %v3465
    %v3467 = vrot.slane %v2890, 2
    %v3468 = vsel %vm1011, %v3465, %v3467
    %v3469 = vrot.slane %v2859, 2
    %v3470 = vrot.slane %v2611, 2
    %v3471 = vsel %vm1011, %v3469, %v3470
    %v3472 = vrot.slane %v2891, 2
    %v3473 = vsel %vm1011, %v3470, %v3472
    %v3474 = vrot.slane %v2860, 2
    %v3475 = vrot.slane %v2614, 2
    %v3476 = vsel %vm1011, %v3474, %v3475
    %v3477 = vrot.slane %v2892, 2
    %v3478 = vsel %vm1011, %v3475, %v3477
    %v3479 = vrot.slane %v2861, 2
    %v3480 = vrot.slane %v2617, 2
    %v3481 = vsel %vm1011, %v3479, %v3480
    %v3482 = vrot.slane %v2893, 2
    %v3483 = vsel %vm1011, %v3480, %v3482
    %v3484 = vrot.slane %v2862, 2
    %v3485 = vrot.slane %v2620, 2
    %v3486 = vsel %vm1011, %v3484, %v3485
    %v3487 = vrot.slane %v2894, 2
    %v3488 = vsel %vm1011, %v3485, %v3487
    %v3489 = vrot.slane %v2863, 2
    %v3490 = vrot.slane %v2623, 2
    %v3491 = vsel %vm1011, %v3489, %v3490
    %v3492 = vrot.slane %v2895, 2
    %v3493 = vsel %vm1011, %v3490, %v3492
    %v3494 = vrot.slane %v2864, 2
    %v3495 = vrot.slane %v2626, 2
    %v3496 = vsel %vm1011, %v3494, %v3495
    %v3497 = vrot.slane %v2896, 2
    %v3498 = vsel %vm1011, %v3495, %v3497
    %v3499 = vrot.slane %v2865, 2
    %v3500 = vrot.slane %v2629, 2
    %v3501 = vsel %vm1011, %v3499, %v3500
    %v3502 = vrot.slane %v2897, 2
    %v3503 = vsel %vm1011, %v3500, %v3502
    %v3504 = vrot.slane %v2866, 2
    %v3505 = vrot.slane %v2632, 2
    %v3506 = vsel %vm1011, %v3504, %v3505
    %v3507 = vrot.slane %v2898, 2
    %v3508 = vsel %vm1011, %v3505, %v3507
    %v3509 = vrot.slane %v2867, 2
    %v3510 = vrot.slane %v2635, 2
    %v3511 = vsel %vm1011, %v3509, %v3510
    %v3512 = vrot.slane %v2899, 2
    %v3513 = vsel %vm1011, %v3510, %v3512
    %v3514 = vrot.slane %v2868, 2
    %v3515 = vrot.slane %v2638, 2
    %v3516 = vsel %vm1011, %v3514, %v3515
    %v3517 = vrot.slane %v2900, 2
    %v3518 = vsel %vm1011, %v3515, %v3517
    %v3519 = vrot.slane %v2869, 2
    %v3520 = vrot.slane %v2641, 2
    %v3521 = vsel %vm1011, %v3519, %v3520
    %v3522 = vrot.slane %v2901, 2
    %v3523 = vsel %vm1011, %v3520, %v3522
    %v3524 = vrot.slane %v2870, 2
    %v3525 = vrot.slane %v2644, 2
    %v3526 = vsel %vm1011, %v3524, %v3525
    %v3527 = vrot.slane %v2902, 2
    %v3528 = vsel %vm1011, %v3525, %v3527
    %v3529 = vrot.slane %v2872, 2
    %v3530 = vrot.slane %v2650, 2
    %v3531 = vsel %vm1011, %v3529, %v3530
    %v3532 = vrot.slane %v2904, 2
    %v3533 = vsel %vm1011, %v3530, %v3532
    %v3534 = vrot.slane %v2873, 2
    %v3535 = vrot.slane %v2653, 2
    %v3536 = vsel %vm1011, %v3534, %v3535
    %v3537 = vrot.slane %v2905, 2
    %v3538 = vsel %vm1011, %v3535, %v3537
    %v3539 = vrot.slane %v2874, 2
    %v3540 = vrot.slane %v2656, 2
    %v3541 = vsel %vm1011, %v3539, %v3540
    %v3542 = vrot.slane %v2906, 2
    %v3543 = vsel %vm1011, %v3540, %v3542
    %v3544 = vrot.slane %v2875, 2
    %v3545 = vrot.slane %v2659, 2
    %v3546 = vsel %vm1011, %v3544, %v3545
    %v3547 = vrot.slane %v2907, 2
    %v3548 = vsel %vm1011, %v3545, %v3547
    %v3549 = vrot.slane %v2876, 2
    %v3550 = vrot.slane %v2662, 2
    %v3551 = vsel %vm1011, %v3549, %v3550
    %v3552 = vrot.slane %v2908, 2
    %v3553 = vsel %vm1011, %v3550, %v3552
    %v3554 = vrot.slane %v2877, 2
    %v3555 = vrot.slane %v2665, 2
    %v3556 = vsel %vm1011, %v3554, %v3555
    %v3557 = vrot.slane %v2909, 2
    %v3558 = vsel %vm1011, %v3555, %v3557
    %v3559 = vrot.slane %v2878, 2
    %v3560 = vrot.slane %v2668, 2
    %v3561 = vsel %vm1011, %v3559, %v3560
    %v3562 = vrot.slane %v2910, 2
    %v3563 = vsel %vm1011, %v3560, %v3562
    %v3564 = vrot.slane %v2879, 2
    %v3565 = vrot.slane %v2671, 2
    %v3566 = vsel %vm1011, %v3564, %v3565
    %v3567 = vrot.slane %v2911, 2
    %v3568 = vsel %vm1011, %v3565, %v3567
    %v3569 = vrot.slane %v2880, 2
    %v3570 = vrot.slane %v2674, 2
    %v3571 = vsel %vm1011, %v3569, %v3570
    %v3572 = vrot.slane %v2912, 2
    %v3573 = vsel %vm1011, %v3570, %v3572
    %v3574 = vrot.slane %v2881, 2
    %v3575 = vrot.slane %v2677, 2
    %v3576 = vsel %vm1011, %v3574, %v3575
    %v3577 = vrot.slane %v2913, 2
    %v3578 = vsel %vm1011, %v3575, %v3577
    %v3579 = vrot.slane %v2882, 2
    %v3580 = vrot.slane %v2680, 2
    %v3581 = vsel %vm1011, %v3579, %v3580
    %v3582 = vrot.slane %v2914, 2
    %v3583 = vsel %vm1011, %v3580, %v3582
    %v3584 = vrot.slane %v2883, 2
    %v3585 = vrot.slane %v2683, 2
    %v3586 = vsel %vm1011, %v3584, %v3585
    %v3587 = vrot.slane %v2915, 2
    %v3588 = vsel %vm1011, %v3585, %v3587
    %v3589 = vrot.slane %v2884, 2
    %v3590 = vrot.slane %v2686, 2
    %v3591 = vsel %vm1011, %v3589, %v3590
    %v3592 = vrot.slane %v2916, 2
    %v3593 = vsel %vm1011, %v3590, %v3592
    %v3594 = vrot.slane %v2885, 2
    %v3595 = vrot.slane %v2689, 2
    %v3596 = vsel %vm1011, %v3594, %v3595
    %v3597 = vrot.slane %v2917, 2
    %v3598 = vsel %vm1011, %v3595, %v3597
    %v3599 = vrot.slane %v2886, 2
    %v3600 = vrot.slane %v2692, 2
    %v3601 = vsel %vm1011, %v3599, %v3600
    %v3602 = vrot.slane %v2918, 2
    %v3603 = vsel %vm1011, %v3600, %v3602
    %3664 = vxpose.xlu0.b32.start [1/16] %v3456, 128
    %3665 = vxpose.xlu0.b32.cont [2/16] %v3458, 128
    %3666 = vxpose.xlu0.b32.cont [3/16] %v3456, 128
    %3667 = vxpose.xlu0.b32.cont [4/16] %v3458, 128
    %3668 = vxpose.xlu0.b32.cont [5/16] %v3461, 128
    %3669 = vxpose.xlu0.b32.cont [6/16] %v3463, 128
    %3670 = vxpose.xlu0.b32.cont [7/16] %v3466, 128
    %3671 = vxpose.xlu0.b32.cont [8/16] %v3468, 128
    %3672 = vxpose.xlu0.b32.cont [9/16] %v3471, 128
    %3673 = vxpose.xlu0.b32.cont [10/16] %v3473, 128
    %3674 = vxpose.xlu0.b32.cont [11/16] %v3476, 128
    %3675 = vxpose.xlu0.b32.cont [12/16] %v3478, 128
    %3676 = vxpose.xlu0.b32.cont [13/16] %v3481, 128
    %3677 = vxpose.xlu0.b32.cont [14/16] %v3483, 128
    %3678 = vxpose.xlu0.b32.cont [15/16] %v3486, 128
    %3679 = vxpose.xlu0.b32.end [16/16] %v3488, 128
    %v3680 = vpop.trf.xlu0
    %v3681 = vpop.trf.xlu0
    %v3682 = vpop.trf.xlu0
    %v3683 = vpop.trf.xlu0
    %v3684 = vpop.trf.xlu0
    %v3685 = vpop.trf.xlu0
    %v3686 = vpop.trf.xlu0
    %v3687 = vpop.trf.xlu0
    %v3688 = vpop.trf.xlu0
    %v3689 = vpop.trf.xlu0
    %v3690 = vpop.trf.xlu0
    %v3691 = vpop.trf.xlu0
    %v3692 = vpop.trf.xlu0
    %v3693 = vpop.trf.xlu0
    %v3694 = vpop.trf.xlu0
    %v3695 = vpop.trf.xlu0
    %3696 = vxpose.xlu0.b32.start [1/16] %v3491, 128
    %3697 = vxpose.xlu0.b32.cont [2/16] %v3493, 128
    %3698 = vxpose.xlu0.b32.cont [3/16] %v3496, 128
    %3699 = vxpose.xlu0.b32.cont [4/16] %v3498, 128
    %3700 = vxpose.xlu0.b32.cont [5/16] %v3501, 128
    %3701 = vxpose.xlu0.b32.cont [6/16] %v3503, 128
    %3702 = vxpose.xlu0.b32.cont [7/16] %v3506, 128
    %3703 = vxpose.xlu0.b32.cont [8/16] %v3508, 128
    %3704 = vxpose.xlu0.b32.cont [9/16] %v3511, 128
    %3705 = vxpose.xlu0.b32.cont [10/16] %v3513, 128
    %3706 = vxpose.xlu0.b32.cont [11/16] %v3516, 128
    %3707 = vxpose.xlu0.b32.cont [12/16] %v3518, 128
    %3708 = vxpose.xlu0.b32.cont [13/16] %v3521, 128
    %3709 = vxpose.xlu0.b32.cont [14/16] %v3523, 128
    %3710 = vxpose.xlu0.b32.cont [15/16] %v3526, 128
    %3711 = vxpose.xlu0.b32.end [16/16] %v3528, 128
    %v3712 = vpop.trf.xlu0
    %v3713 = vpop.trf.xlu0
    %v3714 = vpop.trf.xlu0
    %v3715 = vpop.trf.xlu0
    %v3716 = vpop.trf.xlu0
    %v3717 = vpop.trf.xlu0
    %v3718 = vpop.trf.xlu0
    %v3719 = vpop.trf.xlu0
    %v3720 = vpop.trf.xlu0
    %v3721 = vpop.trf.xlu0
    %v3722 = vpop.trf.xlu0
    %v3723 = vpop.trf.xlu0
    %v3724 = vpop.trf.xlu0
    %v3725 = vpop.trf.xlu0
    %v3726 = vpop.trf.xlu0
    %v3727 = vpop.trf.xlu0
    %3728 = vxpose.xlu0.b32.start [1/16] %v3531, 128
    %3729 = vxpose.xlu0.b32.cont [2/16] %v3533, 128
    %3730 = vxpose.xlu0.b32.cont [3/16] %v3531, 128
    %3731 = vxpose.xlu0.b32.cont [4/16] %v3533, 128
    %3732 = vxpose.xlu0.b32.cont [5/16] %v3536, 128
    %3733 = vxpose.xlu0.b32.cont [6/16] %v3538, 128
    %3734 = vxpose.xlu0.b32.cont [7/16] %v3541, 128
    %3735 = vxpose.xlu0.b32.cont [8/16] %v3543, 128
    %3736 = vxpose.xlu0.b32.cont [9/16] %v3546, 128
    %3737 = vxpose.xlu0.b32.cont [10/16] %v3548, 128
    %3738 = vxpose.xlu0.b32.cont [11/16] %v3551, 128
    %3739 = vxpose.xlu0.b32.cont [12/16] %v3553, 128
    %3740 = vxpose.xlu0.b32.cont [13/16] %v3556, 128
    %3741 = vxpose.xlu0.b32.cont [14/16] %v3558, 128
    %3742 = vxpose.xlu0.b32.cont [15/16] %v3561, 128
    %3743 = vxpose.xlu0.b32.end [16/16] %v3563, 128
    %v3744 = vpop.trf.xlu0
    %v3745 = vpop.trf.xlu0
    %v3746 = vpop.trf.xlu0
    %v3747 = vpop.trf.xlu0
    %v3748 = vpop.trf.xlu0
    %v3749 = vpop.trf.xlu0
    %v3750 = vpop.trf.xlu0
    %v3751 = vpop.trf.xlu0
    %v3752 = vpop.trf.xlu0
    %v3753 = vpop.trf.xlu0
    %v3754 = vpop.trf.xlu0
    %v3755 = vpop.trf.xlu0
    %v3756 = vpop.trf.xlu0
    %v3757 = vpop.trf.xlu0
    %v3758 = vpop.trf.xlu0
    %v3759 = vpop.trf.xlu0
    %3760 = vxpose.xlu0.b32.start [1/16] %v3566, 128
    %3761 = vxpose.xlu0.b32.cont [2/16] %v3568, 128
    %3762 = vxpose.xlu0.b32.cont [3/16] %v3571, 128
    %3763 = vxpose.xlu0.b32.cont [4/16] %v3573, 128
    %3764 = vxpose.xlu0.b32.cont [5/16] %v3576, 128
    %3765 = vxpose.xlu0.b32.cont [6/16] %v3578, 128
    %3766 = vxpose.xlu0.b32.cont [7/16] %v3581, 128
    %3767 = vxpose.xlu0.b32.cont [8/16] %v3583, 128
    %3768 = vxpose.xlu0.b32.cont [9/16] %v3586, 128
    %3769 = vxpose.xlu0.b32.cont [10/16] %v3588, 128
    %3770 = vxpose.xlu0.b32.cont [11/16] %v3591, 128
    %3771 = vxpose.xlu0.b32.cont [12/16] %v3593, 128
    %3772 = vxpose.xlu0.b32.cont [13/16] %v3596, 128
    %3773 = vxpose.xlu0.b32.cont [14/16] %v3598, 128
    %3774 = vxpose.xlu0.b32.cont [15/16] %v3601, 128
    %3775 = vxpose.xlu0.b32.end [16/16] %v3603, 128
    %v3776 = vpop.trf.xlu0
    %v3777 = vpop.trf.xlu0
    %v3778 = vpop.trf.xlu0
    %v3779 = vpop.trf.xlu0
    %v3780 = vpop.trf.xlu0
    %v3781 = vpop.trf.xlu0
    %v3782 = vpop.trf.xlu0
    %v3783 = vpop.trf.xlu0
    %v3784 = vpop.trf.xlu0
    %v3785 = vpop.trf.xlu0
    %v3786 = vpop.trf.xlu0
    %v3787 = vpop.trf.xlu0
    %v3788 = vpop.trf.xlu0
    %v3789 = vpop.trf.xlu0
    %v3790 = vpop.trf.xlu0
    %v3791 = vpop.trf.xlu0
    %3792 = vst [vmem:[#allocation2 + $0x40] sm:$0xff] %v3680
    %3793 = vst [vmem:[#allocation2 + $0x48] sm:$0xff] %v3712
    %3794 = vst [vmem:[#allocation2 + $0x50] sm:$0xff] %v3744
    %3795 = vst [vmem:[#allocation2 + $0x58] sm:$0xff] %v3776
    %3796 = vxpose.xlu0.b32.start [1/16] %v2856, 128
    %3797 = vxpose.xlu0.b32.cont [2/16] %v2602, 128
    %3798 = vxpose.xlu0.b32.cont [3/16] %v2857, 128
    %3799 = vxpose.xlu0.b32.cont [4/16] %v2605, 128
    %3800 = vxpose.xlu0.b32.cont [5/16] %v2858, 128
    %3801 = vxpose.xlu0.b32.cont [6/16] %v2608, 128
    %3802 = vxpose.xlu0.b32.cont [7/16] %v2859, 128
    %3803 = vxpose.xlu0.b32.cont [8/16] %v2611, 128
    %3804 = vxpose.xlu0.b32.cont [9/16] %v2860, 128
    %3805 = vxpose.xlu0.b32.cont [10/16] %v2614, 128
    %3806 = vxpose.xlu0.b32.cont [11/16] %v2861, 128
    %3807 = vxpose.xlu0.b32.cont [12/16] %v2617, 128
    %3808 = vxpose.xlu0.b32.cont [13/16] %v2862, 128
    %3809 = vxpose.xlu0.b32.cont [14/16] %v2620, 128
    %3810 = vxpose.xlu0.b32.cont [15/16] %v2863, 128
    %3811 = vxpose.xlu0.b32.end [16/16] %v2623, 128
    %v3812 = vpop.trf.xlu0
    %v3813 = vpop.trf.xlu0
    %v3814 = vpop.trf.xlu0
    %v3815 = vpop.trf.xlu0
    %v3816 = vpop.trf.xlu0
    %v3817 = vpop.trf.xlu0
    %v3818 = vpop.trf.xlu0
    %v3819 = vpop.trf.xlu0
    %v3820 = vpop.trf.xlu0
    %v3821 = vpop.trf.xlu0
    %v3822 = vpop.trf.xlu0
    %v3823 = vpop.trf.xlu0
    %v3824 = vpop.trf.xlu0
    %v3825 = vpop.trf.xlu0
    %v3826 = vpop.trf.xlu0
    %v3827 = vpop.trf.xlu0
    %3828 = vxpose.xlu0.b32.start [1/16] %v2864, 128
    %3829 = vxpose.xlu0.b32.cont [2/16] %v2626, 128
    %3830 = vxpose.xlu0.b32.cont [3/16] %v2865, 128
    %3831 = vxpose.xlu0.b32.cont [4/16] %v2629, 128
    %3832 = vxpose.xlu0.b32.cont [5/16] %v2866, 128
    %3833 = vxpose.xlu0.b32.cont [6/16] %v2632, 128
    %3834 = vxpose.xlu0.b32.cont [7/16] %v2867, 128
    %3835 = vxpose.xlu0.b32.cont [8/16] %v2635, 128
    %3836 = vxpose.xlu0.b32.cont [9/16] %v2868, 128
    %3837 = vxpose.xlu0.b32.cont [10/16] %v2638, 128
    %3838 = vxpose.xlu0.b32.cont [11/16] %v2869, 128
    %3839 = vxpose.xlu0.b32.cont [12/16] %v2641, 128
    %3840 = vxpose.xlu0.b32.cont [13/16] %v2870, 128
    %3841 = vxpose.xlu0.b32.cont [14/16] %v2644, 128
    %3842 = vxpose.xlu0.b32.cont [15/16] %v2871, 128
    %3843 = vxpose.xlu0.b32.end [16/16] %v2647, 128
    %v3844 = vpop.trf.xlu0
    %v3845 = vpop.trf.xlu0
    %v3846 = vpop.trf.xlu0
    %v3847 = vpop.trf.xlu0
    %v3848 = vpop.trf.xlu0
    %v3849 = vpop.trf.xlu0
    %v3850 = vpop.trf.xlu0
    %v3851 = vpop.trf.xlu0
    %v3852 = vpop.trf.xlu0
    %v3853 = vpop.trf.xlu0
    %v3854 = vpop.trf.xlu0
    %v3855 = vpop.trf.xlu0
    %v3856 = vpop.trf.xlu0
    %v3857 = vpop.trf.xlu0
    %v3858 = vpop.trf.xlu0
    %v3859 = vpop.trf.xlu0
    %3860 = vxpose.xlu0.b32.start [1/16] %v2872, 128
    %3861 = vxpose.xlu0.b32.cont [2/16] %v2650, 128
    %3862 = vxpose.xlu0.b32.cont [3/16] %v2873, 128
    %3863 = vxpose.xlu0.b32.cont [4/16] %v2653, 128
    %3864 = vxpose.xlu0.b32.cont [5/16] %v2874, 128
    %3865 = vxpose.xlu0.b32.cont [6/16] %v2656, 128
    %3866 = vxpose.xlu0.b32.cont [7/16] %v2875, 128
    %3867 = vxpose.xlu0.b32.cont [8/16] %v2659, 128
    %3868 = vxpose.xlu0.b32.cont [9/16] %v2876, 128
    %3869 = vxpose.xlu0.b32.cont [10/16] %v2662, 128
    %3870 = vxpose.xlu0.b32.cont [11/16] %v2877, 128
    %3871 = vxpose.xlu0.b32.cont [12/16] %v2665, 128
    %3872 = vxpose.xlu0.b32.cont [13/16] %v2878, 128
    %3873 = vxpose.xlu0.b32.cont [14/16] %v2668, 128
    %3874 = vxpose.xlu0.b32.cont [15/16] %v2879, 128
    %3875 = vxpose.xlu0.b32.end [16/16] %v2671, 128
    %v3876 = vpop.trf.xlu0
    %v3877 = vpop.trf.xlu0
    %v3878 = vpop.trf.xlu0
    %v3879 = vpop.trf.xlu0
    %v3880 = vpop.trf.xlu0
    %v3881 = vpop.trf.xlu0
    %v3882 = vpop.trf.xlu0
    %v3883 = vpop.trf.xlu0
    %v3884 = vpop.trf.xlu0
    %v3885 = vpop.trf.xlu0
    %v3886 = vpop.trf.xlu0
    %v3887 = vpop.trf.xlu0
    %v3888 = vpop.trf.xlu0
    %v3889 = vpop.trf.xlu0
    %v3890 = vpop.trf.xlu0
    %v3891 = vpop.trf.xlu0
    %3892 = vxpose.xlu0.b32.start [1/16] %v2880, 128
    %3893 = vxpose.xlu0.b32.cont [2/16] %v2674, 128
    %3894 = vxpose.xlu0.b32.cont [3/16] %v2881, 128
    %3895 = vxpose.xlu0.b32.cont [4/16] %v2677, 128
    %3896 = vxpose.xlu0.b32.cont [5/16] %v2882, 128
    %3897 = vxpose.xlu0.b32.cont [6/16] %v2680, 128
    %3898 = vxpose.xlu0.b32.cont [7/16] %v2883, 128
    %3899 = vxpose.xlu0.b32.cont [8/16] %v2683, 128
    %3900 = vxpose.xlu0.b32.cont [9/16] %v2884, 128
    %3901 = vxpose.xlu0.b32.cont [10/16] %v2686, 128
    %3902 = vxpose.xlu0.b32.cont [11/16] %v2885, 128
    %3903 = vxpose.xlu0.b32.cont [12/16] %v2689, 128
    %3904 = vxpose.xlu0.b32.cont [13/16] %v2886, 128
    %3905 = vxpose.xlu0.b32.cont [14/16] %v2692, 128
    %3906 = vxpose.xlu0.b32.cont [15/16] %v2887, 128
    %3907 = vxpose.xlu0.b32.end [16/16] %v2695, 128
    %v3908 = vpop.trf.xlu0
    %v3909 = vpop.trf.xlu0
    %v3910 = vpop.trf.xlu0
    %v3911 = vpop.trf.xlu0
    %v3912 = vpop.trf.xlu0
    %v3913 = vpop.trf.xlu0
    %v3914 = vpop.trf.xlu0
    %v3915 = vpop.trf.xlu0
    %v3916 = vpop.trf.xlu0
    %v3917 = vpop.trf.xlu0
    %v3918 = vpop.trf.xlu0
    %v3919 = vpop.trf.xlu0
    %v3920 = vpop.trf.xlu0
    %v3921 = vpop.trf.xlu0
    %v3922 = vpop.trf.xlu0
    %v3923 = vpop.trf.xlu0
    %3924 = vst [vmem:[#allocation2 + $0x60] sm:$0xff] %v3812
    %3925 = vst [vmem:[#allocation2 + $0x68] sm:$0xff] %v3844
    %3926 = vst [vmem:[#allocation2 + $0x70] sm:$0xff] %v3876
    %3927 = vst [vmem:[#allocation2 + $0x78] sm:$0xff] %v3908
    %v3932 = vrot.slane %v2871, 1
    %v3933 = vrot.slane %v2647, 1
    %v3934 = vsel %vm668, %v3932, %v3933
    %v3935 = vrot.slane %v2903, 1
    %v3936 = vsel %vm668, %v3933, %v3935
    %v3937 = vrot.slane %v2887, 1
    %v3938 = vrot.slane %v2695, 1
    %v3939 = vsel %vm668, %v3937, %v3938
    %v3940 = vrot.slane %v2919, 1
    %v3941 = vsel %vm668, %v3938, %v3940
    %3946 = vxpose.xlu0.b32.start [1/16] %v3114, 128
    %3947 = vxpose.xlu0.b32.cont [2/16] %v3116, 128
    %3948 = vxpose.xlu0.b32.cont [3/16] %v3119, 128
    %3949 = vxpose.xlu0.b32.cont [4/16] %v3121, 128
    %3950 = vxpose.xlu0.b32.cont [5/16] %v3124, 128
    %3951 = vxpose.xlu0.b32.cont [6/16] %v3126, 128
    %3952 = vxpose.xlu0.b32.cont [7/16] %v3129, 128
    %3953 = vxpose.xlu0.b32.cont [8/16] %v3131, 128
    %3954 = vxpose.xlu0.b32.cont [9/16] %v3134, 128
    %3955 = vxpose.xlu0.b32.cont [10/16] %v3136, 128
    %3956 = vxpose.xlu0.b32.cont [11/16] %v3139, 128
    %3957 = vxpose.xlu0.b32.cont [12/16] %v3141, 128
    %3958 = vxpose.xlu0.b32.cont [13/16] %v3144, 128
    %3959 = vxpose.xlu0.b32.cont [14/16] %v3146, 128
    %3960 = vxpose.xlu0.b32.cont [15/16] %v3149, 128
    %3961 = vxpose.xlu0.b32.end [16/16] %v3151, 128
    %v3962 = vpop.trf.xlu0
    %v3963 = vpop.trf.xlu0
    %v3964 = vpop.trf.xlu0
    %v3965 = vpop.trf.xlu0
    %v3966 = vpop.trf.xlu0
    %v3967 = vpop.trf.xlu0
    %v3968 = vpop.trf.xlu0
    %v3969 = vpop.trf.xlu0
    %v3970 = vpop.trf.xlu0
    %v3971 = vpop.trf.xlu0
    %v3972 = vpop.trf.xlu0
    %v3973 = vpop.trf.xlu0
    %v3974 = vpop.trf.xlu0
    %v3975 = vpop.trf.xlu0
    %v3976 = vpop.trf.xlu0
    %v3977 = vpop.trf.xlu0
    %3978 = vxpose.xlu0.b32.start [1/16] %v3154, 128
    %3979 = vxpose.xlu0.b32.cont [2/16] %v3156, 128
    %3980 = vxpose.xlu0.b32.cont [3/16] %v3159, 128
    %3981 = vxpose.xlu0.b32.cont [4/16] %v3161, 128
    %3982 = vxpose.xlu0.b32.cont [5/16] %v3164, 128
    %3983 = vxpose.xlu0.b32.cont [6/16] %v3166, 128
    %3984 = vxpose.xlu0.b32.cont [7/16] %v3169, 128
    %3985 = vxpose.xlu0.b32.cont [8/16] %v3171, 128
    %3986 = vxpose.xlu0.b32.cont [9/16] %v3174, 128
    %3987 = vxpose.xlu0.b32.cont [10/16] %v3176, 128
    %3988 = vxpose.xlu0.b32.cont [11/16] %v3179, 128
    %3989 = vxpose.xlu0.b32.cont [12/16] %v3181, 128
    %3990 = vxpose.xlu0.b32.cont [13/16] %v3184, 128
    %3991 = vxpose.xlu0.b32.cont [14/16] %v3186, 128
    %3992 = vxpose.xlu0.b32.cont [15/16] %v3934, 128
    %3993 = vxpose.xlu0.b32.end [16/16] %v3936, 128
    %v3994 = vpop.trf.xlu0
    %v3995 = vpop.trf.xlu0
    %v3996 = vpop.trf.xlu0
    %v3997 = vpop.trf.xlu0
    %v3998 = vpop.trf.xlu0
    %v3999 = vpop.trf.xlu0
    %v4000 = vpop.trf.xlu0
    %v4001 = vpop.trf.xlu0
    %v4002 = vpop.trf.xlu0
    %v4003 = vpop.trf.xlu0
    %v4004 = vpop.trf.xlu0
    %v4005 = vpop.trf.xlu0
    %v4006 = vpop.trf.xlu0
    %v4007 = vpop.trf.xlu0
    %v4008 = vpop.trf.xlu0
    %v4009 = vpop.trf.xlu0
    %4010 = vxpose.xlu0.b32.start [1/16] %v3189, 128
    %4011 = vxpose.xlu0.b32.cont [2/16] %v3191, 128
    %4012 = vxpose.xlu0.b32.cont [3/16] %v3194, 128
    %4013 = vxpose.xlu0.b32.cont [4/16] %v3196, 128
    %4014 = vxpose.xlu0.b32.cont [5/16] %v3199, 128
    %4015 = vxpose.xlu0.b32.cont [6/16] %v3201, 128
    %4016 = vxpose.xlu0.b32.cont [7/16] %v3204, 128
    %4017 = vxpose.xlu0.b32.cont [8/16] %v3206, 128
    %4018 = vxpose.xlu0.b32.cont [9/16] %v3209, 128
    %4019 = vxpose.xlu0.b32.cont [10/16] %v3211, 128
    %4020 = vxpose.xlu0.b32.cont [11/16] %v3214, 128
    %4021 = vxpose.xlu0.b32.cont [12/16] %v3216, 128
    %4022 = vxpose.xlu0.b32.cont [13/16] %v3219, 128
    %4023 = vxpose.xlu0.b32.cont [14/16] %v3221, 128
    %4024 = vxpose.xlu0.b32.cont [15/16] %v3224, 128
    %4025 = vxpose.xlu0.b32.end [16/16] %v3226, 128
    %v4026 = vpop.trf.xlu0
    %v4027 = vpop.trf.xlu0
    %v4028 = vpop.trf.xlu0
    %v4029 = vpop.trf.xlu0
    %v4030 = vpop.trf.xlu0
    %v4031 = vpop.trf.xlu0
    %v4032 = vpop.trf.xlu0
    %v4033 = vpop.trf.xlu0
    %v4034 = vpop.trf.xlu0
    %v4035 = vpop.trf.xlu0
    %v4036 = vpop.trf.xlu0
    %v4037 = vpop.trf.xlu0
    %v4038 = vpop.trf.xlu0
    %v4039 = vpop.trf.xlu0
    %v4040 = vpop.trf.xlu0
    %v4041 = vpop.trf.xlu0
    %4042 = vxpose.xlu0.b32.start [1/16] %v3229, 128
    %4043 = vxpose.xlu0.b32.cont [2/16] %v3231, 128
    %4044 = vxpose.xlu0.b32.cont [3/16] %v3234, 128
    %4045 = vxpose.xlu0.b32.cont [4/16] %v3236, 128
    %4046 = vxpose.xlu0.b32.cont [5/16] %v3239, 128
    %4047 = vxpose.xlu0.b32.cont [6/16] %v3241, 128
    %4048 = vxpose.xlu0.b32.cont [7/16] %v3244, 128
    %4049 = vxpose.xlu0.b32.cont [8/16] %v3246, 128
    %4050 = vxpose.xlu0.b32.cont [9/16] %v3249, 128
    %4051 = vxpose.xlu0.b32.cont [10/16] %v3251, 128
    %4052 = vxpose.xlu0.b32.cont [11/16] %v3254, 128
    %4053 = vxpose.xlu0.b32.cont [12/16] %v3256, 128
    %4054 = vxpose.xlu0.b32.cont [13/16] %v3259, 128
    %4055 = vxpose.xlu0.b32.cont [14/16] %v3261, 128
    %4056 = vxpose.xlu0.b32.cont [15/16] %v3939, 128
    %4057 = vxpose.xlu0.b32.end [16/16] %v3941, 128
    %v4058 = vpop.trf.xlu0
    %v4059 = vpop.trf.xlu0
    %v4060 = vpop.trf.xlu0
    %v4061 = vpop.trf.xlu0
    %v4062 = vpop.trf.xlu0
    %v4063 = vpop.trf.xlu0
    %v4064 = vpop.trf.xlu0
    %v4065 = vpop.trf.xlu0
    %v4066 = vpop.trf.xlu0
    %v4067 = vpop.trf.xlu0
    %v4068 = vpop.trf.xlu0
    %v4069 = vpop.trf.xlu0
    %v4070 = vpop.trf.xlu0
    %v4071 = vpop.trf.xlu0
    %v4072 = vpop.trf.xlu0
    %v4073 = vpop.trf.xlu0
    %4074 = vst [vmem:[#allocation2 + $0x80] sm:$0xff] %v3962
    %4075 = vst [vmem:[#allocation2 + $0x88] sm:$0xff] %v3994
    %4076 = vst [vmem:[#allocation2 + $0x90] sm:$0xff] %v4026
    %4077 = vst [vmem:[#allocation2 + $0x98] sm:$0xff] %v4058
    %v4078 = vrot.slane %v2871, 2
    %v4079 = vrot.slane %v2647, 2
    %v4080 = vsel %vm1011, %v4078, %v4079
    %v4081 = vrot.slane %v2903, 2
    %v4082 = vsel %vm1011, %v4079, %v4081
    %v4083 = vrot.slane %v2887, 2
    %v4084 = vrot.slane %v2695, 2
    %v4085 = vsel %vm1011, %v4083, %v4084
    %v4086 = vrot.slane %v2919, 2
    %v4087 = vsel %vm1011, %v4084, %v4086
    %4092 = vxpose.xlu0.b32.start [1/16] %v3456, 128
    %4093 = vxpose.xlu0.b32.cont [2/16] %v3458, 128
    %4094 = vxpose.xlu0.b32.cont [3/16] %v3461, 128
    %4095 = vxpose.xlu0.b32.cont [4/16] %v3463, 128
    %4096 = vxpose.xlu0.b32.cont [5/16] %v3466, 128
    %4097 = vxpose.xlu0.b32.cont [6/16] %v3468, 128
    %4098 = vxpose.xlu0.b32.cont [7/16] %v3471, 128
    %4099 = vxpose.xlu0.b32.cont [8/16] %v3473, 128
    %4100 = vxpose.xlu0.b32.cont [9/16] %v3476, 128
    %4101 = vxpose.xlu0.b32.cont [10/16] %v3478, 128
    %4102 = vxpose.xlu0.b32.cont [11/16] %v3481, 128
    %4103 = vxpose.xlu0.b32.cont [12/16] %v3483, 128
    %4104 = vxpose.xlu0.b32.cont [13/16] %v3486, 128
    %4105 = vxpose.xlu0.b32.cont [14/16] %v3488, 128
    %4106 = vxpose.xlu0.b32.cont [15/16] %v3491, 128
    %4107 = vxpose.xlu0.b32.end [16/16] %v3493, 128
    %v4108 = vpop.trf.xlu0
    %v4109 = vpop.trf.xlu0
    %v4110 = vpop.trf.xlu0
    %v4111 = vpop.trf.xlu0
    %v4112 = vpop.trf.xlu0
    %v4113 = vpop.trf.xlu0
    %v4114 = vpop.trf.xlu0
    %v4115 = vpop.trf.xlu0
    %v4116 = vpop.trf.xlu0
    %v4117 = vpop.trf.xlu0
    %v4118 = vpop.trf.xlu0
    %v4119 = vpop.trf.xlu0
    %v4120 = vpop.trf.xlu0
    %v4121 = vpop.trf.xlu0
    %v4122 = vpop.trf.xlu0
    %v4123 = vpop.trf.xlu0
    %4124 = vxpose.xlu0.b32.start [1/16] %v3496, 128
    %4125 = vxpose.xlu0.b32.cont [2/16] %v3498, 128
    %4126 = vxpose.xlu0.b32.cont [3/16] %v3501, 128
    %4127 = vxpose.xlu0.b32.cont [4/16] %v3503, 128
    %4128 = vxpose.xlu0.b32.cont [5/16] %v3506, 128
    %4129 = vxpose.xlu0.b32.cont [6/16] %v3508, 128
    %4130 = vxpose.xlu0.b32.cont [7/16] %v3511, 128
    %4131 = vxpose.xlu0.b32.cont [8/16] %v3513, 128
    %4132 = vxpose.xlu0.b32.cont [9/16] %v3516, 128
    %4133 = vxpose.xlu0.b32.cont [10/16] %v3518, 128
    %4134 = vxpose.xlu0.b32.cont [11/16] %v3521, 128
    %4135 = vxpose.xlu0.b32.cont [12/16] %v3523, 128
    %4136 = vxpose.xlu0.b32.cont [13/16] %v3526, 128
    %4137 = vxpose.xlu0.b32.cont [14/16] %v3528, 128
    %4138 = vxpose.xlu0.b32.cont [15/16] %v4080, 128
    %4139 = vxpose.xlu0.b32.end [16/16] %v4082, 128
    %v4140 = vpop.trf.xlu0
    %v4141 = vpop.trf.xlu0
    %v4142 = vpop.trf.xlu0
    %v4143 = vpop.trf.xlu0
    %v4144 = vpop.trf.xlu0
    %v4145 = vpop.trf.xlu0
    %v4146 = vpop.trf.xlu0
    %v4147 = vpop.trf.xlu0
    %v4148 = vpop.trf.xlu0
    %v4149 = vpop.trf.xlu0
    %v4150 = vpop.trf.xlu0
    %v4151 = vpop.trf.xlu0
    %v4152 = vpop.trf.xlu0
    %v4153 = vpop.trf.xlu0
    %v4154 = vpop.trf.xlu0
    %v4155 = vpop.trf.xlu0
    %4156 = vxpose.xlu0.b32.start [1/16] %v3531, 128
    %4157 = vxpose.xlu0.b32.cont [2/16] %v3533, 128
    %4158 = vxpose.xlu0.b32.cont [3/16] %v3536, 128
    %4159 = vxpose.xlu0.b32.cont [4/16] %v3538, 128
    %4160 = vxpose.xlu0.b32.cont [5/16] %v3541, 128
    %4161 = vxpose.xlu0.b32.cont [6/16] %v3543, 128
    %4162 = vxpose.xlu0.b32.cont [7/16] %v3546, 128
    %4163 = vxpose.xlu0.b32.cont [8/16] %v3548, 128
    %4164 = vxpose.xlu0.b32.cont [9/16] %v3551, 128
    %4165 = vxpose.xlu0.b32.cont [10/16] %v3553, 128
    %4166 = vxpose.xlu0.b32.cont [11/16] %v3556, 128
    %4167 = vxpose.xlu0.b32.cont [12/16] %v3558, 128
    %4168 = vxpose.xlu0.b32.cont [13/16] %v3561, 128
    %4169 = vxpose.xlu0.b32.cont [14/16] %v3563, 128
    %4170 = vxpose.xlu0.b32.cont [15/16] %v3566, 128
    %4171 = vxpose.xlu0.b32.end [16/16] %v3568, 128
    %v4172 = vpop.trf.xlu0
    %v4173 = vpop.trf.xlu0
    %v4174 = vpop.trf.xlu0
    %v4175 = vpop.trf.xlu0
    %v4176 = vpop.trf.xlu0
    %v4177 = vpop.trf.xlu0
    %v4178 = vpop.trf.xlu0
    %v4179 = vpop.trf.xlu0
    %v4180 = vpop.trf.xlu0
    %v4181 = vpop.trf.xlu0
    %v4182 = vpop.trf.xlu0
    %v4183 = vpop.trf.xlu0
    %v4184 = vpop.trf.xlu0
    %v4185 = vpop.trf.xlu0
    %v4186 = vpop.trf.xlu0
    %v4187 = vpop.trf.xlu0
    %4188 = vxpose.xlu0.b32.start [1/16] %v3571, 128
    %4189 = vxpose.xlu0.b32.cont [2/16] %v3573, 128
    %4190 = vxpose.xlu0.b32.cont [3/16] %v3576, 128
    %4191 = vxpose.xlu0.b32.cont [4/16] %v3578, 128
    %4192 = vxpose.xlu0.b32.cont [5/16] %v3581, 128
    %4193 = vxpose.xlu0.b32.cont [6/16] %v3583, 128
    %4194 = vxpose.xlu0.b32.cont [7/16] %v3586, 128
    %4195 = vxpose.xlu0.b32.cont [8/16] %v3588, 128
    %4196 = vxpose.xlu0.b32.cont [9/16] %v3591, 128
    %4197 = vxpose.xlu0.b32.cont [10/16] %v3593, 128
    %4198 = vxpose.xlu0.b32.cont [11/16] %v3596, 128
    %4199 = vxpose.xlu0.b32.cont [12/16] %v3598, 128
    %4200 = vxpose.xlu0.b32.cont [13/16] %v3601, 128
    %4201 = vxpose.xlu0.b32.cont [14/16] %v3603, 128
    %4202 = vxpose.xlu0.b32.cont [15/16] %v4085, 128
    %4203 = vxpose.xlu0.b32.end [16/16] %v4087, 128
    %v4204 = vpop.trf.xlu0
    %v4205 = vpop.trf.xlu0
    %v4206 = vpop.trf.xlu0
    %v4207 = vpop.trf.xlu0
    %v4208 = vpop.trf.xlu0
    %v4209 = vpop.trf.xlu0
    %v4210 = vpop.trf.xlu0
    %v4211 = vpop.trf.xlu0
    %v4212 = vpop.trf.xlu0
    %v4213 = vpop.trf.xlu0
    %v4214 = vpop.trf.xlu0
    %v4215 = vpop.trf.xlu0
    %v4216 = vpop.trf.xlu0
    %v4217 = vpop.trf.xlu0
    %v4218 = vpop.trf.xlu0
    %v4219 = vpop.trf.xlu0
    %4220 = vst [vmem:[#allocation2 + $0xa0] sm:$0xff] %v4108
    %4221 = vst [vmem:[#allocation2 + $0xa8] sm:$0xff] %v4140
    %4222 = vst [vmem:[#allocation2 + $0xb0] sm:$0xff] %v4172
    %4223 = vst [vmem:[#allocation2 + $0xb8] sm:$0xff] %v4204
    %4224 = vxpose.xlu0.b32.start [1/16] %v2857, 128
    %4225 = vxpose.xlu0.b32.cont [2/16] %v2605, 128
    %4226 = vxpose.xlu0.b32.cont [3/16] %v2858, 128
    %4227 = vxpose.xlu0.b32.cont [4/16] %v2608, 128
    %4228 = vxpose.xlu0.b32.cont [5/16] %v2859, 128
    %4229 = vxpose.xlu0.b32.cont [6/16] %v2611, 128
    %4230 = vxpose.xlu0.b32.cont [7/16] %v2860, 128
    %4231 = vxpose.xlu0.b32.cont [8/16] %v2614, 128
    %4232 = vxpose.xlu0.b32.cont [9/16] %v2861, 128
    %4233 = vxpose.xlu0.b32.cont [10/16] %v2617, 128
    %4234 = vxpose.xlu0.b32.cont [11/16] %v2862, 128
    %4235 = vxpose.xlu0.b32.cont [12/16] %v2620, 128
    %4236 = vxpose.xlu0.b32.cont [13/16] %v2863, 128
    %4237 = vxpose.xlu0.b32.cont [14/16] %v2623, 128
    %4238 = vxpose.xlu0.b32.cont [15/16] %v2864, 128
    %4239 = vxpose.xlu0.b32.end [16/16] %v2626, 128
    %v4240 = vpop.trf.xlu0
    %v4241 = vpop.trf.xlu0
    %v4242 = vpop.trf.xlu0
    %v4243 = vpop.trf.xlu0
    %v4244 = vpop.trf.xlu0
    %v4245 = vpop.trf.xlu0
    %v4246 = vpop.trf.xlu0
    %v4247 = vpop.trf.xlu0
    %v4248 = vpop.trf.xlu0
    %v4249 = vpop.trf.xlu0
    %v4250 = vpop.trf.xlu0
    %v4251 = vpop.trf.xlu0
    %v4252 = vpop.trf.xlu0
    %v4253 = vpop.trf.xlu0
    %v4254 = vpop.trf.xlu0
    %v4255 = vpop.trf.xlu0
    %4256 = vxpose.xlu0.b32.start [1/16] %v2865, 128
    %4257 = vxpose.xlu0.b32.cont [2/16] %v2629, 128
    %4258 = vxpose.xlu0.b32.cont [3/16] %v2866, 128
    %4259 = vxpose.xlu0.b32.cont [4/16] %v2632, 128
    %4260 = vxpose.xlu0.b32.cont [5/16] %v2867, 128
    %4261 = vxpose.xlu0.b32.cont [6/16] %v2635, 128
    %4262 = vxpose.xlu0.b32.cont [7/16] %v2868, 128
    %4263 = vxpose.xlu0.b32.cont [8/16] %v2638, 128
    %4264 = vxpose.xlu0.b32.cont [9/16] %v2869, 128
    %4265 = vxpose.xlu0.b32.cont [10/16] %v2641, 128
    %4266 = vxpose.xlu0.b32.cont [11/16] %v2870, 128
    %4267 = vxpose.xlu0.b32.cont [12/16] %v2644, 128
    %4268 = vxpose.xlu0.b32.cont [13/16] %v2871, 128
    %4269 = vxpose.xlu0.b32.cont [14/16] %v2647, 128
    %4270 = vxpose.xlu0.b32.cont [15/16] %v2871, 128
    %4271 = vxpose.xlu0.b32.end [16/16] %v2647, 128
    %v4272 = vpop.trf.xlu0
    %v4273 = vpop.trf.xlu0
    %v4274 = vpop.trf.xlu0
    %v4275 = vpop.trf.xlu0
    %v4276 = vpop.trf.xlu0
    %v4277 = vpop.trf.xlu0
    %v4278 = vpop.trf.xlu0
    %v4279 = vpop.trf.xlu0
    %v4280 = vpop.trf.xlu0
    %v4281 = vpop.trf.xlu0
    %v4282 = vpop.trf.xlu0
    %v4283 = vpop.trf.xlu0
    %v4284 = vpop.trf.xlu0
    %v4285 = vpop.trf.xlu0
    %v4286 = vpop.trf.xlu0
    %v4287 = vpop.trf.xlu0
    %4288 = vxpose.xlu0.b32.start [1/16] %v2873, 128
    %4289 = vxpose.xlu0.b32.cont [2/16] %v2653, 128
    %4290 = vxpose.xlu0.b32.cont [3/16] %v2874, 128
    %4291 = vxpose.xlu0.b32.cont [4/16] %v2656, 128
    %4292 = vxpose.xlu0.b32.cont [5/16] %v2875, 128
    %4293 = vxpose.xlu0.b32.cont [6/16] %v2659, 128
    %4294 = vxpose.xlu0.b32.cont [7/16] %v2876, 128
    %4295 = vxpose.xlu0.b32.cont [8/16] %v2662, 128
    %4296 = vxpose.xlu0.b32.cont [9/16] %v2877, 128
    %4297 = vxpose.xlu0.b32.cont [10/16] %v2665, 128
    %4298 = vxpose.xlu0.b32.cont [11/16] %v2878, 128
    %4299 = vxpose.xlu0.b32.cont [12/16] %v2668, 128
    %4300 = vxpose.xlu0.b32.cont [13/16] %v2879, 128
    %4301 = vxpose.xlu0.b32.cont [14/16] %v2671, 128
    %4302 = vxpose.xlu0.b32.cont [15/16] %v2880, 128
    %4303 = vxpose.xlu0.b32.end [16/16] %v2674, 128
    %v4304 = vpop.trf.xlu0
    %v4305 = vpop.trf.xlu0
    %v4306 = vpop.trf.xlu0
    %v4307 = vpop.trf.xlu0
    %v4308 = vpop.trf.xlu0
    %v4309 = vpop.trf.xlu0
    %v4310 = vpop.trf.xlu0
    %v4311 = vpop.trf.xlu0
    %v4312 = vpop.trf.xlu0
    %v4313 = vpop.trf.xlu0
    %v4314 = vpop.trf.xlu0
    %v4315 = vpop.trf.xlu0
    %v4316 = vpop.trf.xlu0
    %v4317 = vpop.trf.xlu0
    %v4318 = vpop.trf.xlu0
    %v4319 = vpop.trf.xlu0
    %4320 = vxpose.xlu0.b32.start [1/16] %v2881, 128
    %4321 = vxpose.xlu0.b32.cont [2/16] %v2677, 128
    %4322 = vxpose.xlu0.b32.cont [3/16] %v2882, 128
    %4323 = vxpose.xlu0.b32.cont [4/16] %v2680, 128
    %4324 = vxpose.xlu0.b32.cont [5/16] %v2883, 128
    %4325 = vxpose.xlu0.b32.cont [6/16] %v2683, 128
    %4326 = vxpose.xlu0.b32.cont [7/16] %v2884, 128
    %4327 = vxpose.xlu0.b32.cont [8/16] %v2686, 128
    %4328 = vxpose.xlu0.b32.cont [9/16] %v2885, 128
    %4329 = vxpose.xlu0.b32.cont [10/16] %v2689, 128
    %4330 = vxpose.xlu0.b32.cont [11/16] %v2886, 128
    %4331 = vxpose.xlu0.b32.cont [12/16] %v2692, 128
    %4332 = vxpose.xlu0.b32.cont [13/16] %v2887, 128
    %4333 = vxpose.xlu0.b32.cont [14/16] %v2695, 128
    %4334 = vxpose.xlu0.b32.cont [15/16] %v2887, 128
    %4335 = vxpose.xlu0.b32.end [16/16] %v2695, 128
    %v4336 = vpop.trf.xlu0
    %v4337 = vpop.trf.xlu0
    %v4338 = vpop.trf.xlu0
    %v4339 = vpop.trf.xlu0
    %v4340 = vpop.trf.xlu0
    %v4341 = vpop.trf.xlu0
    %v4342 = vpop.trf.xlu0
    %v4343 = vpop.trf.xlu0
    %v4344 = vpop.trf.xlu0
    %v4345 = vpop.trf.xlu0
    %v4346 = vpop.trf.xlu0
    %v4347 = vpop.trf.xlu0
    %v4348 = vpop.trf.xlu0
    %v4349 = vpop.trf.xlu0
    %v4350 = vpop.trf.xlu0
    %v4351 = vpop.trf.xlu0
    %4352 = vst [vmem:[#allocation2 + $0xc0] sm:$0xff] %v4240
    %4353 = vst [vmem:[#allocation2 + $0xc8] sm:$0xff] %v4272
    %4354 = vst [vmem:[#allocation2 + $0xd0] sm:$0xff] %v4304
    %4355 = vst [vmem:[#allocation2 + $0xd8] sm:$0xff] %v4336
    %4356 = vxpose.xlu0.b32.start [1/16] %v3119, 128
    %4357 = vxpose.xlu0.b32.cont [2/16] %v3121, 128
    %4358 = vxpose.xlu0.b32.cont [3/16] %v3124, 128
    %4359 = vxpose.xlu0.b32.cont [4/16] %v3126, 128
    %4360 = vxpose.xlu0.b32.cont [5/16] %v3129, 128
    %4361 = vxpose.xlu0.b32.cont [6/16] %v3131, 128
    %4362 = vxpose.xlu0.b32.cont [7/16] %v3134, 128
    %4363 = vxpose.xlu0.b32.cont [8/16] %v3136, 128
    %4364 = vxpose.xlu0.b32.cont [9/16] %v3139, 128
    %4365 = vxpose.xlu0.b32.cont [10/16] %v3141, 128
    %4366 = vxpose.xlu0.b32.cont [11/16] %v3144, 128
    %4367 = vxpose.xlu0.b32.cont [12/16] %v3146, 128
    %4368 = vxpose.xlu0.b32.cont [13/16] %v3149, 128
    %4369 = vxpose.xlu0.b32.cont [14/16] %v3151, 128
    %4370 = vxpose.xlu0.b32.cont [15/16] %v3154, 128
    %4371 = vxpose.xlu0.b32.end [16/16] %v3156, 128
    %v4372 = vpop.trf.xlu0
    %v4373 = vpop.trf.xlu0
    %v4374 = vpop.trf.xlu0
    %v4375 = vpop.trf.xlu0
    %v4376 = vpop.trf.xlu0
    %v4377 = vpop.trf.xlu0
    %v4378 = vpop.trf.xlu0
    %v4379 = vpop.trf.xlu0
    %v4380 = vpop.trf.xlu0
    %v4381 = vpop.trf.xlu0
    %v4382 = vpop.trf.xlu0
    %v4383 = vpop.trf.xlu0
    %v4384 = vpop.trf.xlu0
    %v4385 = vpop.trf.xlu0
    %v4386 = vpop.trf.xlu0
    %v4387 = vpop.trf.xlu0
    %4388 = vxpose.xlu0.b32.start [1/16] %v3159, 128
    %4389 = vxpose.xlu0.b32.cont [2/16] %v3161, 128
    %4390 = vxpose.xlu0.b32.cont [3/16] %v3164, 128
    %4391 = vxpose.xlu0.b32.cont [4/16] %v3166, 128
    %4392 = vxpose.xlu0.b32.cont [5/16] %v3169, 128
    %4393 = vxpose.xlu0.b32.cont [6/16] %v3171, 128
    %4394 = vxpose.xlu0.b32.cont [7/16] %v3174, 128
    %4395 = vxpose.xlu0.b32.cont [8/16] %v3176, 128
    %4396 = vxpose.xlu0.b32.cont [9/16] %v3179, 128
    %4397 = vxpose.xlu0.b32.cont [10/16] %v3181, 128
    %4398 = vxpose.xlu0.b32.cont [11/16] %v3184, 128
    %4399 = vxpose.xlu0.b32.cont [12/16] %v3186, 128
    %4400 = vxpose.xlu0.b32.cont [13/16] %v3934, 128
    %4401 = vxpose.xlu0.b32.cont [14/16] %v3936, 128
    %4402 = vxpose.xlu0.b32.cont [15/16] %v3934, 128
    %4403 = vxpose.xlu0.b32.end [16/16] %v3936, 128
    %v4404 = vpop.trf.xlu0
    %v4405 = vpop.trf.xlu0
    %v4406 = vpop.trf.xlu0
    %v4407 = vpop.trf.xlu0
    %v4408 = vpop.trf.xlu0
    %v4409 = vpop.trf.xlu0
    %v4410 = vpop.trf.xlu0
    %v4411 = vpop.trf.xlu0
    %v4412 = vpop.trf.xlu0
    %v4413 = vpop.trf.xlu0
    %v4414 = vpop.trf.xlu0
    %v4415 = vpop.trf.xlu0
    %v4416 = vpop.trf.xlu0
    %v4417 = vpop.trf.xlu0
    %v4418 = vpop.trf.xlu0
    %v4419 = vpop.trf.xlu0
    %4420 = vxpose.xlu0.b32.start [1/16] %v3194, 128
    %4421 = vxpose.xlu0.b32.cont [2/16] %v3196, 128
    %4422 = vxpose.xlu0.b32.cont [3/16] %v3199, 128
    %4423 = vxpose.xlu0.b32.cont [4/16] %v3201, 128
    %4424 = vxpose.xlu0.b32.cont [5/16] %v3204, 128
    %4425 = vxpose.xlu0.b32.cont [6/16] %v3206, 128
    %4426 = vxpose.xlu0.b32.cont [7/16] %v3209, 128
    %4427 = vxpose.xlu0.b32.cont [8/16] %v3211, 128
    %4428 = vxpose.xlu0.b32.cont [9/16] %v3214, 128
    %4429 = vxpose.xlu0.b32.cont [10/16] %v3216, 128
    %4430 = vxpose.xlu0.b32.cont [11/16] %v3219, 128
    %4431 = vxpose.xlu0.b32.cont [12/16] %v3221, 128
    %4432 = vxpose.xlu0.b32.cont [13/16] %v3224, 128
    %4433 = vxpose.xlu0.b32.cont [14/16] %v3226, 128
    %4434 = vxpose.xlu0.b32.cont [15/16] %v3229, 128
    %4435 = vxpose.xlu0.b32.end [16/16] %v3231, 128
    %v4436 = vpop.trf.xlu0
    %v4437 = vpop.trf.xlu0
    %v4438 = vpop.trf.xlu0
    %v4439 = vpop.trf.xlu0
    %v4440 = vpop.trf.xlu0
    %v4441 = vpop.trf.xlu0
    %v4442 = vpop.trf.xlu0
    %v4443 = vpop.trf.xlu0
    %v4444 = vpop.trf.xlu0
    %v4445 = vpop.trf.xlu0
    %v4446 = vpop.trf.xlu0
    %v4447 = vpop.trf.xlu0
    %v4448 = vpop.trf.xlu0
    %v4449 = vpop.trf.xlu0
    %v4450 = vpop.trf.xlu0
    %v4451 = vpop.trf.xlu0
    %4452 = vxpose.xlu0.b32.start [1/16] %v3234, 128
    %4453 = vxpose.xlu0.b32.cont [2/16] %v3236, 128
    %4454 = vxpose.xlu0.b32.cont [3/16] %v3239, 128
    %4455 = vxpose.xlu0.b32.cont [4/16] %v3241, 128
    %4456 = vxpose.xlu0.b32.cont [5/16] %v3244, 128
    %4457 = vxpose.xlu0.b32.cont [6/16] %v3246, 128
    %4458 = vxpose.xlu0.b32.cont [7/16] %v3249, 128
    %4459 = vxpose.xlu0.b32.cont [8/16] %v3251, 128
    %4460 = vxpose.xlu0.b32.cont [9/16] %v3254, 128
    %4461 = vxpose.xlu0.b32.cont [10/16] %v3256, 128
    %4462 = vxpose.xlu0.b32.cont [11/16] %v3259, 128
    %4463 = vxpose.xlu0.b32.cont [12/16] %v3261, 128
    %4464 = vxpose.xlu0.b32.cont [13/16] %v3939, 128
    %4465 = vxpose.xlu0.b32.cont [14/16] %v3941, 128
    %4466 = vxpose.xlu0.b32.cont [15/16] %v3939, 128
    %4467 = vxpose.xlu0.b32.end [16/16] %v3941, 128
    %v4468 = vpop.trf.xlu0
    %v4469 = vpop.trf.xlu0
    %v4470 = vpop.trf.xlu0
    %v4471 = vpop.trf.xlu0
    %v4472 = vpop.trf.xlu0
    %v4473 = vpop.trf.xlu0
    %v4474 = vpop.trf.xlu0
    %v4475 = vpop.trf.xlu0
    %v4476 = vpop.trf.xlu0
    %v4477 = vpop.trf.xlu0
    %v4478 = vpop.trf.xlu0
    %v4479 = vpop.trf.xlu0
    %v4480 = vpop.trf.xlu0
    %v4481 = vpop.trf.xlu0
    %v4482 = vpop.trf.xlu0
    %v4483 = vpop.trf.xlu0
    %4484 = vst [vmem:[#allocation2 + $0xe0] sm:$0xff] %v4372
    %4485 = vst [vmem:[#allocation2 + $0xe8] sm:$0xff] %v4404
    %4486 = vst [vmem:[#allocation2 + $0xf0] sm:$0xff] %v4436
    %4487 = vst [vmem:[#allocation2 + $0xf8] sm:$0xff] %v4468
    %4488 = vxpose.xlu0.b32.start [1/16] %v3461, 128
    %4489 = vxpose.xlu0.b32.cont [2/16] %v3463, 128
    %4490 = vxpose.xlu0.b32.cont [3/16] %v3466, 128
    %4491 = vxpose.xlu0.b32.cont [4/16] %v3468, 128
    %4492 = vxpose.xlu0.b32.cont [5/16] %v3471, 128
    %4493 = vxpose.xlu0.b32.cont [6/16] %v3473, 128
    %4494 = vxpose.xlu0.b32.cont [7/16] %v3476, 128
    %4495 = vxpose.xlu0.b32.cont [8/16] %v3478, 128
    %4496 = vxpose.xlu0.b32.cont [9/16] %v3481, 128
    %4497 = vxpose.xlu0.b32.cont [10/16] %v3483, 128
    %4498 = vxpose.xlu0.b32.cont [11/16] %v3486, 128
    %4499 = vxpose.xlu0.b32.cont [12/16] %v3488, 128
    %4500 = vxpose.xlu0.b32.cont [13/16] %v3491, 128
    %4501 = vxpose.xlu0.b32.cont [14/16] %v3493, 128
    %4502 = vxpose.xlu0.b32.cont [15/16] %v3496, 128
    %4503 = vxpose.xlu0.b32.end [16/16] %v3498, 128
    %v4504 = vpop.trf.xlu0
    %v4505 = vpop.trf.xlu0
    %v4506 = vpop.trf.xlu0
    %v4507 = vpop.trf.xlu0
    %v4508 = vpop.trf.xlu0
    %v4509 = vpop.trf.xlu0
    %v4510 = vpop.trf.xlu0
    %v4511 = vpop.trf.xlu0
    %v4512 = vpop.trf.xlu0
    %v4513 = vpop.trf.xlu0
    %v4514 = vpop.trf.xlu0
    %v4515 = vpop.trf.xlu0
    %v4516 = vpop.trf.xlu0
    %v4517 = vpop.trf.xlu0
    %v4518 = vpop.trf.xlu0
    %v4519 = vpop.trf.xlu0
    %4520 = vxpose.xlu0.b32.start [1/16] %v3501, 128
    %4521 = vxpose.xlu0.b32.cont [2/16] %v3503, 128
    %4522 = vxpose.xlu0.b32.cont [3/16] %v3506, 128
    %4523 = vxpose.xlu0.b32.cont [4/16] %v3508, 128
    %4524 = vxpose.xlu0.b32.cont [5/16] %v3511, 128
    %4525 = vxpose.xlu0.b32.cont [6/16] %v3513, 128
    %4526 = vxpose.xlu0.b32.cont [7/16] %v3516, 128
    %4527 = vxpose.xlu0.b32.cont [8/16] %v3518, 128
    %4528 = vxpose.xlu0.b32.cont [9/16] %v3521, 128
    %4529 = vxpose.xlu0.b32.cont [10/16] %v3523, 128
    %4530 = vxpose.xlu0.b32.cont [11/16] %v3526, 128
    %4531 = vxpose.xlu0.b32.cont [12/16] %v3528, 128
    %4532 = vxpose.xlu0.b32.cont [13/16] %v4080, 128
    %4533 = vxpose.xlu0.b32.cont [14/16] %v4082, 128
    %4534 = vxpose.xlu0.b32.cont [15/16] %v4080, 128
    %4535 = vxpose.xlu0.b32.end [16/16] %v4082, 128
    %v4536 = vpop.trf.xlu0
    %v4537 = vpop.trf.xlu0
    %v4538 = vpop.trf.xlu0
    %v4539 = vpop.trf.xlu0
    %v4540 = vpop.trf.xlu0
    %v4541 = vpop.trf.xlu0
    %v4542 = vpop.trf.xlu0
    %v4543 = vpop.trf.xlu0
    %v4544 = vpop.trf.xlu0
    %v4545 = vpop.trf.xlu0
    %v4546 = vpop.trf.xlu0
    %v4547 = vpop.trf.xlu0
    %v4548 = vpop.trf.xlu0
    %v4549 = vpop.trf.xlu0
    %v4550 = vpop.trf.xlu0
    %v4551 = vpop.trf.xlu0
    %4552 = vxpose.xlu0.b32.start [1/16] %v3536, 128
    %4553 = vxpose.xlu0.b32.cont [2/16] %v3538, 128
    %4554 = vxpose.xlu0.b32.cont [3/16] %v3541, 128
    %4555 = vxpose.xlu0.b32.cont [4/16] %v3543, 128
    %4556 = vxpose.xlu0.b32.cont [5/16] %v3546, 128
    %4557 = vxpose.xlu0.b32.cont [6/16] %v3548, 128
    %4558 = vxpose.xlu0.b32.cont [7/16] %v3551, 128
    %4559 = vxpose.xlu0.b32.cont [8/16] %v3553, 128
    %4560 = vxpose.xlu0.b32.cont [9/16] %v3556, 128
    %4561 = vxpose.xlu0.b32.cont [10/16] %v3558, 128
    %4562 = vxpose.xlu0.b32.cont [11/16] %v3561, 128
    %4563 = vxpose.xlu0.b32.cont [12/16] %v3563, 128
    %4564 = vxpose.xlu0.b32.cont [13/16] %v3566, 128
    %4565 = vxpose.xlu0.b32.cont [14/16] %v3568, 128
    %4566 = vxpose.xlu0.b32.cont [15/16] %v3571, 128
    %4567 = vxpose.xlu0.b32.end [16/16] %v3573, 128
    %v4568 = vpop.trf.xlu0
    %v4569 = vpop.trf.xlu0
    %v4570 = vpop.trf.xlu0
    %v4571 = vpop.trf.xlu0
    %v4572 = vpop.trf.xlu0
    %v4573 = vpop.trf.xlu0
    %v4574 = vpop.trf.xlu0
    %v4575 = vpop.trf.xlu0
    %v4576 = vpop.trf.xlu0
    %v4577 = vpop.trf.xlu0
    %v4578 = vpop.trf.xlu0
    %v4579 = vpop.trf.xlu0
    %v4580 = vpop.trf.xlu0
    %v4581 = vpop.trf.xlu0
    %v4582 = vpop.trf.xlu0
    %v4583 = vpop.trf.xlu0
    %4584 = vxpose.xlu0.b32.start [1/16] %v3576, 128
    %4585 = vxpose.xlu0.b32.cont [2/16] %v3578, 128
    %4586 = vxpose.xlu0.b32.cont [3/16] %v3581, 128
    %4587 = vxpose.xlu0.b32.cont [4/16] %v3583, 128
    %4588 = vxpose.xlu0.b32.cont [5/16] %v3586, 128
    %4589 = vxpose.xlu0.b32.cont [6/16] %v3588, 128
    %4590 = vxpose.xlu0.b32.cont [7/16] %v3591, 128
    %4591 = vxpose.xlu0.b32.cont [8/16] %v3593, 128
    %4592 = vxpose.xlu0.b32.cont [9/16] %v3596, 128
    %4593 = vxpose.xlu0.b32.cont [10/16] %v3598, 128
    %4594 = vxpose.xlu0.b32.cont [11/16] %v3601, 128
    %4595 = vxpose.xlu0.b32.cont [12/16] %v3603, 128
    %4596 = vxpose.xlu0.b32.cont [13/16] %v4085, 128
    %4597 = vxpose.xlu0.b32.cont [14/16] %v4087, 128
    %4598 = vxpose.xlu0.b32.cont [15/16] %v4085, 128
    %4599 = vxpose.xlu0.b32.end [16/16] %v4087, 128
    %v4600 = vpop.trf.xlu0
    %v4601 = vpop.trf.xlu0
    %v4602 = vpop.trf.xlu0
    %v4603 = vpop.trf.xlu0
    %v4604 = vpop.trf.xlu0
    %v4605 = vpop.trf.xlu0
    %v4606 = vpop.trf.xlu0
    %v4607 = vpop.trf.xlu0
    %v4608 = vpop.trf.xlu0
    %v4609 = vpop.trf.xlu0
    %v4610 = vpop.trf.xlu0
    %v4611 = vpop.trf.xlu0
    %v4612 = vpop.trf.xlu0
    %v4613 = vpop.trf.xlu0
    %v4614 = vpop.trf.xlu0
    %v4615 = vpop.trf.xlu0
    %4616 = vst [vmem:[#allocation2 + $0x100] sm:$0xff] %v4504
    %4617 = vst [vmem:[#allocation2 + $0x108] sm:$0xff] %v4536
    %4618 = vst [vmem:[#allocation2 + $0x110] sm:$0xff] %v4568
    %4619 = vst [vmem:[#allocation2 + $0x118] sm:$0xff] %v4600
    %v4620 = vld [vmem:[%s2] sm:$0xff]
    %v4621 = vld [vmem:[#allocation2] sm:$0xff]
    %v4622 = vld [vmem:[#allocation2 + $0x8] sm:$0xff]
    %v4623 = vld [vmem:[#allocation2 + $0x10] sm:$0xff]
    %v4624 = vld [vmem:[#allocation2 + $0x18] sm:$0xff]
    %v4625 = vld [vmem:[#allocation2 + $0x20] sm:$0xff]
    %v4626 = vld [vmem:[#allocation2 + $0x28] sm:$0xff]
    %v4627 = vld [vmem:[#allocation2 + $0x30] sm:$0xff]
    %v4628 = vld [vmem:[#allocation2 + $0x38] sm:$0xff]
    %v4629 = vld [vmem:[#allocation2 + $0x40] sm:$0xff]
    %v4630 = vld [vmem:[#allocation2 + $0x48] sm:$0xff]
    %v4631 = vld [vmem:[#allocation2 + $0x50] sm:$0xff]
    %v4632 = vld [vmem:[#allocation2 + $0x58] sm:$0xff]
    %v4633 = vld [vmem:[#allocation2 + $0x60] sm:$0xff]
    %v4634 = vld [vmem:[#allocation2 + $0x68] sm:$0xff]
    %v4635 = vld [vmem:[#allocation2 + $0x70] sm:$0xff]
    %v4636 = vld [vmem:[#allocation2 + $0x78] sm:$0xff]
    %v4637 = vld [vmem:[#allocation2 + $0x80] sm:$0xff]
    %v4638 = vld [vmem:[#allocation2 + $0x88] sm:$0xff]
    %v4639 = vld [vmem:[#allocation2 + $0x90] sm:$0xff]
    %v4640 = vld [vmem:[#allocation2 + $0x98] sm:$0xff]
    %v4641 = vld [vmem:[#allocation2 + $0xa0] sm:$0xff]
    %v4642 = vld [vmem:[#allocation2 + $0xa8] sm:$0xff]
    %v4643 = vld [vmem:[#allocation2 + $0xb0] sm:$0xff]
    %v4644 = vld [vmem:[#allocation2 + $0xb8] sm:$0xff]
    %v4645 = vld [vmem:[#allocation2 + $0xc0] sm:$0xff]
    %v4646 = vld [vmem:[#allocation2 + $0xc8] sm:$0xff]
    %v4647 = vld [vmem:[#allocation2 + $0xd0] sm:$0xff]
    %v4648 = vld [vmem:[#allocation2 + $0xd8] sm:$0xff]
    %v4649 = vld [vmem:[#allocation2 + $0xe0] sm:$0xff]
    %v4650 = vld [vmem:[#allocation2 + $0xe8] sm:$0xff]
    %v4651 = vld [vmem:[#allocation2 + $0xf0] sm:$0xff]
    %v4652 = vld [vmem:[#allocation2 + $0xf8] sm:$0xff]
    %v4653 = vld [vmem:[#allocation2 + $0x100] sm:$0xff]
    %v4654 = vld [vmem:[#allocation2 + $0x108] sm:$0xff]
    %v4655 = vld [vmem:[#allocation2 + $0x110] sm:$0xff]
    %v4656 = vld [vmem:[#allocation2 + $0x118] sm:$0xff]
    %v4658 = vsel %vm2215, %v4620, 0
    %4660 = vmatprep.subr.mxu0 %v4622
    %4661 = vmatpush1.msra.mxu0 %v4621
    %4662 = vmatprep.subr.mxu0 %v4626
    %4663 = vmatpush1.msra.mxu0 %v4625
    %4664 = vmatprep.subr.mxu0 %v4630
    %4665 = vmatpush1.msra.mxu0 %v4629
    %4666 = vmatprep.subr.mxu0 %v4634
    %4667 = vmatpush1.msra.mxu0 %v4633
    %4668 = vmatprep.subr.mxu0 %v4638
    %4669 = vmatpush1.msra.mxu0 %v4637
    %4670 = vmatprep.subr.mxu0 %v4642
    %4671 = vmatpush1.msra.mxu0 %v4641
    %4672 = vmatprep.subr.mxu0 %v4646
    %4673 = vmatpush1.msra.mxu0 %v4645
    %4674 = vmatprep.subr.mxu0 %v4650
    %4675 = vmatpush1.msra.mxu0 %v4649
    %4676 = vmatprep.subr.mxu0 %v4654
    %4677 = vmatpush1.msra.mxu0 %v4653
    %4678 = vmatprep.subr.mxu0 0.0
    %4679 = vmatpush1.msra.mxu0 0.0
    %4680 = vmatprep.subr.mxu0 0.0
    %4681 = vmatpush1.msra.mxu0 0.0
    %4682 = vmatprep.subr.mxu0 0.0
    %4683 = vmatpush1.msra.mxu0 0.0
    %4684 = vmatprep.subr.mxu0 0.0
    %4685 = vmatpush1.msra.mxu0 0.0
    %4686 = vmatprep.subr.mxu0 0.0
    %4687 = vmatpush1.msra.mxu0 0.0
    %4688 = vmatprep.subr.mxu0 0.0
    %4689 = vmatpush1.msra.mxu0 0.0
    %4690 = vmatprep.subr.mxu0 0.0
    %4691 = vmatpush1.msra.mxu0 0.0
    %4692 = vmatprep.subr.mxu0 0.0
    %4693 = vmatpush1.msra.mxu0 0.0
    %4694 = vmatprep.subr.mxu0 0.0
    %4695 = vmatpush1.msra.mxu0 0.0
    %4696 = vmatprep.subr.mxu0 0.0
    %4697 = vmatpush1.msra.mxu0 0.0
    %4698 = vmatprep.subr.mxu0 0.0
    %4699 = vmatpush1.msra.mxu0 0.0
    %4700 = vmatprep.subr.mxu0 0.0
    %4701 = vmatpush1.msra.mxu0 0.0
    %4702 = vmatprep.subr.mxu0 0.0
    %4703 = vmatpush1.msra.mxu0 0.0
    %4704 = vmatprep.subr.mxu0 0.0
    %4705 = vmatpush1.msra.mxu0 0.0
    %4706 = vmatprep.subr.mxu0 0.0
    %4707 = vmatpush1.msra.mxu0 0.0
    %4708 = vmatprep.subr.mxu0 0.0
    %4709 = vmatpush1.msra.mxu0 0.0
    %4710 = vmatprep.subr.mxu0 0.0
    %4711 = vmatpush1.msra.mxu0 0.0
    %4712 = vmatprep.subr.mxu0 0.0
    %4713 = vmatpush1.msra.mxu0 0.0
    %4714 = vmatprep.subr.mxu0 0.0
    %4715 = vmatpush1.msra.mxu0 0.0
    %4716 = vmatprep.subr.mxu0 0.0
    %4717 = vmatpush1.msra.mxu0 0.0
    %4718 = vmatprep.subr.mxu0 0.0
    %4719 = vmatpush1.msra.mxu0 0.0
    %4720 = vmatprep.subr.mxu0 0.0
    %4721 = vmatpush1.msra.mxu0 0.0
    %4722 = vmatprep.subr.mxu0 0.0
    %4723 = vmatpush1.msra.mxu0 0.0
    %4724 = vmatprep.mubr.f32.mxu0 0.0
    %4725 = vmatmul.mubr.f32.gmra.mrb[0].mxu0 %v4658
    %v4726 = vpop.f32.mrb[0].mxu0
    %v4727 = vadd.f32 0.0, %v4726
    %v4728 = vpop.f32.mrb[0].mxu0
    %v4729 = vadd.f32 0.0, %v4728
    %4730 = vdwg.mxu0
    %4731 = vmatprep.subr.mxu0 %v4624
    %4732 = vmatpush1.msra.mxu0 %v4623
    %4733 = vmatprep.subr.mxu0 %v4628
    %4734 = vmatpush1.msra.mxu0 %v4627
    %4735 = vmatprep.subr.mxu0 %v4632
    %4736 = vmatpush1.msra.mxu0 %v4631
    %4737 = vmatprep.subr.mxu0 %v4636
    %4738 = vmatpush1.msra.mxu0 %v4635
    %4739 = vmatprep.subr.mxu0 %v4640
    %4740 = vmatpush1.msra.mxu0 %v4639
    %4741 = vmatprep.subr.mxu0 %v4644
    %4742 = vmatpush1.msra.mxu0 %v4643
    %4743 = vmatprep.subr.mxu0 %v4648
    %4744 = vmatpush1.msra.mxu0 %v4647
    %4745 = vmatprep.subr.mxu0 %v4652
    %4746 = vmatpush1.msra.mxu0 %v4651
    %4747 = vmatprep.subr.mxu0 %v4656
    %4748 = vmatpush1.msra.mxu0 %v4655
    %4749 = vmatprep.subr.mxu0 0.0
    %4750 = vmatpush1.msra.mxu0 0.0
    %4751 = vmatprep.subr.mxu0 0.0
    %4752 = vmatpush1.msra.mxu0 0.0
    %4753 = vmatprep.subr.mxu0 0.0
    %4754 = vmatpush1.msra.mxu0 0.0
    %4755 = vmatprep.subr.mxu0 0.0
    %4756 = vmatpush1.msra.mxu0 0.0
    %4757 = vmatprep.subr.mxu0 0.0
    %4758 = vmatpush1.msra.mxu0 0.0
    %4759 = vmatprep.subr.mxu0 0.0
    %4760 = vmatpush1.msra.mxu0 0.0
    %4761 = vmatprep.subr.mxu0 0.0
    %4762 = vmatpush1.msra.mxu0 0.0
    %4763 = vmatprep.subr.mxu0 0.0
    %4764 = vmatpush1.msra.mxu0 0.0
    %4765 = vmatprep.subr.mxu0 0.0
    %4766 = vmatpush1.msra.mxu0 0.0
    %4767 = vmatprep.subr.mxu0 0.0
    %4768 = vmatpush1.msra.mxu0 0.0
    %4769 = vmatprep.subr.mxu0 0.0
    %4770 = vmatpush1.msra.mxu0 0.0
    %4771 = vmatprep.subr.mxu0 0.0
    %4772 = vmatpush1.msra.mxu0 0.0
    %4773 = vmatprep.subr.mxu0 0.0
    %4774 = vmatpush1.msra.mxu0 0.0
    %4775 = vmatprep.subr.mxu0 0.0
    %4776 = vmatpush1.msra.mxu0 0.0
    %4777 = vmatprep.subr.mxu0 0.0
    %4778 = vmatpush1.msra.mxu0 0.0
    %4779 = vmatprep.subr.mxu0 0.0
    %4780 = vmatpush1.msra.mxu0 0.0
    %4781 = vmatprep.subr.mxu0 0.0
    %4782 = vmatpush1.msra.mxu0 0.0
    %4783 = vmatprep.subr.mxu0 0.0
    %4784 = vmatpush1.msra.mxu0 0.0
    %4785 = vmatprep.subr.mxu0 0.0
    %4786 = vmatpush1.msra.mxu0 0.0
    %4787 = vmatprep.subr.mxu0 0.0
    %4788 = vmatpush1.msra.mxu0 0.0
    %4789 = vmatprep.subr.mxu0 0.0
    %4790 = vmatpush1.msra.mxu0 0.0
    %4791 = vmatprep.subr.mxu0 0.0
    %4792 = vmatpush1.msra.mxu0 0.0
    %4793 = vmatprep.subr.mxu0 0.0
    %4794 = vmatpush1.msra.mxu0 0.0
    %4795 = vmatprep.mubr.f32.mxu0 0.0
    %4796 = vmatmul.mubr.f32.gmra.mrb[0].mxu0 %v4658
    %v4797 = vpop.f32.mrb[0].mxu0
    %v4798 = vadd.f32 0.0, %v4797
    %v4799 = vpop.f32.mrb[0].mxu0
    %v4800 = vadd.f32 0.0, %v4799
    %4801 = vdwg.mxu0
    %v4802 = vld [vmem:[%s5] sm:$0xff]
    %v4803 = vld [vmem:[%s6] sm:$0xff]
    %v4804 = vadd.f32 %v4727, %v4729
    %v4805 = vadd.f32 %v4804, %v4798
    %v4806 = vadd.f32 %v4805, %v4800
    %4807 = vadd.xlane.f32.xlu0 %v4806
    %v4808 = vpop.xlane.xlu0 %4807
    %v4809 = vmul.f32 %v4727, %v4727
    %v4810 = vmul.f32 %v4729, %v4729
    %v4811 = vmul.f32 %v4798, %v4798
    %v4812 = vmul.f32 %v4800, %v4800
    %v4813 = vadd.f32 %v4809, %v4810
    %v4814 = vadd.f32 %v4813, %v4811
    %v4815 = vadd.f32 %v4814, %v4812
    %4816 = vadd.xlane.f32.xlu0 %v4815
    %v4817 = vpop.xlane.xlu0 %4816
    %v4818 = vmul.f32 %v4808, 0.001953125
    %v4819 = vmul.f32 %v4817, 0.001953125
    %v4820 = vmul.f32 %v4818, %v4818
    %v4821 = vsub.f32 %v4819, %v4820
    %v4822 = vadd.f32 %v4821, 1e-05
    %v4823 = vrsqrt.pop %v4822
    %v4824 = vmul.f32 %v4802, %v4823
    %v4825 = vmul.f32 %v4818, %v4824
    %v4826 = vsub.f32 %v4803, %v4825
    %4828 = vset.pattern.permute.xlu0 0
    %4829 = vperm.xlu0 %4828, %v4824
    %v4830 = vpop.permute.xlu0 %4829
    %v4832 = vmul.f32 %v4727, %v4830
    %v4833 = vmul.f32 %v4729, %v4830
    %v4834 = vmul.f32 %v4798, %v4830
    %v4835 = vmul.f32 %v4800, %v4830
    %4837 = vset.pattern.permute.xlu0 0
    %4838 = vperm.xlu0 %4837, %v4826
    %v4839 = vpop.permute.xlu0 %4838
    %v4841 = vadd.f32 %v4832, %v4839
    %v4842 = vadd.f32 %v4833, %v4839
    %v4843 = vadd.f32 %v4834, %v4839
    %v4844 = vadd.f32 %v4835, %v4839
    %v4845 = vadd.f32 %v4841, %v1520
    %v4846 = vadd.f32 %v4842, %v1552
    %v4847 = vadd.f32 %v4843, %v1584
    %v4848 = vadd.f32 %v4844, %v1616
    %v4849 = vmax.f32 %v4845, 0.0
    %v4850 = vmax.f32 %v4846, 0.0
    %v4851 = vmax.f32 %v4847, 0.0
    %v4852 = vmax.f32 %v4848, 0.0
    %4853 = vst [vmem:[#allocation3] sm:$0xff] %v4849
    %4854 = vst [vmem:[#allocation3 + $0x8] sm:$0xff] %v4850
    %4855 = vst [vmem:[#allocation3 + $0x10] sm:$0xff] %v4851
    %4856 = vst [vmem:[#allocation3 + $0x18] sm:$0xff] %v4852
    // Predicated region
    $region30: #{tpu_custom_call.1} parent=1 // pred_check
      _
    $region31: #{tpu_custom_call.1} parent=1 // pred_check_branch
      %4858 = sbr.rel (0) target = $region33
    $region32: #{tpu_custom_call.1} parent=1 // pred_region
      %s4860 = ssub.s32 512, 512
      %4861 = vsyncadd [#allocation4], %s4860
      %s4863 = sshll.u32 [#allocation3], 4
      %s4864 = int_to_ptr.vmem [resolvable:$true] %s4863
      %4866 = dma.vmem_to_hbm [thread:$0]  %s4864, 512, %s7, [#allocation4]
    $region33: #{tpu_custom_call.1} parent=1 // pred_fallthru
      _
    // Predicated region
    $region34: #{tpu_custom_call.1} parent=1 // pred_check
      _
    $region35: #{tpu_custom_call.1} parent=1 // pred_check_branch
      %4868 = sbr.rel (0) target = $region37
    $region36: #{tpu_custom_call.1} parent=1 // pred_region
      %4869 = dma.done [#allocation4], 512
    $region37: #{tpu_custom_call.1} parent=1 // pred_fallthru
      _
    %4870 = vsyncpa [#allocation4], 1

</llo_original>
